<compile_context>
chip_gen: v5e
topology: v5e:2x2
jax: 0.10.0
libtpu: 0.0.40
codegen_flags: <defaults>
</compile_context>

<pallas_src>
import math

import jax
import jax.numpy as jnp
from jax.experimental import pallas as pl
from jax.experimental.pallas import tpu as pltpu

C_FEAT = 2208          # densenet161 feature channels
N1, N2, N3 = 9, 2, 7   # fc1 / fc2 / fc3 output widths
N_OUT = N1 + N2 + N3   # 18


def _heads_kernel(x_ref, w_ref, b_ref, out_ref):
    # x_ref  : (Bt, C, HW)  bf16 feature block (NCHW layout, HW flattened onto lanes)
    # w_ref  : (C, 18)      f32 fused [fc1 | fc2 | fc3] weight (pre-transposed)
    # b_ref  : (1, 18)      f32 fused bias
    # out_ref: (Bt, 18)     f32 fused head output
    inv_hw = 1.0 / x_ref.shape[-1]
    x = x_ref[...].astype(jnp.float32)                    # f32 accumulation (v5e: no bf16 VPU)
    pooled = jnp.sum(x, axis=-1) * inv_hw                 # adaptive_avg_pool2d(x, 1) -> (Bt, C)
    logits = jnp.dot(pooled, w_ref[...],
                     preferred_element_type=jnp.float32)  # (Bt, 18) on MXU
    logits = logits + b_ref[...]
    # sigmoid only on the fc2 slice (columns 9:11)
    col = jax.lax.broadcasted_iota(jnp.int32, logits.shape, dimension=1)
    is_fc2 = (col >= N1) & (col < N1 + N2)
    out = jnp.where(is_fc2, jax.nn.sigmoid(logits), logits)
    out_ref[...] = out.astype(out_ref.dtype)


def net_heads(feat_nchw, w_fused, b_fused, *, max_block_b=16,
              feat_dtype=jnp.bfloat16):
    """feat_nchw: [B, C, H, W] output of densenet161 features (NCHW, any float dtype)."""
    B, C, H, W = feat_nchw.shape
    assert C == w_fused.shape[0]
    HW = H * W

    # NCHW -> [B, C, HW]: pure reshape (no data movement), channels on sublanes,
    # spatial on lanes.  Cast to bf16 so the dominant HBM DMA is half-width.
    x = feat_nchw.reshape(B, C, HW).astype(feat_dtype)
    w = w_fused.astype(jnp.float32)
    b = b_fused.reshape(1, N_OUT).astype(jnp.float32)

    # Samples per grid step: whole batch when small (output block == full array),
    # otherwise a multiple of 8 so the (Bt, 18) store stays tile-aligned.
    bt = B if B <= max_block_b else max_block_b
    grid = (pl.cdiv(B, bt),)

    fused = pl.pallas_call(
        _heads_kernel,
        out_shape=jax.ShapeDtypeStruct((B, N_OUT), jnp.float32),
        grid_spec=pltpu.PrefetchScalarGridSpec(
            num_scalar_prefetch=0,
            grid=grid,
            in_specs=[
                pl.BlockSpec((bt, C, HW), lambda i: (i, 0, 0)),
                pl.BlockSpec((C, N_OUT), lambda i: (0, 0)),   # resident across steps
                pl.BlockSpec((1, N_OUT), lambda i: (0, 0)),   # resident across steps
            ],
            out_specs=pl.BlockSpec((bt, N_OUT), lambda i: (i, 0)),
        ),
        compiler_params=pltpu.CompilerParams(
            dimension_semantics=("parallel",),
            vmem_limit_bytes=32 * 1024 * 1024),
    )(x, w, b)

    return {
        "label1": fused[:, :N1],
        "label2": fused[:, N1:N1 + N2],
        "label3": fused[:, N1 + N2:],
    }


def init_params(key):
    """Deterministic nn.Linear-style init (uniform +-1/sqrt(fan_in))."""
    bound = 1.0 / math.sqrt(C_FEAT)
    ks = jax.random.split(key, 6)
    w1 = jax.random.uniform(ks[0], (N1, C_FEAT), jnp.float32, -bound, bound)
    b1 = jax.random.uniform(ks[1], (N1,), jnp.float32, -bound, bound)
    w2 = jax.random.uniform(ks[2], (N2, C_FEAT), jnp.float32, -bound, bound)
    b2 = jax.random.uniform(ks[3], (N2,), jnp.float32, -bound, bound)
    w3 = jax.random.uniform(ks[4], (N3, C_FEAT), jnp.float32, -bound, bound)
    b3 = jax.random.uniform(ks[5], (N3,), jnp.float32, -bound, bound)
    # fuse: PyTorch Linear is y = x @ W.T + b  ->  fused W is [C, 18]
    w_fused = jnp.concatenate([w1.T, w2.T, w3.T], axis=1)
    b_fused = jnp.concatenate([b1, b2, b3], axis=0)
    return w_fused, b_fused, (w1, b1, w2, b2, w3, b3)


def _reference(feat_nchw, params, feat_dtype=jnp.bfloat16):
    """Pure-JAX reference for the head; applies the same bf16 feature cast the
    kernel path uses (a deliberate perf choice), with f32 accumulation."""
    w1, b1, w2, b2, w3, b3 = params
    B = feat_nchw.shape[0]
    f = feat_nchw.astype(feat_dtype).astype(jnp.float32)
    pooled = jnp.mean(f, axis=(2, 3)).reshape(B, -1)       # adaptive_avg_pool2d(x, 1)
    l1 = pooled @ w1.T + b1
    l2 = jax.nn.sigmoid(pooled @ w2.T + b2)
    l3 = pooled @ w3.T + b3
    return {"label1": l1, "label2": l2, "label3": l3}


if __name__ == "__main__":
    key = jax.random.PRNGKey(0)
    k_x, k_p = jax.random.split(key)

    # Small, shape-consistent example: densenet161 feature map for batch=2.
    B, H, W = 2, 7, 7
    feat = jax.random.normal(k_x, (B, C_FEAT, H, W), jnp.float32)

    w_fused, b_fused, raw_params = init_params(k_p)

    out = net_heads(feat, w_fused, b_fused)
    out = jax.tree_util.tree_map(jax.block_until_ready, out)

    ref = _reference(feat, raw_params)
    for k in ("label1", "label2", "label3"):
        assert out[k].shape == ref[k].shape, k
        assert jnp.allclose(out[k], ref[k], atol=1e-3, rtol=1e-3), k

    print("KERNEL_OK")
</pallas_src>

<mosaic_0001>
module attributes {stable_mosaic.version = 11 : i64} {
  func.func @_heads_kernel(%arg0: i32, %arg1: memref<2x2208x49xbf16, #tpu.memory_space<vmem>>, %arg2: memref<2208x18xf32, #tpu.memory_space<vmem>>, %arg3: memref<1x18xf32, #tpu.memory_space<vmem>>, %arg4: memref<2x18xf32, #tpu.memory_space<vmem>>) attributes {dimension_semantics = [#tpu.dimension_semantics<parallel>], iteration_bounds = array<i64: 1>, scalar_prefetch = 0 : i64, scratch_operands = 0 : i64, tpu.core_type = #tpu.core_type<tc>, window_params = [{transform_indices = @transform_0, window_bounds = array<i64: 2, 2208, 49>}, {pipeline_mode = #tpu.pipeline_mode<synchronous>, transform_indices = @transform_1, window_bounds = array<i64: 2208, 18>}, {pipeline_mode = #tpu.pipeline_mode<synchronous>, transform_indices = @transform_2, window_bounds = array<i64: 1, 18>}, {transform_indices = @transform_3, window_bounds = array<i64: 2, 18>}]} {
    %c0 = arith.constant 0 : index
    %c0_0 = arith.constant 0 : index
    %c0_1 = arith.constant 0 : index
    %0 = vector.load %arg1[%c0, %c0_0, %c0_1] : memref<2x2208x49xbf16, #tpu.memory_space<vmem>>, vector<2x2208x49xbf16>
    %1 = arith.extf %0 : vector<2x2208x49xbf16> to vector<2x2208x49xf32>
    %cst = arith.constant dense<0.000000e+00> : vector<2x2208xf32>
    %2 = vector.multi_reduction <add>, %1, %cst [2] : vector<2x2208x49xf32> to vector<2x2208xf32>
    %cst_2 = arith.constant 0.0204081628 : f32
    %3 = vector.broadcast %cst_2 : f32 to vector<2x2208xf32>
    %4 = arith.mulf %2, %3 : vector<2x2208xf32>
    %c0_3 = arith.constant 0 : index
    %c0_4 = arith.constant 0 : index
    %5 = vector.load %arg2[%c0_3, %c0_4] : memref<2208x18xf32, #tpu.memory_space<vmem>>, vector<2208x18xf32>
    %cst_5 = arith.constant dense<0.000000e+00> : vector<2x18xf32>
    %6 = tpu.matmul %4, %5, %cst_5 {dimension_numbers = #tpu.dot_dimension_numbers<[1], [0], [0], [1], [0, 0, 1, 1], [], []>} : vector<2x2208xf32>, vector<2208x18xf32>, vector<2x18xf32> -> vector<2x18xf32>
    %c0_6 = arith.constant 0 : index
    %c0_7 = arith.constant 0 : index
    %7 = vector.load %arg3[%c0_6, %c0_7] : memref<1x18xf32, #tpu.memory_space<vmem>>, vector<1x18xf32>
    %8 = vector.broadcast %7 : vector<1x18xf32> to vector<2x18xf32>
    %9 = arith.addf %6, %8 : vector<2x18xf32>
    %10 = tpu.iota {dimensions = array<i32: 1>} : vector<2x18xi32>
    %c9_i32 = arith.constant 9 : i32
    %11 = vector.broadcast %c9_i32 : i32 to vector<2x18xi32>
    %12 = arith.cmpi sge, %10, %11 : vector<2x18xi32>
    %c11_i32 = arith.constant 11 : i32
    %13 = vector.broadcast %c11_i32 : i32 to vector<2x18xi32>
    %14 = arith.cmpi slt, %10, %13 : vector<2x18xi32>
    %15 = arith.andi %12, %14 : vector<2x18xi1>
    %16 = arith.negf %9 : vector<2x18xf32>
    %17 = math.exp %16 : vector<2x18xf32>
    %cst_8 = arith.constant 1.000000e+00 : f32
    %18 = vector.broadcast %cst_8 : f32 to vector<2x18xf32>
    %19 = arith.addf %18, %17 : vector<2x18xf32>
    %20 = arith.divf %18, %19 : vector<2x18xf32>
    %21 = arith.select %15, %20, %9 : vector<2x18xi1>, vector<2x18xf32>
    %c0_9 = arith.constant 0 : index
    %c0_10 = arith.constant 0 : index
    %22 = vector.load %arg4[%c0_9, %c0_10] : memref<2x18xf32, #tpu.memory_space<vmem>>, vector<2x18xf32>
    tpu.vector_store %arg4[%c0_9, %c0_10], %21 {strides = array<i32>} : memref<2x18xf32, #tpu.memory_space<vmem>>, vector<2x18xf32>,
    return
  }
  func.func @transform_0(%arg0: i32) -> (i32, i32, i32) {
    %c0_i32 = arith.constant 0 : i32
    %c0_i32_0 = arith.constant 0 : i32
    %c0_i32_1 = arith.constant 0 : i32
    return %arg0, %c0_i32, %c0_i32_0 : i32, i32, i32
  }
  func.func @transform_1(%arg0: i32) -> (i32, i32) {
    %c0_i32 = arith.constant 0 : i32
    %c0_i32_0 = arith.constant 0 : i32
    %c0_i32_1 = arith.constant 0 : i32
    return %c0_i32, %c0_i32_0 : i32, i32
  }
  func.func @transform_2(%arg0: i32) -> (i32, i32) {
    %c0_i32 = arith.constant 0 : i32
    %c0_i32_0 = arith.constant 0 : i32
    %c0_i32_1 = arith.constant 0 : i32
    return %c0_i32, %c0_i32_0 : i32, i32
  }
  func.func @transform_3(%arg0: i32) -> (i32, i32) {
    %c0_i32 = arith.constant 0 : i32
    %c0_i32_0 = arith.constant 0 : i32
    return %arg0, %c0_i32 : i32, i32
  }
}

</mosaic_0001>

<llo_original>
// kernel: tpu_custom_call.1
$region0: #{tpu_custom_call.1}
  #allocation0 [shape = 'u32[]', space=smem, size = 0x4, offset = 0x4, fixed_abs, tag = 'smem constant byte address 0x4 - core index']
  #allocation1 [shape = 'u32[72,128]{1,0:T(1,128)}', space=vmem, size = 0x9000, scoped, tag = 'internal scratch']
  %s0 = inlined_call_operand.vmem [shape: bf16[2,2208,49], index: 0, kind: input, shape index: {}]
  %s1 = inlined_call_operand.vmem [shape: f32[2208,18], index: 1, kind: input, shape index: {}]
  %s2 = inlined_call_operand.vmem [shape: f32[1,18], index: 2, kind: input, shape index: {}]
  %s3 = inlined_call_operand.hbm [shape: f32[2,18], index: 3, kind: output, shape index: {}]
  %s4 = sld [smem:[#allocation0]]
  $region22: #{tpu_custom_call.1} parent=0
    _
  %s6 = ssub.s32 1, %s4
  %s7 = scalar_select 0, %s6, %s4
  $region1: #{tpu_custom_call.1} parent=0
    #allocation2 [shape = 'u8[1024]{0}', space=vmem, size = 0x400, scoped, tag = 'output window, operand 0, single buffered']
    #allocation3 [shape = 's32[1]{0}', space=sflag, size = 0x4, scoped, tag = 'scoped memory for tpu_custom_call.1']
    %8 = vsyncpa [#allocation3], 0
    // Predicated region
    $region2: #{tpu_custom_call.1} parent=1 // pred_check
      _
    $region3: #{tpu_custom_call.1} parent=1 // pred_check_branch
      %10 = sbr.rel (0) target = $region5
    $region4: #{tpu_custom_call.1} parent=1 // pred_region
      _
    $region5: #{tpu_custom_call.1} parent=1 // pred_fallthru
      _
    // Predicated region
    $region6: #{tpu_custom_call.1} parent=1 // pred_check
      _
    $region7: #{tpu_custom_call.1} parent=1 // pred_check_branch
      %12 = sbr.rel (0) target = $region9
    $region8: #{tpu_custom_call.1} parent=1 // pred_region
      _
    $region9: #{tpu_custom_call.1} parent=1 // pred_fallthru
      _
    // Predicated region
    $region10: #{tpu_custom_call.1} parent=1 // pred_check
      _
    $region11: #{tpu_custom_call.1} parent=1 // pred_check_branch
      %14 = sbr.rel (0) target = $region13
    $region12: #{tpu_custom_call.1} parent=1 // pred_region
      _
    $region13: #{tpu_custom_call.1} parent=1 // pred_fallthru
      _
    %v15 = vld [vmem:[%s0] sm:$0xf]
    %v16 = vld [vmem:[%s0 + $0x4] sm:$0xf]
    %v17 = vld [vmem:[%s0 + $0x8] sm:$0xf]
    %v18 = vld [vmem:[%s0 + $0xc] sm:$0xf]
    %v19 = vld [vmem:[%s0 + $0x10] sm:$0xf]
    %v20 = vld [vmem:[%s0 + $0x14] sm:$0xf]
    %v21 = vld [vmem:[%s0 + $0x18] sm:$0xf]
    %v22 = vld [vmem:[%s0 + $0x1c] sm:$0xf]
    %v23 = vld [vmem:[%s0 + $0x20] sm:$0xf]
    %v24 = vld [vmem:[%s0 + $0x24] sm:$0xf]
    %v25 = vld [vmem:[%s0 + $0x28] sm:$0xf]
    %v26 = vld [vmem:[%s0 + $0x2c] sm:$0xf]
    %v27 = vld [vmem:[%s0 + $0x30] sm:$0xf]
    %v28 = vld [vmem:[%s0 + $0x34] sm:$0xf]
    %v29 = vld [vmem:[%s0 + $0x38] sm:$0xf]
    %v30 = vld [vmem:[%s0 + $0x3c] sm:$0xf]
    %v31 = vld [vmem:[%s0 + $0x40] sm:$0xf]
    %v32 = vld [vmem:[%s0 + $0x44] sm:$0xf]
    %v33 = vld [vmem:[%s0 + $0x48] sm:$0xf]
    %v34 = vld [vmem:[%s0 + $0x4c] sm:$0xf]
    %v35 = vld [vmem:[%s0 + $0x50] sm:$0xf]
    %v36 = vld [vmem:[%s0 + $0x54] sm:$0xf]
    %v37 = vld [vmem:[%s0 + $0x58] sm:$0xf]
    %v38 = vld [vmem:[%s0 + $0x5c] sm:$0xf]
    %v39 = vld [vmem:[%s0 + $0x60] sm:$0xf]
    %v40 = vld [vmem:[%s0 + $0x64] sm:$0xf]
    %v41 = vld [vmem:[%s0 + $0x68] sm:$0xf]
    %v42 = vld [vmem:[%s0 + $0x6c] sm:$0xf]
    %v43 = vld [vmem:[%s0 + $0x70] sm:$0xf]
    %v44 = vld [vmem:[%s0 + $0x74] sm:$0xf]
    %v45 = vld [vmem:[%s0 + $0x78] sm:$0xf]
    %v46 = vld [vmem:[%s0 + $0x7c] sm:$0xf]
    %v47 = vld [vmem:[%s0 + $0x80] sm:$0xf]
    %v48 = vld [vmem:[%s0 + $0x84] sm:$0xf]
    %v49 = vld [vmem:[%s0 + $0x88] sm:$0xf]
    %v50 = vld [vmem:[%s0 + $0x8c] sm:$0xf]
    %v51 = vld [vmem:[%s0 + $0x90] sm:$0xf]
    %v52 = vld [vmem:[%s0 + $0x94] sm:$0xf]
    %v53 = vld [vmem:[%s0 + $0x98] sm:$0xf]
    %v54 = vld [vmem:[%s0 + $0x9c] sm:$0xf]
    %v55 = vld [vmem:[%s0 + $0xa0] sm:$0xf]
    %v56 = vld [vmem:[%s0 + $0xa4] sm:$0xf]
    %v57 = vld [vmem:[%s0 + $0xa8] sm:$0xf]
    %v58 = vld [vmem:[%s0 + $0xac] sm:$0xf]
    %v59 = vld [vmem:[%s0 + $0xb0] sm:$0xf]
    %v60 = vld [vmem:[%s0 + $0xb4] sm:$0xf]
    %v61 = vld [vmem:[%s0 + $0xb8] sm:$0xf]
    %v62 = vld [vmem:[%s0 + $0xbc] sm:$0xf]
    %v63 = vld [vmem:[%s0 + $0xc0] sm:$0xf]
    %v64 = vld [vmem:[%s0 + $0xc4] sm:$0xf]
    %v65 = vld [vmem:[%s0 + $0xc8] sm:$0xf]
    %v66 = vld [vmem:[%s0 + $0xcc] sm:$0xf]
    %v67 = vld [vmem:[%s0 + $0xd0] sm:$0xf]
    %v68 = vld [vmem:[%s0 + $0xd4] sm:$0xf]
    %v69 = vld [vmem:[%s0 + $0xd8] sm:$0xf]
    %v70 = vld [vmem:[%s0 + $0xdc] sm:$0xf]
    %v71 = vld [vmem:[%s0 + $0xe0] sm:$0xf]
    %v72 = vld [vmem:[%s0 + $0xe4] sm:$0xf]
    %v73 = vld [vmem:[%s0 + $0xe8] sm:$0xf]
    %v74 = vld [vmem:[%s0 + $0xec] sm:$0xf]
    %v75 = vld [vmem:[%s0 + $0xf0] sm:$0xf]
    %v76 = vld [vmem:[%s0 + $0xf4] sm:$0xf]
    %v77 = vld [vmem:[%s0 + $0xf8] sm:$0xf]
    %v78 = vld [vmem:[%s0 + $0xfc] sm:$0xf]
    %v79 = vld [vmem:[%s0 + $0x100] sm:$0xf]
    %v80 = vld [vmem:[%s0 + $0x104] sm:$0xf]
    %v81 = vld [vmem:[%s0 + $0x108] sm:$0xf]
    %v82 = vld [vmem:[%s0 + $0x10c] sm:$0xf]
    %v83 = vld [vmem:[%s0 + $0x110] sm:$0xf]
    %v84 = vld [vmem:[%s0 + $0x114] sm:$0xf]
    %v85 = vld [vmem:[%s0 + $0x118] sm:$0xf]
    %v86 = vld [vmem:[%s0 + $0x11c] sm:$0xf]
    %v87 = vld [vmem:[%s0 + $0x120] sm:$0xf]
    %v88 = vld [vmem:[%s0 + $0x124] sm:$0xf]
    %v89 = vld [vmem:[%s0 + $0x128] sm:$0xf]
    %v90 = vld [vmem:[%s0 + $0x12c] sm:$0xf]
    %v91 = vld [vmem:[%s0 + $0x130] sm:$0xf]
    %v92 = vld [vmem:[%s0 + $0x134] sm:$0xf]
    %v93 = vld [vmem:[%s0 + $0x138] sm:$0xf]
    %v94 = vld [vmem:[%s0 + $0x13c] sm:$0xf]
    %v95 = vld [vmem:[%s0 + $0x140] sm:$0xf]
    %v96 = vld [vmem:[%s0 + $0x144] sm:$0xf]
    %v97 = vld [vmem:[%s0 + $0x148] sm:$0xf]
    %v98 = vld [vmem:[%s0 + $0x14c] sm:$0xf]
    %v99 = vld [vmem:[%s0 + $0x150] sm:$0xf]
    %v100 = vld [vmem:[%s0 + $0x154] sm:$0xf]
    %v101 = vld [vmem:[%s0 + $0x158] sm:$0xf]
    %v102 = vld [vmem:[%s0 + $0x15c] sm:$0xf]
    %v103 = vld [vmem:[%s0 + $0x160] sm:$0xf]
    %v104 = vld [vmem:[%s0 + $0x164] sm:$0xf]
    %v105 = vld [vmem:[%s0 + $0x168] sm:$0xf]
    %v106 = vld [vmem:[%s0 + $0x16c] sm:$0xf]
    %v107 = vld [vmem:[%s0 + $0x170] sm:$0xf]
    %v108 = vld [vmem:[%s0 + $0x174] sm:$0xf]
    %v109 = vld [vmem:[%s0 + $0x178] sm:$0xf]
    %v110 = vld [vmem:[%s0 + $0x17c] sm:$0xf]
    %v111 = vld [vmem:[%s0 + $0x180] sm:$0xf]
    %v112 = vld [vmem:[%s0 + $0x184] sm:$0xf]
    %v113 = vld [vmem:[%s0 + $0x188] sm:$0xf]
    %v114 = vld [vmem:[%s0 + $0x18c] sm:$0xf]
    %v115 = vld [vmem:[%s0 + $0x190] sm:$0xf]
    %v116 = vld [vmem:[%s0 + $0x194] sm:$0xf]
    %v117 = vld [vmem:[%s0 + $0x198] sm:$0xf]
    %v118 = vld [vmem:[%s0 + $0x19c] sm:$0xf]
    %v119 = vld [vmem:[%s0 + $0x1a0] sm:$0xf]
    %v120 = vld [vmem:[%s0 + $0x1a4] sm:$0xf]
    %v121 = vld [vmem:[%s0 + $0x1a8] sm:$0xf]
    %v122 = vld [vmem:[%s0 + $0x1ac] sm:$0xf]
    %v123 = vld [vmem:[%s0 + $0x1b0] sm:$0xf]
    %v124 = vld [vmem:[%s0 + $0x1b4] sm:$0xf]
    %v125 = vld [vmem:[%s0 + $0x1b8] sm:$0xf]
    %v126 = vld [vmem:[%s0 + $0x1bc] sm:$0xf]
    %v127 = vld [vmem:[%s0 + $0x1c0] sm:$0xf]
    %v128 = vld [vmem:[%s0 + $0x1c4] sm:$0xf]
    %v129 = vld [vmem:[%s0 + $0x1c8] sm:$0xf]
    %v130 = vld [vmem:[%s0 + $0x1cc] sm:$0xf]
    %v131 = vld [vmem:[%s0 + $0x1d0] sm:$0xf]
    %v132 = vld [vmem:[%s0 + $0x1d4] sm:$0xf]
    %v133 = vld [vmem:[%s0 + $0x1d8] sm:$0xf]
    %v134 = vld [vmem:[%s0 + $0x1dc] sm:$0xf]
    %v135 = vld [vmem:[%s0 + $0x1e0] sm:$0xf]
    %v136 = vld [vmem:[%s0 + $0x1e4] sm:$0xf]
    %v137 = vld [vmem:[%s0 + $0x1e8] sm:$0xf]
    %v138 = vld [vmem:[%s0 + $0x1ec] sm:$0xf]
    %v139 = vld [vmem:[%s0 + $0x1f0] sm:$0xf]
    %v140 = vld [vmem:[%s0 + $0x1f4] sm:$0xf]
    %v141 = vld [vmem:[%s0 + $0x1f8] sm:$0xf]
    %v142 = vld [vmem:[%s0 + $0x1fc] sm:$0xf]
    %v143 = vld [vmem:[%s0 + $0x200] sm:$0xf]
    %v144 = vld [vmem:[%s0 + $0x204] sm:$0xf]
    %v145 = vld [vmem:[%s0 + $0x208] sm:$0xf]
    %v146 = vld [vmem:[%s0 + $0x20c] sm:$0xf]
    %v147 = vld [vmem:[%s0 + $0x210] sm:$0xf]
    %v148 = vld [vmem:[%s0 + $0x214] sm:$0xf]
    %v149 = vld [vmem:[%s0 + $0x218] sm:$0xf]
    %v150 = vld [vmem:[%s0 + $0x21c] sm:$0xf]
    %v151 = vld [vmem:[%s0 + $0x220] sm:$0xf]
    %v152 = vld [vmem:[%s0 + $0x224] sm:$0xf]
    %v153 = vld [vmem:[%s0 + $0x228] sm:$0xf]
    %v154 = vld [vmem:[%s0 + $0x22c] sm:$0xf]
    %v155 = vld [vmem:[%s0 + $0x230] sm:$0xf]
    %v156 = vld [vmem:[%s0 + $0x234] sm:$0xf]
    %v157 = vld [vmem:[%s0 + $0x238] sm:$0xf]
    %v158 = vld [vmem:[%s0 + $0x23c] sm:$0xf]
    %v159 = vld [vmem:[%s0 + $0x240] sm:$0xf]
    %v160 = vld [vmem:[%s0 + $0x244] sm:$0xf]
    %v161 = vld [vmem:[%s0 + $0x248] sm:$0xf]
    %v162 = vld [vmem:[%s0 + $0x24c] sm:$0xf]
    %v163 = vld [vmem:[%s0 + $0x250] sm:$0xf]
    %v164 = vld [vmem:[%s0 + $0x254] sm:$0xf]
    %v165 = vld [vmem:[%s0 + $0x258] sm:$0xf]
    %v166 = vld [vmem:[%s0 + $0x25c] sm:$0xf]
    %v167 = vld [vmem:[%s0 + $0x260] sm:$0xf]
    %v168 = vld [vmem:[%s0 + $0x264] sm:$0xf]
    %v169 = vld [vmem:[%s0 + $0x268] sm:$0xf]
    %v170 = vld [vmem:[%s0 + $0x26c] sm:$0xf]
    %v171 = vld [vmem:[%s0 + $0x270] sm:$0xf]
    %v172 = vld [vmem:[%s0 + $0x274] sm:$0xf]
    %v173 = vld [vmem:[%s0 + $0x278] sm:$0xf]
    %v174 = vld [vmem:[%s0 + $0x27c] sm:$0xf]
    %v175 = vld [vmem:[%s0 + $0x280] sm:$0xf]
    %v176 = vld [vmem:[%s0 + $0x284] sm:$0xf]
    %v177 = vld [vmem:[%s0 + $0x288] sm:$0xf]
    %v178 = vld [vmem:[%s0 + $0x28c] sm:$0xf]
    %v179 = vld [vmem:[%s0 + $0x290] sm:$0xf]
    %v180 = vld [vmem:[%s0 + $0x294] sm:$0xf]
    %v181 = vld [vmem:[%s0 + $0x298] sm:$0xf]
    %v182 = vld [vmem:[%s0 + $0x29c] sm:$0xf]
    %v183 = vld [vmem:[%s0 + $0x2a0] sm:$0xf]
    %v184 = vld [vmem:[%s0 + $0x2a4] sm:$0xf]
    %v185 = vld [vmem:[%s0 + $0x2a8] sm:$0xf]
    %v186 = vld [vmem:[%s0 + $0x2ac] sm:$0xf]
    %v187 = vld [vmem:[%s0 + $0x2b0] sm:$0xf]
    %v188 = vld [vmem:[%s0 + $0x2b4] sm:$0xf]
    %v189 = vld [vmem:[%s0 + $0x2b8] sm:$0xf]
    %v190 = vld [vmem:[%s0 + $0x2bc] sm:$0xf]
    %v191 = vld [vmem:[%s0 + $0x2c0] sm:$0xf]
    %v192 = vld [vmem:[%s0 + $0x2c4] sm:$0xf]
    %v193 = vld [vmem:[%s0 + $0x2c8] sm:$0xf]
    %v194 = vld [vmem:[%s0 + $0x2cc] sm:$0xf]
    %v195 = vld [vmem:[%s0 + $0x2d0] sm:$0xf]
    %v196 = vld [vmem:[%s0 + $0x2d4] sm:$0xf]
    %v197 = vld [vmem:[%s0 + $0x2d8] sm:$0xf]
    %v198 = vld [vmem:[%s0 + $0x2dc] sm:$0xf]
    %v199 = vld [vmem:[%s0 + $0x2e0] sm:$0xf]
    %v200 = vld [vmem:[%s0 + $0x2e4] sm:$0xf]
    %v201 = vld [vmem:[%s0 + $0x2e8] sm:$0xf]
    %v202 = vld [vmem:[%s0 + $0x2ec] sm:$0xf]
    %v203 = vld [vmem:[%s0 + $0x2f0] sm:$0xf]
    %v204 = vld [vmem:[%s0 + $0x2f4] sm:$0xf]
    %v205 = vld [vmem:[%s0 + $0x2f8] sm:$0xf]
    %v206 = vld [vmem:[%s0 + $0x2fc] sm:$0xf]
    %v207 = vld [vmem:[%s0 + $0x300] sm:$0xf]
    %v208 = vld [vmem:[%s0 + $0x304] sm:$0xf]
    %v209 = vld [vmem:[%s0 + $0x308] sm:$0xf]
    %v210 = vld [vmem:[%s0 + $0x30c] sm:$0xf]
    %v211 = vld [vmem:[%s0 + $0x310] sm:$0xf]
    %v212 = vld [vmem:[%s0 + $0x314] sm:$0xf]
    %v213 = vld [vmem:[%s0 + $0x318] sm:$0xf]
    %v214 = vld [vmem:[%s0 + $0x31c] sm:$0xf]
    %v215 = vld [vmem:[%s0 + $0x320] sm:$0xf]
    %v216 = vld [vmem:[%s0 + $0x324] sm:$0xf]
    %v217 = vld [vmem:[%s0 + $0x328] sm:$0xf]
    %v218 = vld [vmem:[%s0 + $0x32c] sm:$0xf]
    %v219 = vld [vmem:[%s0 + $0x330] sm:$0xf]
    %v220 = vld [vmem:[%s0 + $0x334] sm:$0xf]
    %v221 = vld [vmem:[%s0 + $0x338] sm:$0xf]
    %v222 = vld [vmem:[%s0 + $0x33c] sm:$0xf]
    %v223 = vld [vmem:[%s0 + $0x340] sm:$0xf]
    %v224 = vld [vmem:[%s0 + $0x344] sm:$0xf]
    %v225 = vld [vmem:[%s0 + $0x348] sm:$0xf]
    %v226 = vld [vmem:[%s0 + $0x34c] sm:$0xf]
    %v227 = vld [vmem:[%s0 + $0x350] sm:$0xf]
    %v228 = vld [vmem:[%s0 + $0x354] sm:$0xf]
    %v229 = vld [vmem:[%s0 + $0x358] sm:$0xf]
    %v230 = vld [vmem:[%s0 + $0x35c] sm:$0xf]
    %v231 = vld [vmem:[%s0 + $0x360] sm:$0xf]
    %v232 = vld [vmem:[%s0 + $0x364] sm:$0xf]
    %v233 = vld [vmem:[%s0 + $0x368] sm:$0xf]
    %v234 = vld [vmem:[%s0 + $0x36c] sm:$0xf]
    %v235 = vld [vmem:[%s0 + $0x370] sm:$0xf]
    %v236 = vld [vmem:[%s0 + $0x374] sm:$0xf]
    %v237 = vld [vmem:[%s0 + $0x378] sm:$0xf]
    %v238 = vld [vmem:[%s0 + $0x37c] sm:$0xf]
    %v239 = vld [vmem:[%s0 + $0x380] sm:$0xf]
    %v240 = vld [vmem:[%s0 + $0x384] sm:$0xf]
    %v241 = vld [vmem:[%s0 + $0x388] sm:$0xf]
    %v242 = vld [vmem:[%s0 + $0x38c] sm:$0xf]
    %v243 = vld [vmem:[%s0 + $0x390] sm:$0xf]
    %v244 = vld [vmem:[%s0 + $0x394] sm:$0xf]
    %v245 = vld [vmem:[%s0 + $0x398] sm:$0xf]
    %v246 = vld [vmem:[%s0 + $0x39c] sm:$0xf]
    %v247 = vld [vmem:[%s0 + $0x3a0] sm:$0xf]
    %v248 = vld [vmem:[%s0 + $0x3a4] sm:$0xf]
    %v249 = vld [vmem:[%s0 + $0x3a8] sm:$0xf]
    %v250 = vld [vmem:[%s0 + $0x3ac] sm:$0xf]
    %v251 = vld [vmem:[%s0 + $0x3b0] sm:$0xf]
    %v252 = vld [vmem:[%s0 + $0x3b4] sm:$0xf]
    %v253 = vld [vmem:[%s0 + $0x3b8] sm:$0xf]
    %v254 = vld [vmem:[%s0 + $0x3bc] sm:$0xf]
    %v255 = vld [vmem:[%s0 + $0x3c0] sm:$0xf]
    %v256 = vld [vmem:[%s0 + $0x3c4] sm:$0xf]
    %v257 = vld [vmem:[%s0 + $0x3c8] sm:$0xf]
    %v258 = vld [vmem:[%s0 + $0x3cc] sm:$0xf]
    %v259 = vld [vmem:[%s0 + $0x3d0] sm:$0xf]
    %v260 = vld [vmem:[%s0 + $0x3d4] sm:$0xf]
    %v261 = vld [vmem:[%s0 + $0x3d8] sm:$0xf]
    %v262 = vld [vmem:[%s0 + $0x3dc] sm:$0xf]
    %v263 = vld [vmem:[%s0 + $0x3e0] sm:$0xf]
    %v264 = vld [vmem:[%s0 + $0x3e4] sm:$0xf]
    %v265 = vld [vmem:[%s0 + $0x3e8] sm:$0xf]
    %v266 = vld [vmem:[%s0 + $0x3ec] sm:$0xf]
    %v267 = vld [vmem:[%s0 + $0x3f0] sm:$0xf]
    %v268 = vld [vmem:[%s0 + $0x3f4] sm:$0xf]
    %v269 = vld [vmem:[%s0 + $0x3f8] sm:$0xf]
    %v270 = vld [vmem:[%s0 + $0x3fc] sm:$0xf]
    %v271 = vld [vmem:[%s0 + $0x400] sm:$0xf]
    %v272 = vld [vmem:[%s0 + $0x404] sm:$0xf]
    %v273 = vld [vmem:[%s0 + $0x408] sm:$0xf]
    %v274 = vld [vmem:[%s0 + $0x40c] sm:$0xf]
    %v275 = vld [vmem:[%s0 + $0x410] sm:$0xf]
    %v276 = vld [vmem:[%s0 + $0x414] sm:$0xf]
    %v277 = vld [vmem:[%s0 + $0x418] sm:$0xf]
    %v278 = vld [vmem:[%s0 + $0x41c] sm:$0xf]
    %v279 = vld [vmem:[%s0 + $0x420] sm:$0xf]
    %v280 = vld [vmem:[%s0 + $0x424] sm:$0xf]
    %v281 = vld [vmem:[%s0 + $0x428] sm:$0xf]
    %v282 = vld [vmem:[%s0 + $0x42c] sm:$0xf]
    %v283 = vld [vmem:[%s0 + $0x430] sm:$0xf]
    %v284 = vld [vmem:[%s0 + $0x434] sm:$0xf]
    %v285 = vld [vmem:[%s0 + $0x438] sm:$0xf]
    %v286 = vld [vmem:[%s0 + $0x43c] sm:$0xf]
    %v287 = vld [vmem:[%s0 + $0x440] sm:$0xf]
    %v288 = vld [vmem:[%s0 + $0x444] sm:$0xf]
    %v289 = vld [vmem:[%s0 + $0x448] sm:$0xf]
    %v290 = vld [vmem:[%s0 + $0x44c] sm:$0xf]
    %v291 = vld [vmem:[%s0 + $0x450] sm:$0xf]
    %v292 = vld [vmem:[%s0 + $0x454] sm:$0xf]
    %v293 = vld [vmem:[%s0 + $0x458] sm:$0xf]
    %v294 = vld [vmem:[%s0 + $0x45c] sm:$0xf]
    %v295 = vld [vmem:[%s0 + $0x460] sm:$0xf]
    %v296 = vld [vmem:[%s0 + $0x464] sm:$0xf]
    %v297 = vld [vmem:[%s0 + $0x468] sm:$0xf]
    %v298 = vld [vmem:[%s0 + $0x46c] sm:$0xf]
    %v299 = vld [vmem:[%s0 + $0x470] sm:$0xf]
    %v300 = vld [vmem:[%s0 + $0x474] sm:$0xf]
    %v301 = vld [vmem:[%s0 + $0x478] sm:$0xf]
    %v302 = vld [vmem:[%s0 + $0x47c] sm:$0xf]
    %v303 = vld [vmem:[%s0 + $0x480] sm:$0xf]
    %v304 = vld [vmem:[%s0 + $0x484] sm:$0xf]
    %v305 = vld [vmem:[%s0 + $0x488] sm:$0xf]
    %v306 = vld [vmem:[%s0 + $0x48c] sm:$0xf]
    %v307 = vld [vmem:[%s0 + $0x490] sm:$0xf]
    %v308 = vld [vmem:[%s0 + $0x494] sm:$0xf]
    %v309 = vld [vmem:[%s0 + $0x498] sm:$0xf]
    %v310 = vld [vmem:[%s0 + $0x49c] sm:$0xf]
    %v311 = vld [vmem:[%s0 + $0x4a0] sm:$0xf]
    %v312 = vld [vmem:[%s0 + $0x4a4] sm:$0xf]
    %v313 = vld [vmem:[%s0 + $0x4a8] sm:$0xf]
    %v314 = vld [vmem:[%s0 + $0x4ac] sm:$0xf]
    %v315 = vld [vmem:[%s0 + $0x4b0] sm:$0xf]
    %v316 = vld [vmem:[%s0 + $0x4b4] sm:$0xf]
    %v317 = vld [vmem:[%s0 + $0x4b8] sm:$0xf]
    %v318 = vld [vmem:[%s0 + $0x4bc] sm:$0xf]
    %v319 = vld [vmem:[%s0 + $0x4c0] sm:$0xf]
    %v320 = vld [vmem:[%s0 + $0x4c4] sm:$0xf]
    %v321 = vld [vmem:[%s0 + $0x4c8] sm:$0xf]
    %v322 = vld [vmem:[%s0 + $0x4cc] sm:$0xf]
    %v323 = vld [vmem:[%s0 + $0x4d0] sm:$0xf]
    %v324 = vld [vmem:[%s0 + $0x4d4] sm:$0xf]
    %v325 = vld [vmem:[%s0 + $0x4d8] sm:$0xf]
    %v326 = vld [vmem:[%s0 + $0x4dc] sm:$0xf]
    %v327 = vld [vmem:[%s0 + $0x4e0] sm:$0xf]
    %v328 = vld [vmem:[%s0 + $0x4e4] sm:$0xf]
    %v329 = vld [vmem:[%s0 + $0x4e8] sm:$0xf]
    %v330 = vld [vmem:[%s0 + $0x4ec] sm:$0xf]
    %v331 = vld [vmem:[%s0 + $0x4f0] sm:$0xf]
    %v332 = vld [vmem:[%s0 + $0x4f4] sm:$0xf]
    %v333 = vld [vmem:[%s0 + $0x4f8] sm:$0xf]
    %v334 = vld [vmem:[%s0 + $0x4fc] sm:$0xf]
    %v335 = vld [vmem:[%s0 + $0x500] sm:$0xf]
    %v336 = vld [vmem:[%s0 + $0x504] sm:$0xf]
    %v337 = vld [vmem:[%s0 + $0x508] sm:$0xf]
    %v338 = vld [vmem:[%s0 + $0x50c] sm:$0xf]
    %v339 = vld [vmem:[%s0 + $0x510] sm:$0xf]
    %v340 = vld [vmem:[%s0 + $0x514] sm:$0xf]
    %v341 = vld [vmem:[%s0 + $0x518] sm:$0xf]
    %v342 = vld [vmem:[%s0 + $0x51c] sm:$0xf]
    %v343 = vld [vmem:[%s0 + $0x520] sm:$0xf]
    %v344 = vld [vmem:[%s0 + $0x524] sm:$0xf]
    %v345 = vld [vmem:[%s0 + $0x528] sm:$0xf]
    %v346 = vld [vmem:[%s0 + $0x52c] sm:$0xf]
    %v347 = vld [vmem:[%s0 + $0x530] sm:$0xf]
    %v348 = vld [vmem:[%s0 + $0x534] sm:$0xf]
    %v349 = vld [vmem:[%s0 + $0x538] sm:$0xf]
    %v350 = vld [vmem:[%s0 + $0x53c] sm:$0xf]
    %v351 = vld [vmem:[%s0 + $0x540] sm:$0xf]
    %v352 = vld [vmem:[%s0 + $0x544] sm:$0xf]
    %v353 = vld [vmem:[%s0 + $0x548] sm:$0xf]
    %v354 = vld [vmem:[%s0 + $0x54c] sm:$0xf]
    %v355 = vld [vmem:[%s0 + $0x550] sm:$0xf]
    %v356 = vld [vmem:[%s0 + $0x554] sm:$0xf]
    %v357 = vld [vmem:[%s0 + $0x558] sm:$0xf]
    %v358 = vld [vmem:[%s0 + $0x55c] sm:$0xf]
    %v359 = vld [vmem:[%s0 + $0x560] sm:$0xf]
    %v360 = vld [vmem:[%s0 + $0x564] sm:$0xf]
    %v361 = vld [vmem:[%s0 + $0x568] sm:$0xf]
    %v362 = vld [vmem:[%s0 + $0x56c] sm:$0xf]
    %v363 = vld [vmem:[%s0 + $0x570] sm:$0xf]
    %v364 = vld [vmem:[%s0 + $0x574] sm:$0xf]
    %v365 = vld [vmem:[%s0 + $0x578] sm:$0xf]
    %v366 = vld [vmem:[%s0 + $0x57c] sm:$0xf]
    %v367 = vld [vmem:[%s0 + $0x580] sm:$0xf]
    %v368 = vld [vmem:[%s0 + $0x584] sm:$0xf]
    %v369 = vld [vmem:[%s0 + $0x588] sm:$0xf]
    %v370 = vld [vmem:[%s0 + $0x58c] sm:$0xf]
    %v371 = vld [vmem:[%s0 + $0x590] sm:$0xf]
    %v372 = vld [vmem:[%s0 + $0x594] sm:$0xf]
    %v373 = vld [vmem:[%s0 + $0x598] sm:$0xf]
    %v374 = vld [vmem:[%s0 + $0x59c] sm:$0xf]
    %v375 = vld [vmem:[%s0 + $0x5a0] sm:$0xf]
    %v376 = vld [vmem:[%s0 + $0x5a4] sm:$0xf]
    %v377 = vld [vmem:[%s0 + $0x5a8] sm:$0xf]
    %v378 = vld [vmem:[%s0 + $0x5ac] sm:$0xf]
    %v379 = vld [vmem:[%s0 + $0x5b0] sm:$0xf]
    %v380 = vld [vmem:[%s0 + $0x5b4] sm:$0xf]
    %v381 = vld [vmem:[%s0 + $0x5b8] sm:$0xf]
    %v382 = vld [vmem:[%s0 + $0x5bc] sm:$0xf]
    %v383 = vld [vmem:[%s0 + $0x5c0] sm:$0xf]
    %v384 = vld [vmem:[%s0 + $0x5c4] sm:$0xf]
    %v385 = vld [vmem:[%s0 + $0x5c8] sm:$0xf]
    %v386 = vld [vmem:[%s0 + $0x5cc] sm:$0xf]
    %v387 = vld [vmem:[%s0 + $0x5d0] sm:$0xf]
    %v388 = vld [vmem:[%s0 + $0x5d4] sm:$0xf]
    %v389 = vld [vmem:[%s0 + $0x5d8] sm:$0xf]
    %v390 = vld [vmem:[%s0 + $0x5dc] sm:$0xf]
    %v391 = vld [vmem:[%s0 + $0x5e0] sm:$0xf]
    %v392 = vld [vmem:[%s0 + $0x5e4] sm:$0xf]
    %v393 = vld [vmem:[%s0 + $0x5e8] sm:$0xf]
    %v394 = vld [vmem:[%s0 + $0x5ec] sm:$0xf]
    %v395 = vld [vmem:[%s0 + $0x5f0] sm:$0xf]
    %v396 = vld [vmem:[%s0 + $0x5f4] sm:$0xf]
    %v397 = vld [vmem:[%s0 + $0x5f8] sm:$0xf]
    %v398 = vld [vmem:[%s0 + $0x5fc] sm:$0xf]
    %v399 = vld [vmem:[%s0 + $0x600] sm:$0xf]
    %v400 = vld [vmem:[%s0 + $0x604] sm:$0xf]
    %v401 = vld [vmem:[%s0 + $0x608] sm:$0xf]
    %v402 = vld [vmem:[%s0 + $0x60c] sm:$0xf]
    %v403 = vld [vmem:[%s0 + $0x610] sm:$0xf]
    %v404 = vld [vmem:[%s0 + $0x614] sm:$0xf]
    %v405 = vld [vmem:[%s0 + $0x618] sm:$0xf]
    %v406 = vld [vmem:[%s0 + $0x61c] sm:$0xf]
    %v407 = vld [vmem:[%s0 + $0x620] sm:$0xf]
    %v408 = vld [vmem:[%s0 + $0x624] sm:$0xf]
    %v409 = vld [vmem:[%s0 + $0x628] sm:$0xf]
    %v410 = vld [vmem:[%s0 + $0x62c] sm:$0xf]
    %v411 = vld [vmem:[%s0 + $0x630] sm:$0xf]
    %v412 = vld [vmem:[%s0 + $0x634] sm:$0xf]
    %v413 = vld [vmem:[%s0 + $0x638] sm:$0xf]
    %v414 = vld [vmem:[%s0 + $0x63c] sm:$0xf]
    %v415 = vld [vmem:[%s0 + $0x640] sm:$0xf]
    %v416 = vld [vmem:[%s0 + $0x644] sm:$0xf]
    %v417 = vld [vmem:[%s0 + $0x648] sm:$0xf]
    %v418 = vld [vmem:[%s0 + $0x64c] sm:$0xf]
    %v419 = vld [vmem:[%s0 + $0x650] sm:$0xf]
    %v420 = vld [vmem:[%s0 + $0x654] sm:$0xf]
    %v421 = vld [vmem:[%s0 + $0x658] sm:$0xf]
    %v422 = vld [vmem:[%s0 + $0x65c] sm:$0xf]
    %v423 = vld [vmem:[%s0 + $0x660] sm:$0xf]
    %v424 = vld [vmem:[%s0 + $0x664] sm:$0xf]
    %v425 = vld [vmem:[%s0 + $0x668] sm:$0xf]
    %v426 = vld [vmem:[%s0 + $0x66c] sm:$0xf]
    %v427 = vld [vmem:[%s0 + $0x670] sm:$0xf]
    %v428 = vld [vmem:[%s0 + $0x674] sm:$0xf]
    %v429 = vld [vmem:[%s0 + $0x678] sm:$0xf]
    %v430 = vld [vmem:[%s0 + $0x67c] sm:$0xf]
    %v431 = vld [vmem:[%s0 + $0x680] sm:$0xf]
    %v432 = vld [vmem:[%s0 + $0x684] sm:$0xf]
    %v433 = vld [vmem:[%s0 + $0x688] sm:$0xf]
    %v434 = vld [vmem:[%s0 + $0x68c] sm:$0xf]
    %v435 = vld [vmem:[%s0 + $0x690] sm:$0xf]
    %v436 = vld [vmem:[%s0 + $0x694] sm:$0xf]
    %v437 = vld [vmem:[%s0 + $0x698] sm:$0xf]
    %v438 = vld [vmem:[%s0 + $0x69c] sm:$0xf]
    %v439 = vld [vmem:[%s0 + $0x6a0] sm:$0xf]
    %v440 = vld [vmem:[%s0 + $0x6a4] sm:$0xf]
    %v441 = vld [vmem:[%s0 + $0x6a8] sm:$0xf]
    %v442 = vld [vmem:[%s0 + $0x6ac] sm:$0xf]
    %v443 = vld [vmem:[%s0 + $0x6b0] sm:$0xf]
    %v444 = vld [vmem:[%s0 + $0x6b4] sm:$0xf]
    %v445 = vld [vmem:[%s0 + $0x6b8] sm:$0xf]
    %v446 = vld [vmem:[%s0 + $0x6bc] sm:$0xf]
    %v447 = vld [vmem:[%s0 + $0x6c0] sm:$0xf]
    %v448 = vld [vmem:[%s0 + $0x6c4] sm:$0xf]
    %v449 = vld [vmem:[%s0 + $0x6c8] sm:$0xf]
    %v450 = vld [vmem:[%s0 + $0x6cc] sm:$0xf]
    %v451 = vld [vmem:[%s0 + $0x6d0] sm:$0xf]
    %v452 = vld [vmem:[%s0 + $0x6d4] sm:$0xf]
    %v453 = vld [vmem:[%s0 + $0x6d8] sm:$0xf]
    %v454 = vld [vmem:[%s0 + $0x6dc] sm:$0xf]
    %v455 = vld [vmem:[%s0 + $0x6e0] sm:$0xf]
    %v456 = vld [vmem:[%s0 + $0x6e4] sm:$0xf]
    %v457 = vld [vmem:[%s0 + $0x6e8] sm:$0xf]
    %v458 = vld [vmem:[%s0 + $0x6ec] sm:$0xf]
    %v459 = vld [vmem:[%s0 + $0x6f0] sm:$0xf]
    %v460 = vld [vmem:[%s0 + $0x6f4] sm:$0xf]
    %v461 = vld [vmem:[%s0 + $0x6f8] sm:$0xf]
    %v462 = vld [vmem:[%s0 + $0x6fc] sm:$0xf]
    %v463 = vld [vmem:[%s0 + $0x700] sm:$0xf]
    %v464 = vld [vmem:[%s0 + $0x704] sm:$0xf]
    %v465 = vld [vmem:[%s0 + $0x708] sm:$0xf]
    %v466 = vld [vmem:[%s0 + $0x70c] sm:$0xf]
    %v467 = vld [vmem:[%s0 + $0x710] sm:$0xf]
    %v468 = vld [vmem:[%s0 + $0x714] sm:$0xf]
    %v469 = vld [vmem:[%s0 + $0x718] sm:$0xf]
    %v470 = vld [vmem:[%s0 + $0x71c] sm:$0xf]
    %v471 = vld [vmem:[%s0 + $0x720] sm:$0xf]
    %v472 = vld [vmem:[%s0 + $0x724] sm:$0xf]
    %v473 = vld [vmem:[%s0 + $0x728] sm:$0xf]
    %v474 = vld [vmem:[%s0 + $0x72c] sm:$0xf]
    %v475 = vld [vmem:[%s0 + $0x730] sm:$0xf]
    %v476 = vld [vmem:[%s0 + $0x734] sm:$0xf]
    %v477 = vld [vmem:[%s0 + $0x738] sm:$0xf]
    %v478 = vld [vmem:[%s0 + $0x73c] sm:$0xf]
    %v479 = vld [vmem:[%s0 + $0x740] sm:$0xf]
    %v480 = vld [vmem:[%s0 + $0x744] sm:$0xf]
    %v481 = vld [vmem:[%s0 + $0x748] sm:$0xf]
    %v482 = vld [vmem:[%s0 + $0x74c] sm:$0xf]
    %v483 = vld [vmem:[%s0 + $0x750] sm:$0xf]
    %v484 = vld [vmem:[%s0 + $0x754] sm:$0xf]
    %v485 = vld [vmem:[%s0 + $0x758] sm:$0xf]
    %v486 = vld [vmem:[%s0 + $0x75c] sm:$0xf]
    %v487 = vld [vmem:[%s0 + $0x760] sm:$0xf]
    %v488 = vld [vmem:[%s0 + $0x764] sm:$0xf]
    %v489 = vld [vmem:[%s0 + $0x768] sm:$0xf]
    %v490 = vld [vmem:[%s0 + $0x76c] sm:$0xf]
    %v491 = vld [vmem:[%s0 + $0x770] sm:$0xf]
    %v492 = vld [vmem:[%s0 + $0x774] sm:$0xf]
    %v493 = vld [vmem:[%s0 + $0x778] sm:$0xf]
    %v494 = vld [vmem:[%s0 + $0x77c] sm:$0xf]
    %v495 = vld [vmem:[%s0 + $0x780] sm:$0xf]
    %v496 = vld [vmem:[%s0 + $0x784] sm:$0xf]
    %v497 = vld [vmem:[%s0 + $0x788] sm:$0xf]
    %v498 = vld [vmem:[%s0 + $0x78c] sm:$0xf]
    %v499 = vld [vmem:[%s0 + $0x790] sm:$0xf]
    %v500 = vld [vmem:[%s0 + $0x794] sm:$0xf]
    %v501 = vld [vmem:[%s0 + $0x798] sm:$0xf]
    %v502 = vld [vmem:[%s0 + $0x79c] sm:$0xf]
    %v503 = vld [vmem:[%s0 + $0x7a0] sm:$0xf]
    %v504 = vld [vmem:[%s0 + $0x7a4] sm:$0xf]
    %v505 = vld [vmem:[%s0 + $0x7a8] sm:$0xf]
    %v506 = vld [vmem:[%s0 + $0x7ac] sm:$0xf]
    %v507 = vld [vmem:[%s0 + $0x7b0] sm:$0xf]
    %v508 = vld [vmem:[%s0 + $0x7b4] sm:$0xf]
    %v509 = vld [vmem:[%s0 + $0x7b8] sm:$0xf]
    %v510 = vld [vmem:[%s0 + $0x7bc] sm:$0xf]
    %v511 = vld [vmem:[%s0 + $0x7c0] sm:$0xf]
    %v512 = vld [vmem:[%s0 + $0x7c4] sm:$0xf]
    %v513 = vld [vmem:[%s0 + $0x7c8] sm:$0xf]
    %v514 = vld [vmem:[%s0 + $0x7cc] sm:$0xf]
    %v515 = vld [vmem:[%s0 + $0x7d0] sm:$0xf]
    %v516 = vld [vmem:[%s0 + $0x7d4] sm:$0xf]
    %v517 = vld [vmem:[%s0 + $0x7d8] sm:$0xf]
    %v518 = vld [vmem:[%s0 + $0x7dc] sm:$0xf]
    %v519 = vld [vmem:[%s0 + $0x7e0] sm:$0xf]
    %v520 = vld [vmem:[%s0 + $0x7e4] sm:$0xf]
    %v521 = vld [vmem:[%s0 + $0x7e8] sm:$0xf]
    %v522 = vld [vmem:[%s0 + $0x7ec] sm:$0xf]
    %v523 = vld [vmem:[%s0 + $0x7f0] sm:$0xf]
    %v524 = vld [vmem:[%s0 + $0x7f4] sm:$0xf]
    %v525 = vld [vmem:[%s0 + $0x7f8] sm:$0xf]
    %v526 = vld [vmem:[%s0 + $0x7fc] sm:$0xf]
    %v527 = vld [vmem:[%s0 + $0x800] sm:$0xf]
    %v528 = vld [vmem:[%s0 + $0x804] sm:$0xf]
    %v529 = vld [vmem:[%s0 + $0x808] sm:$0xf]
    %v530 = vld [vmem:[%s0 + $0x80c] sm:$0xf]
    %v531 = vld [vmem:[%s0 + $0x810] sm:$0xf]
    %v532 = vld [vmem:[%s0 + $0x814] sm:$0xf]
    %v533 = vld [vmem:[%s0 + $0x818] sm:$0xf]
    %v534 = vld [vmem:[%s0 + $0x81c] sm:$0xf]
    %v535 = vld [vmem:[%s0 + $0x820] sm:$0xf]
    %v536 = vld [vmem:[%s0 + $0x824] sm:$0xf]
    %v537 = vld [vmem:[%s0 + $0x828] sm:$0xf]
    %v538 = vld [vmem:[%s0 + $0x82c] sm:$0xf]
    %v539 = vld [vmem:[%s0 + $0x830] sm:$0xf]
    %v540 = vld [vmem:[%s0 + $0x834] sm:$0xf]
    %v541 = vld [vmem:[%s0 + $0x838] sm:$0xf]
    %v542 = vld [vmem:[%s0 + $0x83c] sm:$0xf]
    %v543 = vld [vmem:[%s0 + $0x840] sm:$0xf]
    %v544 = vld [vmem:[%s0 + $0x844] sm:$0xf]
    %v545 = vld [vmem:[%s0 + $0x848] sm:$0xf]
    %v546 = vld [vmem:[%s0 + $0x84c] sm:$0xf]
    %v547 = vld [vmem:[%s0 + $0x850] sm:$0xf]
    %v548 = vld [vmem:[%s0 + $0x854] sm:$0xf]
    %v549 = vld [vmem:[%s0 + $0x858] sm:$0xf]
    %v550 = vld [vmem:[%s0 + $0x85c] sm:$0xf]
    %v551 = vld [vmem:[%s0 + $0x860] sm:$0xf]
    %v552 = vld [vmem:[%s0 + $0x864] sm:$0xf]
    %v553 = vld [vmem:[%s0 + $0x868] sm:$0xf]
    %v554 = vld [vmem:[%s0 + $0x86c] sm:$0xf]
    %v555 = vld [vmem:[%s0 + $0x870] sm:$0xf]
    %v556 = vld [vmem:[%s0 + $0x874] sm:$0xf]
    %v557 = vld [vmem:[%s0 + $0x878] sm:$0xf]
    %v558 = vld [vmem:[%s0 + $0x87c] sm:$0xf]
    %v559 = vld [vmem:[%s0 + $0x880] sm:$0xf]
    %v560 = vld [vmem:[%s0 + $0x884] sm:$0xf]
    %v561 = vld [vmem:[%s0 + $0x888] sm:$0xf]
    %v562 = vld [vmem:[%s0 + $0x88c] sm:$0xf]
    %v563 = vld [vmem:[%s0 + $0x890] sm:$0xf]
    %v564 = vld [vmem:[%s0 + $0x894] sm:$0xf]
    %v565 = vld [vmem:[%s0 + $0x898] sm:$0xf]
    %v566 = vld [vmem:[%s0 + $0x89c] sm:$0xf]
    %v567 = vunpack.c.l.bf16 %v15
    %v568 = vunpack.c.l.bf16 %v16
    %v569 = vunpack.c.l.bf16 %v17
    %v570 = vunpack.c.l.bf16 %v18
    %v571 = vunpack.c.l.bf16 %v19
    %v572 = vunpack.c.l.bf16 %v20
    %v573 = vunpack.c.l.bf16 %v21
    %v574 = vunpack.c.l.bf16 %v22
    %v575 = vunpack.c.l.bf16 %v23
    %v576 = vunpack.c.l.bf16 %v24
    %v577 = vunpack.c.l.bf16 %v25
    %v578 = vunpack.c.l.bf16 %v26
    %v579 = vunpack.c.l.bf16 %v27
    %v580 = vunpack.c.l.bf16 %v28
    %v581 = vunpack.c.l.bf16 %v29
    %v582 = vunpack.c.l.bf16 %v30
    %v583 = vunpack.c.l.bf16 %v31
    %v584 = vunpack.c.l.bf16 %v32
    %v585 = vunpack.c.l.bf16 %v33
    %v586 = vunpack.c.l.bf16 %v34
    %v587 = vunpack.c.l.bf16 %v35
    %v588 = vunpack.c.l.bf16 %v36
    %v589 = vunpack.c.l.bf16 %v37
    %v590 = vunpack.c.l.bf16 %v38
    %v591 = vunpack.c.l.bf16 %v39
    %v592 = vunpack.c.l.bf16 %v40
    %v593 = vunpack.c.l.bf16 %v41
    %v594 = vunpack.c.l.bf16 %v42
    %v595 = vunpack.c.l.bf16 %v43
    %v596 = vunpack.c.l.bf16 %v44
    %v597 = vunpack.c.l.bf16 %v45
    %v598 = vunpack.c.l.bf16 %v46
    %v599 = vunpack.c.l.bf16 %v47
    %v600 = vunpack.c.l.bf16 %v48
    %v601 = vunpack.c.l.bf16 %v49
    %v602 = vunpack.c.l.bf16 %v50
    %v603 = vunpack.c.l.bf16 %v51
    %v604 = vunpack.c.l.bf16 %v52
    %v605 = vunpack.c.l.bf16 %v53
    %v606 = vunpack.c.l.bf16 %v54
    %v607 = vunpack.c.l.bf16 %v55
    %v608 = vunpack.c.l.bf16 %v56
    %v609 = vunpack.c.l.bf16 %v57
    %v610 = vunpack.c.l.bf16 %v58
    %v611 = vunpack.c.l.bf16 %v59
    %v612 = vunpack.c.l.bf16 %v60
    %v613 = vunpack.c.l.bf16 %v61
    %v614 = vunpack.c.l.bf16 %v62
    %v615 = vunpack.c.l.bf16 %v63
    %v616 = vunpack.c.l.bf16 %v64
    %v617 = vunpack.c.l.bf16 %v65
    %v618 = vunpack.c.l.bf16 %v66
    %v619 = vunpack.c.l.bf16 %v67
    %v620 = vunpack.c.l.bf16 %v68
    %v621 = vunpack.c.l.bf16 %v69
    %v622 = vunpack.c.l.bf16 %v70
    %v623 = vunpack.c.l.bf16 %v71
    %v624 = vunpack.c.l.bf16 %v72
    %v625 = vunpack.c.l.bf16 %v73
    %v626 = vunpack.c.l.bf16 %v74
    %v627 = vunpack.c.l.bf16 %v75
    %v628 = vunpack.c.l.bf16 %v76
    %v629 = vunpack.c.l.bf16 %v77
    %v630 = vunpack.c.l.bf16 %v78
    %v631 = vunpack.c.l.bf16 %v79
    %v632 = vunpack.c.l.bf16 %v80
    %v633 = vunpack.c.l.bf16 %v81
    %v634 = vunpack.c.l.bf16 %v82
    %v635 = vunpack.c.l.bf16 %v83
    %v636 = vunpack.c.l.bf16 %v84
    %v637 = vunpack.c.l.bf16 %v85
    %v638 = vunpack.c.l.bf16 %v86
    %v639 = vunpack.c.l.bf16 %v87
    %v640 = vunpack.c.l.bf16 %v88
    %v641 = vunpack.c.l.bf16 %v89
    %v642 = vunpack.c.l.bf16 %v90
    %v643 = vunpack.c.l.bf16 %v91
    %v644 = vunpack.c.l.bf16 %v92
    %v645 = vunpack.c.l.bf16 %v93
    %v646 = vunpack.c.l.bf16 %v94
    %v647 = vunpack.c.l.bf16 %v95
    %v648 = vunpack.c.l.bf16 %v96
    %v649 = vunpack.c.l.bf16 %v97
    %v650 = vunpack.c.l.bf16 %v98
    %v651 = vunpack.c.l.bf16 %v99
    %v652 = vunpack.c.l.bf16 %v100
    %v653 = vunpack.c.l.bf16 %v101
    %v654 = vunpack.c.l.bf16 %v102
    %v655 = vunpack.c.l.bf16 %v103
    %v656 = vunpack.c.l.bf16 %v104
    %v657 = vunpack.c.l.bf16 %v105
    %v658 = vunpack.c.l.bf16 %v106
    %v659 = vunpack.c.l.bf16 %v107
    %v660 = vunpack.c.l.bf16 %v108
    %v661 = vunpack.c.l.bf16 %v109
    %v662 = vunpack.c.l.bf16 %v110
    %v663 = vunpack.c.l.bf16 %v111
    %v664 = vunpack.c.l.bf16 %v112
    %v665 = vunpack.c.l.bf16 %v113
    %v666 = vunpack.c.l.bf16 %v114
    %v667 = vunpack.c.l.bf16 %v115
    %v668 = vunpack.c.l.bf16 %v116
    %v669 = vunpack.c.l.bf16 %v117
    %v670 = vunpack.c.l.bf16 %v118
    %v671 = vunpack.c.l.bf16 %v119
    %v672 = vunpack.c.l.bf16 %v120
    %v673 = vunpack.c.l.bf16 %v121
    %v674 = vunpack.c.l.bf16 %v122
    %v675 = vunpack.c.l.bf16 %v123
    %v676 = vunpack.c.l.bf16 %v124
    %v677 = vunpack.c.l.bf16 %v125
    %v678 = vunpack.c.l.bf16 %v126
    %v679 = vunpack.c.l.bf16 %v127
    %v680 = vunpack.c.l.bf16 %v128
    %v681 = vunpack.c.l.bf16 %v129
    %v682 = vunpack.c.l.bf16 %v130
    %v683 = vunpack.c.l.bf16 %v131
    %v684 = vunpack.c.l.bf16 %v132
    %v685 = vunpack.c.l.bf16 %v133
    %v686 = vunpack.c.l.bf16 %v134
    %v687 = vunpack.c.l.bf16 %v135
    %v688 = vunpack.c.l.bf16 %v136
    %v689 = vunpack.c.l.bf16 %v137
    %v690 = vunpack.c.l.bf16 %v138
    %v691 = vunpack.c.l.bf16 %v139
    %v692 = vunpack.c.l.bf16 %v140
    %v693 = vunpack.c.l.bf16 %v141
    %v694 = vunpack.c.l.bf16 %v142
    %v695 = vunpack.c.l.bf16 %v143
    %v696 = vunpack.c.l.bf16 %v144
    %v697 = vunpack.c.l.bf16 %v145
    %v698 = vunpack.c.l.bf16 %v146
    %v699 = vunpack.c.l.bf16 %v147
    %v700 = vunpack.c.l.bf16 %v148
    %v701 = vunpack.c.l.bf16 %v149
    %v702 = vunpack.c.l.bf16 %v150
    %v703 = vunpack.c.l.bf16 %v151
    %v704 = vunpack.c.l.bf16 %v152
    %v705 = vunpack.c.l.bf16 %v153
    %v706 = vunpack.c.l.bf16 %v154
    %v707 = vunpack.c.l.bf16 %v155
    %v708 = vunpack.c.l.bf16 %v156
    %v709 = vunpack.c.l.bf16 %v157
    %v710 = vunpack.c.l.bf16 %v158
    %v711 = vunpack.c.l.bf16 %v159
    %v712 = vunpack.c.l.bf16 %v160
    %v713 = vunpack.c.l.bf16 %v161
    %v714 = vunpack.c.l.bf16 %v162
    %v715 = vunpack.c.l.bf16 %v163
    %v716 = vunpack.c.l.bf16 %v164
    %v717 = vunpack.c.l.bf16 %v165
    %v718 = vunpack.c.l.bf16 %v166
    %v719 = vunpack.c.l.bf16 %v167
    %v720 = vunpack.c.l.bf16 %v168
    %v721 = vunpack.c.l.bf16 %v169
    %v722 = vunpack.c.l.bf16 %v170
    %v723 = vunpack.c.l.bf16 %v171
    %v724 = vunpack.c.l.bf16 %v172
    %v725 = vunpack.c.l.bf16 %v173
    %v726 = vunpack.c.l.bf16 %v174
    %v727 = vunpack.c.l.bf16 %v175
    %v728 = vunpack.c.l.bf16 %v176
    %v729 = vunpack.c.l.bf16 %v177
    %v730 = vunpack.c.l.bf16 %v178
    %v731 = vunpack.c.l.bf16 %v179
    %v732 = vunpack.c.l.bf16 %v180
    %v733 = vunpack.c.l.bf16 %v181
    %v734 = vunpack.c.l.bf16 %v182
    %v735 = vunpack.c.l.bf16 %v183
    %v736 = vunpack.c.l.bf16 %v184
    %v737 = vunpack.c.l.bf16 %v185
    %v738 = vunpack.c.l.bf16 %v186
    %v739 = vunpack.c.l.bf16 %v187
    %v740 = vunpack.c.l.bf16 %v188
    %v741 = vunpack.c.l.bf16 %v189
    %v742 = vunpack.c.l.bf16 %v190
    %v743 = vunpack.c.l.bf16 %v191
    %v744 = vunpack.c.l.bf16 %v192
    %v745 = vunpack.c.l.bf16 %v193
    %v746 = vunpack.c.l.bf16 %v194
    %v747 = vunpack.c.l.bf16 %v195
    %v748 = vunpack.c.l.bf16 %v196
    %v749 = vunpack.c.l.bf16 %v197
    %v750 = vunpack.c.l.bf16 %v198
    %v751 = vunpack.c.l.bf16 %v199
    %v752 = vunpack.c.l.bf16 %v200
    %v753 = vunpack.c.l.bf16 %v201
    %v754 = vunpack.c.l.bf16 %v202
    %v755 = vunpack.c.l.bf16 %v203
    %v756 = vunpack.c.l.bf16 %v204
    %v757 = vunpack.c.l.bf16 %v205
    %v758 = vunpack.c.l.bf16 %v206
    %v759 = vunpack.c.l.bf16 %v207
    %v760 = vunpack.c.l.bf16 %v208
    %v761 = vunpack.c.l.bf16 %v209
    %v762 = vunpack.c.l.bf16 %v210
    %v763 = vunpack.c.l.bf16 %v211
    %v764 = vunpack.c.l.bf16 %v212
    %v765 = vunpack.c.l.bf16 %v213
    %v766 = vunpack.c.l.bf16 %v214
    %v767 = vunpack.c.l.bf16 %v215
    %v768 = vunpack.c.l.bf16 %v216
    %v769 = vunpack.c.l.bf16 %v217
    %v770 = vunpack.c.l.bf16 %v218
    %v771 = vunpack.c.l.bf16 %v219
    %v772 = vunpack.c.l.bf16 %v220
    %v773 = vunpack.c.l.bf16 %v221
    %v774 = vunpack.c.l.bf16 %v222
    %v775 = vunpack.c.l.bf16 %v223
    %v776 = vunpack.c.l.bf16 %v224
    %v777 = vunpack.c.l.bf16 %v225
    %v778 = vunpack.c.l.bf16 %v226
    %v779 = vunpack.c.l.bf16 %v227
    %v780 = vunpack.c.l.bf16 %v228
    %v781 = vunpack.c.l.bf16 %v229
    %v782 = vunpack.c.l.bf16 %v230
    %v783 = vunpack.c.l.bf16 %v231
    %v784 = vunpack.c.l.bf16 %v232
    %v785 = vunpack.c.l.bf16 %v233
    %v786 = vunpack.c.l.bf16 %v234
    %v787 = vunpack.c.l.bf16 %v235
    %v788 = vunpack.c.l.bf16 %v236
    %v789 = vunpack.c.l.bf16 %v237
    %v790 = vunpack.c.l.bf16 %v238
    %v791 = vunpack.c.l.bf16 %v239
    %v792 = vunpack.c.l.bf16 %v240
    %v793 = vunpack.c.l.bf16 %v241
    %v794 = vunpack.c.l.bf16 %v242
    %v795 = vunpack.c.l.bf16 %v243
    %v796 = vunpack.c.l.bf16 %v244
    %v797 = vunpack.c.l.bf16 %v245
    %v798 = vunpack.c.l.bf16 %v246
    %v799 = vunpack.c.l.bf16 %v247
    %v800 = vunpack.c.l.bf16 %v248
    %v801 = vunpack.c.l.bf16 %v249
    %v802 = vunpack.c.l.bf16 %v250
    %v803 = vunpack.c.l.bf16 %v251
    %v804 = vunpack.c.l.bf16 %v252
    %v805 = vunpack.c.l.bf16 %v253
    %v806 = vunpack.c.l.bf16 %v254
    %v807 = vunpack.c.l.bf16 %v255
    %v808 = vunpack.c.l.bf16 %v256
    %v809 = vunpack.c.l.bf16 %v257
    %v810 = vunpack.c.l.bf16 %v258
    %v811 = vunpack.c.l.bf16 %v259
    %v812 = vunpack.c.l.bf16 %v260
    %v813 = vunpack.c.l.bf16 %v261
    %v814 = vunpack.c.l.bf16 %v262
    %v815 = vunpack.c.l.bf16 %v263
    %v816 = vunpack.c.l.bf16 %v264
    %v817 = vunpack.c.l.bf16 %v265
    %v818 = vunpack.c.l.bf16 %v266
    %v819 = vunpack.c.l.bf16 %v267
    %v820 = vunpack.c.l.bf16 %v268
    %v821 = vunpack.c.l.bf16 %v269
    %v822 = vunpack.c.l.bf16 %v270
    %v823 = vunpack.c.l.bf16 %v271
    %v824 = vunpack.c.l.bf16 %v272
    %v825 = vunpack.c.l.bf16 %v273
    %v826 = vunpack.c.l.bf16 %v274
    %v827 = vunpack.c.l.bf16 %v275
    %v828 = vunpack.c.l.bf16 %v276
    %v829 = vunpack.c.l.bf16 %v277
    %v830 = vunpack.c.l.bf16 %v278
    %v831 = vunpack.c.l.bf16 %v279
    %v832 = vunpack.c.l.bf16 %v280
    %v833 = vunpack.c.l.bf16 %v281
    %v834 = vunpack.c.l.bf16 %v282
    %v835 = vunpack.c.l.bf16 %v283
    %v836 = vunpack.c.l.bf16 %v284
    %v837 = vunpack.c.l.bf16 %v285
    %v838 = vunpack.c.l.bf16 %v286
    %v839 = vunpack.c.l.bf16 %v287
    %v840 = vunpack.c.l.bf16 %v288
    %v841 = vunpack.c.l.bf16 %v289
    %v842 = vunpack.c.l.bf16 %v290
    %v843 = vunpack.c.l.bf16 %v291
    %v844 = vunpack.c.l.bf16 %v292
    %v845 = vunpack.c.l.bf16 %v293
    %v846 = vunpack.c.l.bf16 %v294
    %v847 = vunpack.c.l.bf16 %v295
    %v848 = vunpack.c.l.bf16 %v296
    %v849 = vunpack.c.l.bf16 %v297
    %v850 = vunpack.c.l.bf16 %v298
    %v851 = vunpack.c.l.bf16 %v299
    %v852 = vunpack.c.l.bf16 %v300
    %v853 = vunpack.c.l.bf16 %v301
    %v854 = vunpack.c.l.bf16 %v302
    %v855 = vunpack.c.l.bf16 %v303
    %v856 = vunpack.c.l.bf16 %v304
    %v857 = vunpack.c.l.bf16 %v305
    %v858 = vunpack.c.l.bf16 %v306
    %v859 = vunpack.c.l.bf16 %v307
    %v860 = vunpack.c.l.bf16 %v308
    %v861 = vunpack.c.l.bf16 %v309
    %v862 = vunpack.c.l.bf16 %v310
    %v863 = vunpack.c.l.bf16 %v311
    %v864 = vunpack.c.l.bf16 %v312
    %v865 = vunpack.c.l.bf16 %v313
    %v866 = vunpack.c.l.bf16 %v314
    %v867 = vunpack.c.l.bf16 %v315
    %v868 = vunpack.c.l.bf16 %v316
    %v869 = vunpack.c.l.bf16 %v317
    %v870 = vunpack.c.l.bf16 %v318
    %v871 = vunpack.c.l.bf16 %v319
    %v872 = vunpack.c.l.bf16 %v320
    %v873 = vunpack.c.l.bf16 %v321
    %v874 = vunpack.c.l.bf16 %v322
    %v875 = vunpack.c.l.bf16 %v323
    %v876 = vunpack.c.l.bf16 %v324
    %v877 = vunpack.c.l.bf16 %v325
    %v878 = vunpack.c.l.bf16 %v326
    %v879 = vunpack.c.l.bf16 %v327
    %v880 = vunpack.c.l.bf16 %v328
    %v881 = vunpack.c.l.bf16 %v329
    %v882 = vunpack.c.l.bf16 %v330
    %v883 = vunpack.c.l.bf16 %v331
    %v884 = vunpack.c.l.bf16 %v332
    %v885 = vunpack.c.l.bf16 %v333
    %v886 = vunpack.c.l.bf16 %v334
    %v887 = vunpack.c.l.bf16 %v335
    %v888 = vunpack.c.l.bf16 %v336
    %v889 = vunpack.c.l.bf16 %v337
    %v890 = vunpack.c.l.bf16 %v338
    %v891 = vunpack.c.l.bf16 %v339
    %v892 = vunpack.c.l.bf16 %v340
    %v893 = vunpack.c.l.bf16 %v341
    %v894 = vunpack.c.l.bf16 %v342
    %v895 = vunpack.c.l.bf16 %v343
    %v896 = vunpack.c.l.bf16 %v344
    %v897 = vunpack.c.l.bf16 %v345
    %v898 = vunpack.c.l.bf16 %v346
    %v899 = vunpack.c.l.bf16 %v347
    %v900 = vunpack.c.l.bf16 %v348
    %v901 = vunpack.c.l.bf16 %v349
    %v902 = vunpack.c.l.bf16 %v350
    %v903 = vunpack.c.l.bf16 %v351
    %v904 = vunpack.c.l.bf16 %v352
    %v905 = vunpack.c.l.bf16 %v353
    %v906 = vunpack.c.l.bf16 %v354
    %v907 = vunpack.c.l.bf16 %v355
    %v908 = vunpack.c.l.bf16 %v356
    %v909 = vunpack.c.l.bf16 %v357
    %v910 = vunpack.c.l.bf16 %v358
    %v911 = vunpack.c.l.bf16 %v359
    %v912 = vunpack.c.l.bf16 %v360
    %v913 = vunpack.c.l.bf16 %v361
    %v914 = vunpack.c.l.bf16 %v362
    %v915 = vunpack.c.l.bf16 %v363
    %v916 = vunpack.c.l.bf16 %v364
    %v917 = vunpack.c.l.bf16 %v365
    %v918 = vunpack.c.l.bf16 %v366
    %v919 = vunpack.c.l.bf16 %v367
    %v920 = vunpack.c.l.bf16 %v368
    %v921 = vunpack.c.l.bf16 %v369
    %v922 = vunpack.c.l.bf16 %v370
    %v923 = vunpack.c.l.bf16 %v371
    %v924 = vunpack.c.l.bf16 %v372
    %v925 = vunpack.c.l.bf16 %v373
    %v926 = vunpack.c.l.bf16 %v374
    %v927 = vunpack.c.l.bf16 %v375
    %v928 = vunpack.c.l.bf16 %v376
    %v929 = vunpack.c.l.bf16 %v377
    %v930 = vunpack.c.l.bf16 %v378
    %v931 = vunpack.c.l.bf16 %v379
    %v932 = vunpack.c.l.bf16 %v380
    %v933 = vunpack.c.l.bf16 %v381
    %v934 = vunpack.c.l.bf16 %v382
    %v935 = vunpack.c.l.bf16 %v383
    %v936 = vunpack.c.l.bf16 %v384
    %v937 = vunpack.c.l.bf16 %v385
    %v938 = vunpack.c.l.bf16 %v386
    %v939 = vunpack.c.l.bf16 %v387
    %v940 = vunpack.c.l.bf16 %v388
    %v941 = vunpack.c.l.bf16 %v389
    %v942 = vunpack.c.l.bf16 %v390
    %v943 = vunpack.c.l.bf16 %v391
    %v944 = vunpack.c.l.bf16 %v392
    %v945 = vunpack.c.l.bf16 %v393
    %v946 = vunpack.c.l.bf16 %v394
    %v947 = vunpack.c.l.bf16 %v395
    %v948 = vunpack.c.l.bf16 %v396
    %v949 = vunpack.c.l.bf16 %v397
    %v950 = vunpack.c.l.bf16 %v398
    %v951 = vunpack.c.l.bf16 %v399
    %v952 = vunpack.c.l.bf16 %v400
    %v953 = vunpack.c.l.bf16 %v401
    %v954 = vunpack.c.l.bf16 %v402
    %v955 = vunpack.c.l.bf16 %v403
    %v956 = vunpack.c.l.bf16 %v404
    %v957 = vunpack.c.l.bf16 %v405
    %v958 = vunpack.c.l.bf16 %v406
    %v959 = vunpack.c.l.bf16 %v407
    %v960 = vunpack.c.l.bf16 %v408
    %v961 = vunpack.c.l.bf16 %v409
    %v962 = vunpack.c.l.bf16 %v410
    %v963 = vunpack.c.l.bf16 %v411
    %v964 = vunpack.c.l.bf16 %v412
    %v965 = vunpack.c.l.bf16 %v413
    %v966 = vunpack.c.l.bf16 %v414
    %v967 = vunpack.c.l.bf16 %v415
    %v968 = vunpack.c.l.bf16 %v416
    %v969 = vunpack.c.l.bf16 %v417
    %v970 = vunpack.c.l.bf16 %v418
    %v971 = vunpack.c.l.bf16 %v419
    %v972 = vunpack.c.l.bf16 %v420
    %v973 = vunpack.c.l.bf16 %v421
    %v974 = vunpack.c.l.bf16 %v422
    %v975 = vunpack.c.l.bf16 %v423
    %v976 = vunpack.c.l.bf16 %v424
    %v977 = vunpack.c.l.bf16 %v425
    %v978 = vunpack.c.l.bf16 %v426
    %v979 = vunpack.c.l.bf16 %v427
    %v980 = vunpack.c.l.bf16 %v428
    %v981 = vunpack.c.l.bf16 %v429
    %v982 = vunpack.c.l.bf16 %v430
    %v983 = vunpack.c.l.bf16 %v431
    %v984 = vunpack.c.l.bf16 %v432
    %v985 = vunpack.c.l.bf16 %v433
    %v986 = vunpack.c.l.bf16 %v434
    %v987 = vunpack.c.l.bf16 %v435
    %v988 = vunpack.c.l.bf16 %v436
    %v989 = vunpack.c.l.bf16 %v437
    %v990 = vunpack.c.l.bf16 %v438
    %v991 = vunpack.c.l.bf16 %v439
    %v992 = vunpack.c.l.bf16 %v440
    %v993 = vunpack.c.l.bf16 %v441
    %v994 = vunpack.c.l.bf16 %v442
    %v995 = vunpack.c.l.bf16 %v443
    %v996 = vunpack.c.l.bf16 %v444
    %v997 = vunpack.c.l.bf16 %v445
    %v998 = vunpack.c.l.bf16 %v446
    %v999 = vunpack.c.l.bf16 %v447
    %v1000 = vunpack.c.l.bf16 %v448
    %v1001 = vunpack.c.l.bf16 %v449
    %v1002 = vunpack.c.l.bf16 %v450
    %v1003 = vunpack.c.l.bf16 %v451
    %v1004 = vunpack.c.l.bf16 %v452
    %v1005 = vunpack.c.l.bf16 %v453
    %v1006 = vunpack.c.l.bf16 %v454
    %v1007 = vunpack.c.l.bf16 %v455
    %v1008 = vunpack.c.l.bf16 %v456
    %v1009 = vunpack.c.l.bf16 %v457
    %v1010 = vunpack.c.l.bf16 %v458
    %v1011 = vunpack.c.l.bf16 %v459
    %v1012 = vunpack.c.l.bf16 %v460
    %v1013 = vunpack.c.l.bf16 %v461
    %v1014 = vunpack.c.l.bf16 %v462
    %v1015 = vunpack.c.l.bf16 %v463
    %v1016 = vunpack.c.l.bf16 %v464
    %v1017 = vunpack.c.l.bf16 %v465
    %v1018 = vunpack.c.l.bf16 %v466
    %v1019 = vunpack.c.l.bf16 %v467
    %v1020 = vunpack.c.l.bf16 %v468
    %v1021 = vunpack.c.l.bf16 %v469
    %v1022 = vunpack.c.l.bf16 %v470
    %v1023 = vunpack.c.l.bf16 %v471
    %v1024 = vunpack.c.l.bf16 %v472
    %v1025 = vunpack.c.l.bf16 %v473
    %v1026 = vunpack.c.l.bf16 %v474
    %v1027 = vunpack.c.l.bf16 %v475
    %v1028 = vunpack.c.l.bf16 %v476
    %v1029 = vunpack.c.l.bf16 %v477
    %v1030 = vunpack.c.l.bf16 %v478
    %v1031 = vunpack.c.l.bf16 %v479
    %v1032 = vunpack.c.l.bf16 %v480
    %v1033 = vunpack.c.l.bf16 %v481
    %v1034 = vunpack.c.l.bf16 %v482
    %v1035 = vunpack.c.l.bf16 %v483
    %v1036 = vunpack.c.l.bf16 %v484
    %v1037 = vunpack.c.l.bf16 %v485
    %v1038 = vunpack.c.l.bf16 %v486
    %v1039 = vunpack.c.l.bf16 %v487
    %v1040 = vunpack.c.l.bf16 %v488
    %v1041 = vunpack.c.l.bf16 %v489
    %v1042 = vunpack.c.l.bf16 %v490
    %v1043 = vunpack.c.l.bf16 %v491
    %v1044 = vunpack.c.l.bf16 %v492
    %v1045 = vunpack.c.l.bf16 %v493
    %v1046 = vunpack.c.l.bf16 %v494
    %v1047 = vunpack.c.l.bf16 %v495
    %v1048 = vunpack.c.l.bf16 %v496
    %v1049 = vunpack.c.l.bf16 %v497
    %v1050 = vunpack.c.l.bf16 %v498
    %v1051 = vunpack.c.l.bf16 %v499
    %v1052 = vunpack.c.l.bf16 %v500
    %v1053 = vunpack.c.l.bf16 %v501
    %v1054 = vunpack.c.l.bf16 %v502
    %v1055 = vunpack.c.l.bf16 %v503
    %v1056 = vunpack.c.l.bf16 %v504
    %v1057 = vunpack.c.l.bf16 %v505
    %v1058 = vunpack.c.l.bf16 %v506
    %v1059 = vunpack.c.l.bf16 %v507
    %v1060 = vunpack.c.l.bf16 %v508
    %v1061 = vunpack.c.l.bf16 %v509
    %v1062 = vunpack.c.l.bf16 %v510
    %v1063 = vunpack.c.l.bf16 %v511
    %v1064 = vunpack.c.l.bf16 %v512
    %v1065 = vunpack.c.l.bf16 %v513
    %v1066 = vunpack.c.l.bf16 %v514
    %v1067 = vunpack.c.l.bf16 %v515
    %v1068 = vunpack.c.l.bf16 %v516
    %v1069 = vunpack.c.l.bf16 %v517
    %v1070 = vunpack.c.l.bf16 %v518
    %v1071 = vunpack.c.l.bf16 %v519
    %v1072 = vunpack.c.l.bf16 %v520
    %v1073 = vunpack.c.l.bf16 %v521
    %v1074 = vunpack.c.l.bf16 %v522
    %v1075 = vunpack.c.l.bf16 %v523
    %v1076 = vunpack.c.l.bf16 %v524
    %v1077 = vunpack.c.l.bf16 %v525
    %v1078 = vunpack.c.l.bf16 %v526
    %v1079 = vunpack.c.l.bf16 %v527
    %v1080 = vunpack.c.l.bf16 %v528
    %v1081 = vunpack.c.l.bf16 %v529
    %v1082 = vunpack.c.l.bf16 %v530
    %v1083 = vunpack.c.l.bf16 %v531
    %v1084 = vunpack.c.l.bf16 %v532
    %v1085 = vunpack.c.l.bf16 %v533
    %v1086 = vunpack.c.l.bf16 %v534
    %v1087 = vunpack.c.l.bf16 %v535
    %v1088 = vunpack.c.l.bf16 %v536
    %v1089 = vunpack.c.l.bf16 %v537
    %v1090 = vunpack.c.l.bf16 %v538
    %v1091 = vunpack.c.l.bf16 %v539
    %v1092 = vunpack.c.l.bf16 %v540
    %v1093 = vunpack.c.l.bf16 %v541
    %v1094 = vunpack.c.l.bf16 %v542
    %v1095 = vunpack.c.l.bf16 %v543
    %v1096 = vunpack.c.l.bf16 %v544
    %v1097 = vunpack.c.l.bf16 %v545
    %v1098 = vunpack.c.l.bf16 %v546
    %v1099 = vunpack.c.l.bf16 %v547
    %v1100 = vunpack.c.l.bf16 %v548
    %v1101 = vunpack.c.l.bf16 %v549
    %v1102 = vunpack.c.l.bf16 %v550
    %v1103 = vunpack.c.l.bf16 %v551
    %v1104 = vunpack.c.l.bf16 %v552
    %v1105 = vunpack.c.l.bf16 %v553
    %v1106 = vunpack.c.l.bf16 %v554
    %v1107 = vunpack.c.l.bf16 %v555
    %v1108 = vunpack.c.l.bf16 %v556
    %v1109 = vunpack.c.l.bf16 %v557
    %v1110 = vunpack.c.l.bf16 %v558
    %v1111 = vunpack.c.l.bf16 %v559
    %v1112 = vunpack.c.l.bf16 %v560
    %v1113 = vunpack.c.l.bf16 %v561
    %v1114 = vunpack.c.l.bf16 %v562
    %v1115 = vunpack.c.l.bf16 %v563
    %v1116 = vunpack.c.l.bf16 %v564
    %v1117 = vunpack.c.l.bf16 %v565
    %v1118 = vunpack.c.l.bf16 %v566
    %vm1119 = vcmask 400384
    %v1120 = vsel %vm1119, %v567, 0.0
    %1121 = vadd.xlane.f32.xlu0 %v1120
    %v1122 = vpop.xlane.xlu0 %1121
    %v1123 = vsel %vm1119, %v568, 0.0
    %1124 = vadd.xlane.f32.xlu0 %v1123
    %v1125 = vpop.xlane.xlu0 %1124
    %v1126 = vsel %vm1119, %v569, 0.0
    %1127 = vadd.xlane.f32.xlu0 %v1126
    %v1128 = vpop.xlane.xlu0 %1127
    %v1129 = vsel %vm1119, %v570, 0.0
    %1130 = vadd.xlane.f32.xlu0 %v1129
    %v1131 = vpop.xlane.xlu0 %1130
    %v1132 = vsel %vm1119, %v571, 0.0
    %1133 = vadd.xlane.f32.xlu0 %v1132
    %v1134 = vpop.xlane.xlu0 %1133
    %v1135 = vsel %vm1119, %v572, 0.0
    %1136 = vadd.xlane.f32.xlu0 %v1135
    %v1137 = vpop.xlane.xlu0 %1136
    %v1138 = vsel %vm1119, %v573, 0.0
    %1139 = vadd.xlane.f32.xlu0 %v1138
    %v1140 = vpop.xlane.xlu0 %1139
    %v1141 = vsel %vm1119, %v574, 0.0
    %1142 = vadd.xlane.f32.xlu0 %v1141
    %v1143 = vpop.xlane.xlu0 %1142
    %v1144 = vsel %vm1119, %v575, 0.0
    %1145 = vadd.xlane.f32.xlu0 %v1144
    %v1146 = vpop.xlane.xlu0 %1145
    %v1147 = vsel %vm1119, %v576, 0.0
    %1148 = vadd.xlane.f32.xlu0 %v1147
    %v1149 = vpop.xlane.xlu0 %1148
    %v1150 = vsel %vm1119, %v577, 0.0
    %1151 = vadd.xlane.f32.xlu0 %v1150
    %v1152 = vpop.xlane.xlu0 %1151
    %v1153 = vsel %vm1119, %v578, 0.0
    %1154 = vadd.xlane.f32.xlu0 %v1153
    %v1155 = vpop.xlane.xlu0 %1154
    %v1156 = vsel %vm1119, %v579, 0.0
    %1157 = vadd.xlane.f32.xlu0 %v1156
    %v1158 = vpop.xlane.xlu0 %1157
    %v1159 = vsel %vm1119, %v580, 0.0
    %1160 = vadd.xlane.f32.xlu0 %v1159
    %v1161 = vpop.xlane.xlu0 %1160
    %v1162 = vsel %vm1119, %v581, 0.0
    %1163 = vadd.xlane.f32.xlu0 %v1162
    %v1164 = vpop.xlane.xlu0 %1163
    %v1165 = vsel %vm1119, %v582, 0.0
    %1166 = vadd.xlane.f32.xlu0 %v1165
    %v1167 = vpop.xlane.xlu0 %1166
    %v1168 = vsel %vm1119, %v583, 0.0
    %1169 = vadd.xlane.f32.xlu0 %v1168
    %v1170 = vpop.xlane.xlu0 %1169
    %v1171 = vsel %vm1119, %v584, 0.0
    %1172 = vadd.xlane.f32.xlu0 %v1171
    %v1173 = vpop.xlane.xlu0 %1172
    %v1174 = vsel %vm1119, %v585, 0.0
    %1175 = vadd.xlane.f32.xlu0 %v1174
    %v1176 = vpop.xlane.xlu0 %1175
    %v1177 = vsel %vm1119, %v586, 0.0
    %1178 = vadd.xlane.f32.xlu0 %v1177
    %v1179 = vpop.xlane.xlu0 %1178
    %v1180 = vsel %vm1119, %v587, 0.0
    %1181 = vadd.xlane.f32.xlu0 %v1180
    %v1182 = vpop.xlane.xlu0 %1181
    %v1183 = vsel %vm1119, %v588, 0.0
    %1184 = vadd.xlane.f32.xlu0 %v1183
    %v1185 = vpop.xlane.xlu0 %1184
    %v1186 = vsel %vm1119, %v589, 0.0
    %1187 = vadd.xlane.f32.xlu0 %v1186
    %v1188 = vpop.xlane.xlu0 %1187
    %v1189 = vsel %vm1119, %v590, 0.0
    %1190 = vadd.xlane.f32.xlu0 %v1189
    %v1191 = vpop.xlane.xlu0 %1190
    %v1192 = vsel %vm1119, %v591, 0.0
    %1193 = vadd.xlane.f32.xlu0 %v1192
    %v1194 = vpop.xlane.xlu0 %1193
    %v1195 = vsel %vm1119, %v592, 0.0
    %1196 = vadd.xlane.f32.xlu0 %v1195
    %v1197 = vpop.xlane.xlu0 %1196
    %v1198 = vsel %vm1119, %v593, 0.0
    %1199 = vadd.xlane.f32.xlu0 %v1198
    %v1200 = vpop.xlane.xlu0 %1199
    %v1201 = vsel %vm1119, %v594, 0.0
    %1202 = vadd.xlane.f32.xlu0 %v1201
    %v1203 = vpop.xlane.xlu0 %1202
    %v1204 = vsel %vm1119, %v595, 0.0
    %1205 = vadd.xlane.f32.xlu0 %v1204
    %v1206 = vpop.xlane.xlu0 %1205
    %v1207 = vsel %vm1119, %v596, 0.0
    %1208 = vadd.xlane.f32.xlu0 %v1207
    %v1209 = vpop.xlane.xlu0 %1208
    %v1210 = vsel %vm1119, %v597, 0.0
    %1211 = vadd.xlane.f32.xlu0 %v1210
    %v1212 = vpop.xlane.xlu0 %1211
    %v1213 = vsel %vm1119, %v598, 0.0
    %1214 = vadd.xlane.f32.xlu0 %v1213
    %v1215 = vpop.xlane.xlu0 %1214
    %v1216 = vsel %vm1119, %v599, 0.0
    %1217 = vadd.xlane.f32.xlu0 %v1216
    %v1218 = vpop.xlane.xlu0 %1217
    %v1219 = vsel %vm1119, %v600, 0.0
    %1220 = vadd.xlane.f32.xlu0 %v1219
    %v1221 = vpop.xlane.xlu0 %1220
    %v1222 = vsel %vm1119, %v601, 0.0
    %1223 = vadd.xlane.f32.xlu0 %v1222
    %v1224 = vpop.xlane.xlu0 %1223
    %v1225 = vsel %vm1119, %v602, 0.0
    %1226 = vadd.xlane.f32.xlu0 %v1225
    %v1227 = vpop.xlane.xlu0 %1226
    %v1228 = vsel %vm1119, %v603, 0.0
    %1229 = vadd.xlane.f32.xlu0 %v1228
    %v1230 = vpop.xlane.xlu0 %1229
    %v1231 = vsel %vm1119, %v604, 0.0
    %1232 = vadd.xlane.f32.xlu0 %v1231
    %v1233 = vpop.xlane.xlu0 %1232
    %v1234 = vsel %vm1119, %v605, 0.0
    %1235 = vadd.xlane.f32.xlu0 %v1234
    %v1236 = vpop.xlane.xlu0 %1235
    %v1237 = vsel %vm1119, %v606, 0.0
    %1238 = vadd.xlane.f32.xlu0 %v1237
    %v1239 = vpop.xlane.xlu0 %1238
    %v1240 = vsel %vm1119, %v607, 0.0
    %1241 = vadd.xlane.f32.xlu0 %v1240
    %v1242 = vpop.xlane.xlu0 %1241
    %v1243 = vsel %vm1119, %v608, 0.0
    %1244 = vadd.xlane.f32.xlu0 %v1243
    %v1245 = vpop.xlane.xlu0 %1244
    %v1246 = vsel %vm1119, %v609, 0.0
    %1247 = vadd.xlane.f32.xlu0 %v1246
    %v1248 = vpop.xlane.xlu0 %1247
    %v1249 = vsel %vm1119, %v610, 0.0
    %1250 = vadd.xlane.f32.xlu0 %v1249
    %v1251 = vpop.xlane.xlu0 %1250
    %v1252 = vsel %vm1119, %v611, 0.0
    %1253 = vadd.xlane.f32.xlu0 %v1252
    %v1254 = vpop.xlane.xlu0 %1253
    %v1255 = vsel %vm1119, %v612, 0.0
    %1256 = vadd.xlane.f32.xlu0 %v1255
    %v1257 = vpop.xlane.xlu0 %1256
    %v1258 = vsel %vm1119, %v613, 0.0
    %1259 = vadd.xlane.f32.xlu0 %v1258
    %v1260 = vpop.xlane.xlu0 %1259
    %v1261 = vsel %vm1119, %v614, 0.0
    %1262 = vadd.xlane.f32.xlu0 %v1261
    %v1263 = vpop.xlane.xlu0 %1262
    %v1264 = vsel %vm1119, %v615, 0.0
    %1265 = vadd.xlane.f32.xlu0 %v1264
    %v1266 = vpop.xlane.xlu0 %1265
    %v1267 = vsel %vm1119, %v616, 0.0
    %1268 = vadd.xlane.f32.xlu0 %v1267
    %v1269 = vpop.xlane.xlu0 %1268
    %v1270 = vsel %vm1119, %v617, 0.0
    %1271 = vadd.xlane.f32.xlu0 %v1270
    %v1272 = vpop.xlane.xlu0 %1271
    %v1273 = vsel %vm1119, %v618, 0.0
    %1274 = vadd.xlane.f32.xlu0 %v1273
    %v1275 = vpop.xlane.xlu0 %1274
    %v1276 = vsel %vm1119, %v619, 0.0
    %1277 = vadd.xlane.f32.xlu0 %v1276
    %v1278 = vpop.xlane.xlu0 %1277
    %v1279 = vsel %vm1119, %v620, 0.0
    %1280 = vadd.xlane.f32.xlu0 %v1279
    %v1281 = vpop.xlane.xlu0 %1280
    %v1282 = vsel %vm1119, %v621, 0.0
    %1283 = vadd.xlane.f32.xlu0 %v1282
    %v1284 = vpop.xlane.xlu0 %1283
    %v1285 = vsel %vm1119, %v622, 0.0
    %1286 = vadd.xlane.f32.xlu0 %v1285
    %v1287 = vpop.xlane.xlu0 %1286
    %v1288 = vsel %vm1119, %v623, 0.0
    %1289 = vadd.xlane.f32.xlu0 %v1288
    %v1290 = vpop.xlane.xlu0 %1289
    %v1291 = vsel %vm1119, %v624, 0.0
    %1292 = vadd.xlane.f32.xlu0 %v1291
    %v1293 = vpop.xlane.xlu0 %1292
    %v1294 = vsel %vm1119, %v625, 0.0
    %1295 = vadd.xlane.f32.xlu0 %v1294
    %v1296 = vpop.xlane.xlu0 %1295
    %v1297 = vsel %vm1119, %v626, 0.0
    %1298 = vadd.xlane.f32.xlu0 %v1297
    %v1299 = vpop.xlane.xlu0 %1298
    %v1300 = vsel %vm1119, %v627, 0.0
    %1301 = vadd.xlane.f32.xlu0 %v1300
    %v1302 = vpop.xlane.xlu0 %1301
    %v1303 = vsel %vm1119, %v628, 0.0
    %1304 = vadd.xlane.f32.xlu0 %v1303
    %v1305 = vpop.xlane.xlu0 %1304
    %v1306 = vsel %vm1119, %v629, 0.0
    %1307 = vadd.xlane.f32.xlu0 %v1306
    %v1308 = vpop.xlane.xlu0 %1307
    %v1309 = vsel %vm1119, %v630, 0.0
    %1310 = vadd.xlane.f32.xlu0 %v1309
    %v1311 = vpop.xlane.xlu0 %1310
    %v1312 = vsel %vm1119, %v631, 0.0
    %1313 = vadd.xlane.f32.xlu0 %v1312
    %v1314 = vpop.xlane.xlu0 %1313
    %v1315 = vsel %vm1119, %v632, 0.0
    %1316 = vadd.xlane.f32.xlu0 %v1315
    %v1317 = vpop.xlane.xlu0 %1316
    %v1318 = vsel %vm1119, %v633, 0.0
    %1319 = vadd.xlane.f32.xlu0 %v1318
    %v1320 = vpop.xlane.xlu0 %1319
    %v1321 = vsel %vm1119, %v634, 0.0
    %1322 = vadd.xlane.f32.xlu0 %v1321
    %v1323 = vpop.xlane.xlu0 %1322
    %v1324 = vsel %vm1119, %v635, 0.0
    %1325 = vadd.xlane.f32.xlu0 %v1324
    %v1326 = vpop.xlane.xlu0 %1325
    %v1327 = vsel %vm1119, %v636, 0.0
    %1328 = vadd.xlane.f32.xlu0 %v1327
    %v1329 = vpop.xlane.xlu0 %1328
    %v1330 = vsel %vm1119, %v637, 0.0
    %1331 = vadd.xlane.f32.xlu0 %v1330
    %v1332 = vpop.xlane.xlu0 %1331
    %v1333 = vsel %vm1119, %v638, 0.0
    %1334 = vadd.xlane.f32.xlu0 %v1333
    %v1335 = vpop.xlane.xlu0 %1334
    %v1336 = vsel %vm1119, %v639, 0.0
    %1337 = vadd.xlane.f32.xlu0 %v1336
    %v1338 = vpop.xlane.xlu0 %1337
    %v1339 = vsel %vm1119, %v640, 0.0
    %1340 = vadd.xlane.f32.xlu0 %v1339
    %v1341 = vpop.xlane.xlu0 %1340
    %v1342 = vsel %vm1119, %v641, 0.0
    %1343 = vadd.xlane.f32.xlu0 %v1342
    %v1344 = vpop.xlane.xlu0 %1343
    %v1345 = vsel %vm1119, %v642, 0.0
    %1346 = vadd.xlane.f32.xlu0 %v1345
    %v1347 = vpop.xlane.xlu0 %1346
    %v1348 = vsel %vm1119, %v643, 0.0
    %1349 = vadd.xlane.f32.xlu0 %v1348
    %v1350 = vpop.xlane.xlu0 %1349
    %v1351 = vsel %vm1119, %v644, 0.0
    %1352 = vadd.xlane.f32.xlu0 %v1351
    %v1353 = vpop.xlane.xlu0 %1352
    %v1354 = vsel %vm1119, %v645, 0.0
    %1355 = vadd.xlane.f32.xlu0 %v1354
    %v1356 = vpop.xlane.xlu0 %1355
    %v1357 = vsel %vm1119, %v646, 0.0
    %1358 = vadd.xlane.f32.xlu0 %v1357
    %v1359 = vpop.xlane.xlu0 %1358
    %v1360 = vsel %vm1119, %v647, 0.0
    %1361 = vadd.xlane.f32.xlu0 %v1360
    %v1362 = vpop.xlane.xlu0 %1361
    %v1363 = vsel %vm1119, %v648, 0.0
    %1364 = vadd.xlane.f32.xlu0 %v1363
    %v1365 = vpop.xlane.xlu0 %1364
    %v1366 = vsel %vm1119, %v649, 0.0
    %1367 = vadd.xlane.f32.xlu0 %v1366
    %v1368 = vpop.xlane.xlu0 %1367
    %v1369 = vsel %vm1119, %v650, 0.0
    %1370 = vadd.xlane.f32.xlu0 %v1369
    %v1371 = vpop.xlane.xlu0 %1370
    %v1372 = vsel %vm1119, %v651, 0.0
    %1373 = vadd.xlane.f32.xlu0 %v1372
    %v1374 = vpop.xlane.xlu0 %1373
    %v1375 = vsel %vm1119, %v652, 0.0
    %1376 = vadd.xlane.f32.xlu0 %v1375
    %v1377 = vpop.xlane.xlu0 %1376
    %v1378 = vsel %vm1119, %v653, 0.0
    %1379 = vadd.xlane.f32.xlu0 %v1378
    %v1380 = vpop.xlane.xlu0 %1379
    %v1381 = vsel %vm1119, %v654, 0.0
    %1382 = vadd.xlane.f32.xlu0 %v1381
    %v1383 = vpop.xlane.xlu0 %1382
    %v1384 = vsel %vm1119, %v655, 0.0
    %1385 = vadd.xlane.f32.xlu0 %v1384
    %v1386 = vpop.xlane.xlu0 %1385
    %v1387 = vsel %vm1119, %v656, 0.0
    %1388 = vadd.xlane.f32.xlu0 %v1387
    %v1389 = vpop.xlane.xlu0 %1388
    %v1390 = vsel %vm1119, %v657, 0.0
    %1391 = vadd.xlane.f32.xlu0 %v1390
    %v1392 = vpop.xlane.xlu0 %1391
    %v1393 = vsel %vm1119, %v658, 0.0
    %1394 = vadd.xlane.f32.xlu0 %v1393
    %v1395 = vpop.xlane.xlu0 %1394
    %v1396 = vsel %vm1119, %v659, 0.0
    %1397 = vadd.xlane.f32.xlu0 %v1396
    %v1398 = vpop.xlane.xlu0 %1397
    %v1399 = vsel %vm1119, %v660, 0.0
    %1400 = vadd.xlane.f32.xlu0 %v1399
    %v1401 = vpop.xlane.xlu0 %1400
    %v1402 = vsel %vm1119, %v661, 0.0
    %1403 = vadd.xlane.f32.xlu0 %v1402
    %v1404 = vpop.xlane.xlu0 %1403
    %v1405 = vsel %vm1119, %v662, 0.0
    %1406 = vadd.xlane.f32.xlu0 %v1405
    %v1407 = vpop.xlane.xlu0 %1406
    %v1408 = vsel %vm1119, %v663, 0.0
    %1409 = vadd.xlane.f32.xlu0 %v1408
    %v1410 = vpop.xlane.xlu0 %1409
    %v1411 = vsel %vm1119, %v664, 0.0
    %1412 = vadd.xlane.f32.xlu0 %v1411
    %v1413 = vpop.xlane.xlu0 %1412
    %v1414 = vsel %vm1119, %v665, 0.0
    %1415 = vadd.xlane.f32.xlu0 %v1414
    %v1416 = vpop.xlane.xlu0 %1415
    %v1417 = vsel %vm1119, %v666, 0.0
    %1418 = vadd.xlane.f32.xlu0 %v1417
    %v1419 = vpop.xlane.xlu0 %1418
    %v1420 = vsel %vm1119, %v667, 0.0
    %1421 = vadd.xlane.f32.xlu0 %v1420
    %v1422 = vpop.xlane.xlu0 %1421
    %v1423 = vsel %vm1119, %v668, 0.0
    %1424 = vadd.xlane.f32.xlu0 %v1423
    %v1425 = vpop.xlane.xlu0 %1424
    %v1426 = vsel %vm1119, %v669, 0.0
    %1427 = vadd.xlane.f32.xlu0 %v1426
    %v1428 = vpop.xlane.xlu0 %1427
    %v1429 = vsel %vm1119, %v670, 0.0
    %1430 = vadd.xlane.f32.xlu0 %v1429
    %v1431 = vpop.xlane.xlu0 %1430
    %v1432 = vsel %vm1119, %v671, 0.0
    %1433 = vadd.xlane.f32.xlu0 %v1432
    %v1434 = vpop.xlane.xlu0 %1433
    %v1435 = vsel %vm1119, %v672, 0.0
    %1436 = vadd.xlane.f32.xlu0 %v1435
    %v1437 = vpop.xlane.xlu0 %1436
    %v1438 = vsel %vm1119, %v673, 0.0
    %1439 = vadd.xlane.f32.xlu0 %v1438
    %v1440 = vpop.xlane.xlu0 %1439
    %v1441 = vsel %vm1119, %v674, 0.0
    %1442 = vadd.xlane.f32.xlu0 %v1441
    %v1443 = vpop.xlane.xlu0 %1442
    %v1444 = vsel %vm1119, %v675, 0.0
    %1445 = vadd.xlane.f32.xlu0 %v1444
    %v1446 = vpop.xlane.xlu0 %1445
    %v1447 = vsel %vm1119, %v676, 0.0
    %1448 = vadd.xlane.f32.xlu0 %v1447
    %v1449 = vpop.xlane.xlu0 %1448
    %v1450 = vsel %vm1119, %v677, 0.0
    %1451 = vadd.xlane.f32.xlu0 %v1450
    %v1452 = vpop.xlane.xlu0 %1451
    %v1453 = vsel %vm1119, %v678, 0.0
    %1454 = vadd.xlane.f32.xlu0 %v1453
    %v1455 = vpop.xlane.xlu0 %1454
    %v1456 = vsel %vm1119, %v679, 0.0
    %1457 = vadd.xlane.f32.xlu0 %v1456
    %v1458 = vpop.xlane.xlu0 %1457
    %v1459 = vsel %vm1119, %v680, 0.0
    %1460 = vadd.xlane.f32.xlu0 %v1459
    %v1461 = vpop.xlane.xlu0 %1460
    %v1462 = vsel %vm1119, %v681, 0.0
    %1463 = vadd.xlane.f32.xlu0 %v1462
    %v1464 = vpop.xlane.xlu0 %1463
    %v1465 = vsel %vm1119, %v682, 0.0
    %1466 = vadd.xlane.f32.xlu0 %v1465
    %v1467 = vpop.xlane.xlu0 %1466
    %v1468 = vsel %vm1119, %v683, 0.0
    %1469 = vadd.xlane.f32.xlu0 %v1468
    %v1470 = vpop.xlane.xlu0 %1469
    %v1471 = vsel %vm1119, %v684, 0.0
    %1472 = vadd.xlane.f32.xlu0 %v1471
    %v1473 = vpop.xlane.xlu0 %1472
    %v1474 = vsel %vm1119, %v685, 0.0
    %1475 = vadd.xlane.f32.xlu0 %v1474
    %v1476 = vpop.xlane.xlu0 %1475
    %v1477 = vsel %vm1119, %v686, 0.0
    %1478 = vadd.xlane.f32.xlu0 %v1477
    %v1479 = vpop.xlane.xlu0 %1478
    %v1480 = vsel %vm1119, %v687, 0.0
    %1481 = vadd.xlane.f32.xlu0 %v1480
    %v1482 = vpop.xlane.xlu0 %1481
    %v1483 = vsel %vm1119, %v688, 0.0
    %1484 = vadd.xlane.f32.xlu0 %v1483
    %v1485 = vpop.xlane.xlu0 %1484
    %v1486 = vsel %vm1119, %v689, 0.0
    %1487 = vadd.xlane.f32.xlu0 %v1486
    %v1488 = vpop.xlane.xlu0 %1487
    %v1489 = vsel %vm1119, %v690, 0.0
    %1490 = vadd.xlane.f32.xlu0 %v1489
    %v1491 = vpop.xlane.xlu0 %1490
    %v1492 = vsel %vm1119, %v691, 0.0
    %1493 = vadd.xlane.f32.xlu0 %v1492
    %v1494 = vpop.xlane.xlu0 %1493
    %v1495 = vsel %vm1119, %v692, 0.0
    %1496 = vadd.xlane.f32.xlu0 %v1495
    %v1497 = vpop.xlane.xlu0 %1496
    %v1498 = vsel %vm1119, %v693, 0.0
    %1499 = vadd.xlane.f32.xlu0 %v1498
    %v1500 = vpop.xlane.xlu0 %1499
    %v1501 = vsel %vm1119, %v694, 0.0
    %1502 = vadd.xlane.f32.xlu0 %v1501
    %v1503 = vpop.xlane.xlu0 %1502
    %v1504 = vsel %vm1119, %v695, 0.0
    %1505 = vadd.xlane.f32.xlu0 %v1504
    %v1506 = vpop.xlane.xlu0 %1505
    %v1507 = vsel %vm1119, %v696, 0.0
    %1508 = vadd.xlane.f32.xlu0 %v1507
    %v1509 = vpop.xlane.xlu0 %1508
    %v1510 = vsel %vm1119, %v697, 0.0
    %1511 = vadd.xlane.f32.xlu0 %v1510
    %v1512 = vpop.xlane.xlu0 %1511
    %v1513 = vsel %vm1119, %v698, 0.0
    %1514 = vadd.xlane.f32.xlu0 %v1513
    %v1515 = vpop.xlane.xlu0 %1514
    %v1516 = vsel %vm1119, %v699, 0.0
    %1517 = vadd.xlane.f32.xlu0 %v1516
    %v1518 = vpop.xlane.xlu0 %1517
    %v1519 = vsel %vm1119, %v700, 0.0
    %1520 = vadd.xlane.f32.xlu0 %v1519
    %v1521 = vpop.xlane.xlu0 %1520
    %v1522 = vsel %vm1119, %v701, 0.0
    %1523 = vadd.xlane.f32.xlu0 %v1522
    %v1524 = vpop.xlane.xlu0 %1523
    %v1525 = vsel %vm1119, %v702, 0.0
    %1526 = vadd.xlane.f32.xlu0 %v1525
    %v1527 = vpop.xlane.xlu0 %1526
    %v1528 = vsel %vm1119, %v703, 0.0
    %1529 = vadd.xlane.f32.xlu0 %v1528
    %v1530 = vpop.xlane.xlu0 %1529
    %v1531 = vsel %vm1119, %v704, 0.0
    %1532 = vadd.xlane.f32.xlu0 %v1531
    %v1533 = vpop.xlane.xlu0 %1532
    %v1534 = vsel %vm1119, %v705, 0.0
    %1535 = vadd.xlane.f32.xlu0 %v1534
    %v1536 = vpop.xlane.xlu0 %1535
    %v1537 = vsel %vm1119, %v706, 0.0
    %1538 = vadd.xlane.f32.xlu0 %v1537
    %v1539 = vpop.xlane.xlu0 %1538
    %v1540 = vsel %vm1119, %v707, 0.0
    %1541 = vadd.xlane.f32.xlu0 %v1540
    %v1542 = vpop.xlane.xlu0 %1541
    %v1543 = vsel %vm1119, %v708, 0.0
    %1544 = vadd.xlane.f32.xlu0 %v1543
    %v1545 = vpop.xlane.xlu0 %1544
    %v1546 = vsel %vm1119, %v709, 0.0
    %1547 = vadd.xlane.f32.xlu0 %v1546
    %v1548 = vpop.xlane.xlu0 %1547
    %v1549 = vsel %vm1119, %v710, 0.0
    %1550 = vadd.xlane.f32.xlu0 %v1549
    %v1551 = vpop.xlane.xlu0 %1550
    %v1552 = vsel %vm1119, %v711, 0.0
    %1553 = vadd.xlane.f32.xlu0 %v1552
    %v1554 = vpop.xlane.xlu0 %1553
    %v1555 = vsel %vm1119, %v712, 0.0
    %1556 = vadd.xlane.f32.xlu0 %v1555
    %v1557 = vpop.xlane.xlu0 %1556
    %v1558 = vsel %vm1119, %v713, 0.0
    %1559 = vadd.xlane.f32.xlu0 %v1558
    %v1560 = vpop.xlane.xlu0 %1559
    %v1561 = vsel %vm1119, %v714, 0.0
    %1562 = vadd.xlane.f32.xlu0 %v1561
    %v1563 = vpop.xlane.xlu0 %1562
    %v1564 = vsel %vm1119, %v715, 0.0
    %1565 = vadd.xlane.f32.xlu0 %v1564
    %v1566 = vpop.xlane.xlu0 %1565
    %v1567 = vsel %vm1119, %v716, 0.0
    %1568 = vadd.xlane.f32.xlu0 %v1567
    %v1569 = vpop.xlane.xlu0 %1568
    %v1570 = vsel %vm1119, %v717, 0.0
    %1571 = vadd.xlane.f32.xlu0 %v1570
    %v1572 = vpop.xlane.xlu0 %1571
    %v1573 = vsel %vm1119, %v718, 0.0
    %1574 = vadd.xlane.f32.xlu0 %v1573
    %v1575 = vpop.xlane.xlu0 %1574
    %v1576 = vsel %vm1119, %v719, 0.0
    %1577 = vadd.xlane.f32.xlu0 %v1576
    %v1578 = vpop.xlane.xlu0 %1577
    %v1579 = vsel %vm1119, %v720, 0.0
    %1580 = vadd.xlane.f32.xlu0 %v1579
    %v1581 = vpop.xlane.xlu0 %1580
    %v1582 = vsel %vm1119, %v721, 0.0
    %1583 = vadd.xlane.f32.xlu0 %v1582
    %v1584 = vpop.xlane.xlu0 %1583
    %v1585 = vsel %vm1119, %v722, 0.0
    %1586 = vadd.xlane.f32.xlu0 %v1585
    %v1587 = vpop.xlane.xlu0 %1586
    %v1588 = vsel %vm1119, %v723, 0.0
    %1589 = vadd.xlane.f32.xlu0 %v1588
    %v1590 = vpop.xlane.xlu0 %1589
    %v1591 = vsel %vm1119, %v724, 0.0
    %1592 = vadd.xlane.f32.xlu0 %v1591
    %v1593 = vpop.xlane.xlu0 %1592
    %v1594 = vsel %vm1119, %v725, 0.0
    %1595 = vadd.xlane.f32.xlu0 %v1594
    %v1596 = vpop.xlane.xlu0 %1595
    %v1597 = vsel %vm1119, %v726, 0.0
    %1598 = vadd.xlane.f32.xlu0 %v1597
    %v1599 = vpop.xlane.xlu0 %1598
    %v1600 = vsel %vm1119, %v727, 0.0
    %1601 = vadd.xlane.f32.xlu0 %v1600
    %v1602 = vpop.xlane.xlu0 %1601
    %v1603 = vsel %vm1119, %v728, 0.0
    %1604 = vadd.xlane.f32.xlu0 %v1603
    %v1605 = vpop.xlane.xlu0 %1604
    %v1606 = vsel %vm1119, %v729, 0.0
    %1607 = vadd.xlane.f32.xlu0 %v1606
    %v1608 = vpop.xlane.xlu0 %1607
    %v1609 = vsel %vm1119, %v730, 0.0
    %1610 = vadd.xlane.f32.xlu0 %v1609
    %v1611 = vpop.xlane.xlu0 %1610
    %v1612 = vsel %vm1119, %v731, 0.0
    %1613 = vadd.xlane.f32.xlu0 %v1612
    %v1614 = vpop.xlane.xlu0 %1613
    %v1615 = vsel %vm1119, %v732, 0.0
    %1616 = vadd.xlane.f32.xlu0 %v1615
    %v1617 = vpop.xlane.xlu0 %1616
    %v1618 = vsel %vm1119, %v733, 0.0
    %1619 = vadd.xlane.f32.xlu0 %v1618
    %v1620 = vpop.xlane.xlu0 %1619
    %v1621 = vsel %vm1119, %v734, 0.0
    %1622 = vadd.xlane.f32.xlu0 %v1621
    %v1623 = vpop.xlane.xlu0 %1622
    %v1624 = vsel %vm1119, %v735, 0.0
    %1625 = vadd.xlane.f32.xlu0 %v1624
    %v1626 = vpop.xlane.xlu0 %1625
    %v1627 = vsel %vm1119, %v736, 0.0
    %1628 = vadd.xlane.f32.xlu0 %v1627
    %v1629 = vpop.xlane.xlu0 %1628
    %v1630 = vsel %vm1119, %v737, 0.0
    %1631 = vadd.xlane.f32.xlu0 %v1630
    %v1632 = vpop.xlane.xlu0 %1631
    %v1633 = vsel %vm1119, %v738, 0.0
    %1634 = vadd.xlane.f32.xlu0 %v1633
    %v1635 = vpop.xlane.xlu0 %1634
    %v1636 = vsel %vm1119, %v739, 0.0
    %1637 = vadd.xlane.f32.xlu0 %v1636
    %v1638 = vpop.xlane.xlu0 %1637
    %v1639 = vsel %vm1119, %v740, 0.0
    %1640 = vadd.xlane.f32.xlu0 %v1639
    %v1641 = vpop.xlane.xlu0 %1640
    %v1642 = vsel %vm1119, %v741, 0.0
    %1643 = vadd.xlane.f32.xlu0 %v1642
    %v1644 = vpop.xlane.xlu0 %1643
    %v1645 = vsel %vm1119, %v742, 0.0
    %1646 = vadd.xlane.f32.xlu0 %v1645
    %v1647 = vpop.xlane.xlu0 %1646
    %v1648 = vsel %vm1119, %v743, 0.0
    %1649 = vadd.xlane.f32.xlu0 %v1648
    %v1650 = vpop.xlane.xlu0 %1649
    %v1651 = vsel %vm1119, %v744, 0.0
    %1652 = vadd.xlane.f32.xlu0 %v1651
    %v1653 = vpop.xlane.xlu0 %1652
    %v1654 = vsel %vm1119, %v745, 0.0
    %1655 = vadd.xlane.f32.xlu0 %v1654
    %v1656 = vpop.xlane.xlu0 %1655
    %v1657 = vsel %vm1119, %v746, 0.0
    %1658 = vadd.xlane.f32.xlu0 %v1657
    %v1659 = vpop.xlane.xlu0 %1658
    %v1660 = vsel %vm1119, %v747, 0.0
    %1661 = vadd.xlane.f32.xlu0 %v1660
    %v1662 = vpop.xlane.xlu0 %1661
    %v1663 = vsel %vm1119, %v748, 0.0
    %1664 = vadd.xlane.f32.xlu0 %v1663
    %v1665 = vpop.xlane.xlu0 %1664
    %v1666 = vsel %vm1119, %v749, 0.0
    %1667 = vadd.xlane.f32.xlu0 %v1666
    %v1668 = vpop.xlane.xlu0 %1667
    %v1669 = vsel %vm1119, %v750, 0.0
    %1670 = vadd.xlane.f32.xlu0 %v1669
    %v1671 = vpop.xlane.xlu0 %1670
    %v1672 = vsel %vm1119, %v751, 0.0
    %1673 = vadd.xlane.f32.xlu0 %v1672
    %v1674 = vpop.xlane.xlu0 %1673
    %v1675 = vsel %vm1119, %v752, 0.0
    %1676 = vadd.xlane.f32.xlu0 %v1675
    %v1677 = vpop.xlane.xlu0 %1676
    %v1678 = vsel %vm1119, %v753, 0.0
    %1679 = vadd.xlane.f32.xlu0 %v1678
    %v1680 = vpop.xlane.xlu0 %1679
    %v1681 = vsel %vm1119, %v754, 0.0
    %1682 = vadd.xlane.f32.xlu0 %v1681
    %v1683 = vpop.xlane.xlu0 %1682
    %v1684 = vsel %vm1119, %v755, 0.0
    %1685 = vadd.xlane.f32.xlu0 %v1684
    %v1686 = vpop.xlane.xlu0 %1685
    %v1687 = vsel %vm1119, %v756, 0.0
    %1688 = vadd.xlane.f32.xlu0 %v1687
    %v1689 = vpop.xlane.xlu0 %1688
    %v1690 = vsel %vm1119, %v757, 0.0
    %1691 = vadd.xlane.f32.xlu0 %v1690
    %v1692 = vpop.xlane.xlu0 %1691
    %v1693 = vsel %vm1119, %v758, 0.0
    %1694 = vadd.xlane.f32.xlu0 %v1693
    %v1695 = vpop.xlane.xlu0 %1694
    %v1696 = vsel %vm1119, %v759, 0.0
    %1697 = vadd.xlane.f32.xlu0 %v1696
    %v1698 = vpop.xlane.xlu0 %1697
    %v1699 = vsel %vm1119, %v760, 0.0
    %1700 = vadd.xlane.f32.xlu0 %v1699
    %v1701 = vpop.xlane.xlu0 %1700
    %v1702 = vsel %vm1119, %v761, 0.0
    %1703 = vadd.xlane.f32.xlu0 %v1702
    %v1704 = vpop.xlane.xlu0 %1703
    %v1705 = vsel %vm1119, %v762, 0.0
    %1706 = vadd.xlane.f32.xlu0 %v1705
    %v1707 = vpop.xlane.xlu0 %1706
    %v1708 = vsel %vm1119, %v763, 0.0
    %1709 = vadd.xlane.f32.xlu0 %v1708
    %v1710 = vpop.xlane.xlu0 %1709
    %v1711 = vsel %vm1119, %v764, 0.0
    %1712 = vadd.xlane.f32.xlu0 %v1711
    %v1713 = vpop.xlane.xlu0 %1712
    %v1714 = vsel %vm1119, %v765, 0.0
    %1715 = vadd.xlane.f32.xlu0 %v1714
    %v1716 = vpop.xlane.xlu0 %1715
    %v1717 = vsel %vm1119, %v766, 0.0
    %1718 = vadd.xlane.f32.xlu0 %v1717
    %v1719 = vpop.xlane.xlu0 %1718
    %v1720 = vsel %vm1119, %v767, 0.0
    %1721 = vadd.xlane.f32.xlu0 %v1720
    %v1722 = vpop.xlane.xlu0 %1721
    %v1723 = vsel %vm1119, %v768, 0.0
    %1724 = vadd.xlane.f32.xlu0 %v1723
    %v1725 = vpop.xlane.xlu0 %1724
    %v1726 = vsel %vm1119, %v769, 0.0
    %1727 = vadd.xlane.f32.xlu0 %v1726
    %v1728 = vpop.xlane.xlu0 %1727
    %v1729 = vsel %vm1119, %v770, 0.0
    %1730 = vadd.xlane.f32.xlu0 %v1729
    %v1731 = vpop.xlane.xlu0 %1730
    %v1732 = vsel %vm1119, %v771, 0.0
    %1733 = vadd.xlane.f32.xlu0 %v1732
    %v1734 = vpop.xlane.xlu0 %1733
    %v1735 = vsel %vm1119, %v772, 0.0
    %1736 = vadd.xlane.f32.xlu0 %v1735
    %v1737 = vpop.xlane.xlu0 %1736
    %v1738 = vsel %vm1119, %v773, 0.0
    %1739 = vadd.xlane.f32.xlu0 %v1738
    %v1740 = vpop.xlane.xlu0 %1739
    %v1741 = vsel %vm1119, %v774, 0.0
    %1742 = vadd.xlane.f32.xlu0 %v1741
    %v1743 = vpop.xlane.xlu0 %1742
    %v1744 = vsel %vm1119, %v775, 0.0
    %1745 = vadd.xlane.f32.xlu0 %v1744
    %v1746 = vpop.xlane.xlu0 %1745
    %v1747 = vsel %vm1119, %v776, 0.0
    %1748 = vadd.xlane.f32.xlu0 %v1747
    %v1749 = vpop.xlane.xlu0 %1748
    %v1750 = vsel %vm1119, %v777, 0.0
    %1751 = vadd.xlane.f32.xlu0 %v1750
    %v1752 = vpop.xlane.xlu0 %1751
    %v1753 = vsel %vm1119, %v778, 0.0
    %1754 = vadd.xlane.f32.xlu0 %v1753
    %v1755 = vpop.xlane.xlu0 %1754
    %v1756 = vsel %vm1119, %v779, 0.0
    %1757 = vadd.xlane.f32.xlu0 %v1756
    %v1758 = vpop.xlane.xlu0 %1757
    %v1759 = vsel %vm1119, %v780, 0.0
    %1760 = vadd.xlane.f32.xlu0 %v1759
    %v1761 = vpop.xlane.xlu0 %1760
    %v1762 = vsel %vm1119, %v781, 0.0
    %1763 = vadd.xlane.f32.xlu0 %v1762
    %v1764 = vpop.xlane.xlu0 %1763
    %v1765 = vsel %vm1119, %v782, 0.0
    %1766 = vadd.xlane.f32.xlu0 %v1765
    %v1767 = vpop.xlane.xlu0 %1766
    %v1768 = vsel %vm1119, %v783, 0.0
    %1769 = vadd.xlane.f32.xlu0 %v1768
    %v1770 = vpop.xlane.xlu0 %1769
    %v1771 = vsel %vm1119, %v784, 0.0
    %1772 = vadd.xlane.f32.xlu0 %v1771
    %v1773 = vpop.xlane.xlu0 %1772
    %v1774 = vsel %vm1119, %v785, 0.0
    %1775 = vadd.xlane.f32.xlu0 %v1774
    %v1776 = vpop.xlane.xlu0 %1775
    %v1777 = vsel %vm1119, %v786, 0.0
    %1778 = vadd.xlane.f32.xlu0 %v1777
    %v1779 = vpop.xlane.xlu0 %1778
    %v1780 = vsel %vm1119, %v787, 0.0
    %1781 = vadd.xlane.f32.xlu0 %v1780
    %v1782 = vpop.xlane.xlu0 %1781
    %v1783 = vsel %vm1119, %v788, 0.0
    %1784 = vadd.xlane.f32.xlu0 %v1783
    %v1785 = vpop.xlane.xlu0 %1784
    %v1786 = vsel %vm1119, %v789, 0.0
    %1787 = vadd.xlane.f32.xlu0 %v1786
    %v1788 = vpop.xlane.xlu0 %1787
    %v1789 = vsel %vm1119, %v790, 0.0
    %1790 = vadd.xlane.f32.xlu0 %v1789
    %v1791 = vpop.xlane.xlu0 %1790
    %v1792 = vsel %vm1119, %v791, 0.0
    %1793 = vadd.xlane.f32.xlu0 %v1792
    %v1794 = vpop.xlane.xlu0 %1793
    %v1795 = vsel %vm1119, %v792, 0.0
    %1796 = vadd.xlane.f32.xlu0 %v1795
    %v1797 = vpop.xlane.xlu0 %1796
    %v1798 = vsel %vm1119, %v793, 0.0
    %1799 = vadd.xlane.f32.xlu0 %v1798
    %v1800 = vpop.xlane.xlu0 %1799
    %v1801 = vsel %vm1119, %v794, 0.0
    %1802 = vadd.xlane.f32.xlu0 %v1801
    %v1803 = vpop.xlane.xlu0 %1802
    %v1804 = vsel %vm1119, %v795, 0.0
    %1805 = vadd.xlane.f32.xlu0 %v1804
    %v1806 = vpop.xlane.xlu0 %1805
    %v1807 = vsel %vm1119, %v796, 0.0
    %1808 = vadd.xlane.f32.xlu0 %v1807
    %v1809 = vpop.xlane.xlu0 %1808
    %v1810 = vsel %vm1119, %v797, 0.0
    %1811 = vadd.xlane.f32.xlu0 %v1810
    %v1812 = vpop.xlane.xlu0 %1811
    %v1813 = vsel %vm1119, %v798, 0.0
    %1814 = vadd.xlane.f32.xlu0 %v1813
    %v1815 = vpop.xlane.xlu0 %1814
    %v1816 = vsel %vm1119, %v799, 0.0
    %1817 = vadd.xlane.f32.xlu0 %v1816
    %v1818 = vpop.xlane.xlu0 %1817
    %v1819 = vsel %vm1119, %v800, 0.0
    %1820 = vadd.xlane.f32.xlu0 %v1819
    %v1821 = vpop.xlane.xlu0 %1820
    %v1822 = vsel %vm1119, %v801, 0.0
    %1823 = vadd.xlane.f32.xlu0 %v1822
    %v1824 = vpop.xlane.xlu0 %1823
    %v1825 = vsel %vm1119, %v802, 0.0
    %1826 = vadd.xlane.f32.xlu0 %v1825
    %v1827 = vpop.xlane.xlu0 %1826
    %v1828 = vsel %vm1119, %v803, 0.0
    %1829 = vadd.xlane.f32.xlu0 %v1828
    %v1830 = vpop.xlane.xlu0 %1829
    %v1831 = vsel %vm1119, %v804, 0.0
    %1832 = vadd.xlane.f32.xlu0 %v1831
    %v1833 = vpop.xlane.xlu0 %1832
    %v1834 = vsel %vm1119, %v805, 0.0
    %1835 = vadd.xlane.f32.xlu0 %v1834
    %v1836 = vpop.xlane.xlu0 %1835
    %v1837 = vsel %vm1119, %v806, 0.0
    %1838 = vadd.xlane.f32.xlu0 %v1837
    %v1839 = vpop.xlane.xlu0 %1838
    %v1840 = vsel %vm1119, %v807, 0.0
    %1841 = vadd.xlane.f32.xlu0 %v1840
    %v1842 = vpop.xlane.xlu0 %1841
    %v1843 = vsel %vm1119, %v808, 0.0
    %1844 = vadd.xlane.f32.xlu0 %v1843
    %v1845 = vpop.xlane.xlu0 %1844
    %v1846 = vsel %vm1119, %v809, 0.0
    %1847 = vadd.xlane.f32.xlu0 %v1846
    %v1848 = vpop.xlane.xlu0 %1847
    %v1849 = vsel %vm1119, %v810, 0.0
    %1850 = vadd.xlane.f32.xlu0 %v1849
    %v1851 = vpop.xlane.xlu0 %1850
    %v1852 = vsel %vm1119, %v811, 0.0
    %1853 = vadd.xlane.f32.xlu0 %v1852
    %v1854 = vpop.xlane.xlu0 %1853
    %v1855 = vsel %vm1119, %v812, 0.0
    %1856 = vadd.xlane.f32.xlu0 %v1855
    %v1857 = vpop.xlane.xlu0 %1856
    %v1858 = vsel %vm1119, %v813, 0.0
    %1859 = vadd.xlane.f32.xlu0 %v1858
    %v1860 = vpop.xlane.xlu0 %1859
    %v1861 = vsel %vm1119, %v814, 0.0
    %1862 = vadd.xlane.f32.xlu0 %v1861
    %v1863 = vpop.xlane.xlu0 %1862
    %v1864 = vsel %vm1119, %v815, 0.0
    %1865 = vadd.xlane.f32.xlu0 %v1864
    %v1866 = vpop.xlane.xlu0 %1865
    %v1867 = vsel %vm1119, %v816, 0.0
    %1868 = vadd.xlane.f32.xlu0 %v1867
    %v1869 = vpop.xlane.xlu0 %1868
    %v1870 = vsel %vm1119, %v817, 0.0
    %1871 = vadd.xlane.f32.xlu0 %v1870
    %v1872 = vpop.xlane.xlu0 %1871
    %v1873 = vsel %vm1119, %v818, 0.0
    %1874 = vadd.xlane.f32.xlu0 %v1873
    %v1875 = vpop.xlane.xlu0 %1874
    %v1876 = vsel %vm1119, %v819, 0.0
    %1877 = vadd.xlane.f32.xlu0 %v1876
    %v1878 = vpop.xlane.xlu0 %1877
    %v1879 = vsel %vm1119, %v820, 0.0
    %1880 = vadd.xlane.f32.xlu0 %v1879
    %v1881 = vpop.xlane.xlu0 %1880
    %v1882 = vsel %vm1119, %v821, 0.0
    %1883 = vadd.xlane.f32.xlu0 %v1882
    %v1884 = vpop.xlane.xlu0 %1883
    %v1885 = vsel %vm1119, %v822, 0.0
    %1886 = vadd.xlane.f32.xlu0 %v1885
    %v1887 = vpop.xlane.xlu0 %1886
    %v1888 = vsel %vm1119, %v823, 0.0
    %1889 = vadd.xlane.f32.xlu0 %v1888
    %v1890 = vpop.xlane.xlu0 %1889
    %v1891 = vsel %vm1119, %v824, 0.0
    %1892 = vadd.xlane.f32.xlu0 %v1891
    %v1893 = vpop.xlane.xlu0 %1892
    %v1894 = vsel %vm1119, %v825, 0.0
    %1895 = vadd.xlane.f32.xlu0 %v1894
    %v1896 = vpop.xlane.xlu0 %1895
    %v1897 = vsel %vm1119, %v826, 0.0
    %1898 = vadd.xlane.f32.xlu0 %v1897
    %v1899 = vpop.xlane.xlu0 %1898
    %v1900 = vsel %vm1119, %v827, 0.0
    %1901 = vadd.xlane.f32.xlu0 %v1900
    %v1902 = vpop.xlane.xlu0 %1901
    %v1903 = vsel %vm1119, %v828, 0.0
    %1904 = vadd.xlane.f32.xlu0 %v1903
    %v1905 = vpop.xlane.xlu0 %1904
    %v1906 = vsel %vm1119, %v829, 0.0
    %1907 = vadd.xlane.f32.xlu0 %v1906
    %v1908 = vpop.xlane.xlu0 %1907
    %v1909 = vsel %vm1119, %v830, 0.0
    %1910 = vadd.xlane.f32.xlu0 %v1909
    %v1911 = vpop.xlane.xlu0 %1910
    %v1912 = vsel %vm1119, %v831, 0.0
    %1913 = vadd.xlane.f32.xlu0 %v1912
    %v1914 = vpop.xlane.xlu0 %1913
    %v1915 = vsel %vm1119, %v832, 0.0
    %1916 = vadd.xlane.f32.xlu0 %v1915
    %v1917 = vpop.xlane.xlu0 %1916
    %v1918 = vsel %vm1119, %v833, 0.0
    %1919 = vadd.xlane.f32.xlu0 %v1918
    %v1920 = vpop.xlane.xlu0 %1919
    %v1921 = vsel %vm1119, %v834, 0.0
    %1922 = vadd.xlane.f32.xlu0 %v1921
    %v1923 = vpop.xlane.xlu0 %1922
    %v1924 = vsel %vm1119, %v835, 0.0
    %1925 = vadd.xlane.f32.xlu0 %v1924
    %v1926 = vpop.xlane.xlu0 %1925
    %v1927 = vsel %vm1119, %v836, 0.0
    %1928 = vadd.xlane.f32.xlu0 %v1927
    %v1929 = vpop.xlane.xlu0 %1928
    %v1930 = vsel %vm1119, %v837, 0.0
    %1931 = vadd.xlane.f32.xlu0 %v1930
    %v1932 = vpop.xlane.xlu0 %1931
    %v1933 = vsel %vm1119, %v838, 0.0
    %1934 = vadd.xlane.f32.xlu0 %v1933
    %v1935 = vpop.xlane.xlu0 %1934
    %v1936 = vsel %vm1119, %v839, 0.0
    %1937 = vadd.xlane.f32.xlu0 %v1936
    %v1938 = vpop.xlane.xlu0 %1937
    %v1939 = vsel %vm1119, %v840, 0.0
    %1940 = vadd.xlane.f32.xlu0 %v1939
    %v1941 = vpop.xlane.xlu0 %1940
    %v1942 = vsel %vm1119, %v841, 0.0
    %1943 = vadd.xlane.f32.xlu0 %v1942
    %v1944 = vpop.xlane.xlu0 %1943
    %v1945 = vsel %vm1119, %v842, 0.0
    %1946 = vadd.xlane.f32.xlu0 %v1945
    %v1947 = vpop.xlane.xlu0 %1946
    %v1948 = vsel %vm1119, %v843, 0.0
    %1949 = vadd.xlane.f32.xlu0 %v1948
    %v1950 = vpop.xlane.xlu0 %1949
    %v1951 = vsel %vm1119, %v844, 0.0
    %1952 = vadd.xlane.f32.xlu0 %v1951
    %v1953 = vpop.xlane.xlu0 %1952
    %v1954 = vsel %vm1119, %v845, 0.0
    %1955 = vadd.xlane.f32.xlu0 %v1954
    %v1956 = vpop.xlane.xlu0 %1955
    %v1957 = vsel %vm1119, %v846, 0.0
    %1958 = vadd.xlane.f32.xlu0 %v1957
    %v1959 = vpop.xlane.xlu0 %1958
    %v1960 = vsel %vm1119, %v847, 0.0
    %1961 = vadd.xlane.f32.xlu0 %v1960
    %v1962 = vpop.xlane.xlu0 %1961
    %v1963 = vsel %vm1119, %v848, 0.0
    %1964 = vadd.xlane.f32.xlu0 %v1963
    %v1965 = vpop.xlane.xlu0 %1964
    %v1966 = vsel %vm1119, %v849, 0.0
    %1967 = vadd.xlane.f32.xlu0 %v1966
    %v1968 = vpop.xlane.xlu0 %1967
    %v1969 = vsel %vm1119, %v850, 0.0
    %1970 = vadd.xlane.f32.xlu0 %v1969
    %v1971 = vpop.xlane.xlu0 %1970
    %v1972 = vsel %vm1119, %v851, 0.0
    %1973 = vadd.xlane.f32.xlu0 %v1972
    %v1974 = vpop.xlane.xlu0 %1973
    %v1975 = vsel %vm1119, %v852, 0.0
    %1976 = vadd.xlane.f32.xlu0 %v1975
    %v1977 = vpop.xlane.xlu0 %1976
    %v1978 = vsel %vm1119, %v853, 0.0
    %1979 = vadd.xlane.f32.xlu0 %v1978
    %v1980 = vpop.xlane.xlu0 %1979
    %v1981 = vsel %vm1119, %v854, 0.0
    %1982 = vadd.xlane.f32.xlu0 %v1981
    %v1983 = vpop.xlane.xlu0 %1982
    %v1984 = vsel %vm1119, %v855, 0.0
    %1985 = vadd.xlane.f32.xlu0 %v1984
    %v1986 = vpop.xlane.xlu0 %1985
    %v1987 = vsel %vm1119, %v856, 0.0
    %1988 = vadd.xlane.f32.xlu0 %v1987
    %v1989 = vpop.xlane.xlu0 %1988
    %v1990 = vsel %vm1119, %v857, 0.0
    %1991 = vadd.xlane.f32.xlu0 %v1990
    %v1992 = vpop.xlane.xlu0 %1991
    %v1993 = vsel %vm1119, %v858, 0.0
    %1994 = vadd.xlane.f32.xlu0 %v1993
    %v1995 = vpop.xlane.xlu0 %1994
    %v1996 = vsel %vm1119, %v859, 0.0
    %1997 = vadd.xlane.f32.xlu0 %v1996
    %v1998 = vpop.xlane.xlu0 %1997
    %v1999 = vsel %vm1119, %v860, 0.0
    %2000 = vadd.xlane.f32.xlu0 %v1999
    %v2001 = vpop.xlane.xlu0 %2000
    %v2002 = vsel %vm1119, %v861, 0.0
    %2003 = vadd.xlane.f32.xlu0 %v2002
    %v2004 = vpop.xlane.xlu0 %2003
    %v2005 = vsel %vm1119, %v862, 0.0
    %2006 = vadd.xlane.f32.xlu0 %v2005
    %v2007 = vpop.xlane.xlu0 %2006
    %v2008 = vsel %vm1119, %v863, 0.0
    %2009 = vadd.xlane.f32.xlu0 %v2008
    %v2010 = vpop.xlane.xlu0 %2009
    %v2011 = vsel %vm1119, %v864, 0.0
    %2012 = vadd.xlane.f32.xlu0 %v2011
    %v2013 = vpop.xlane.xlu0 %2012
    %v2014 = vsel %vm1119, %v865, 0.0
    %2015 = vadd.xlane.f32.xlu0 %v2014
    %v2016 = vpop.xlane.xlu0 %2015
    %v2017 = vsel %vm1119, %v866, 0.0
    %2018 = vadd.xlane.f32.xlu0 %v2017
    %v2019 = vpop.xlane.xlu0 %2018
    %v2020 = vsel %vm1119, %v867, 0.0
    %2021 = vadd.xlane.f32.xlu0 %v2020
    %v2022 = vpop.xlane.xlu0 %2021
    %v2023 = vsel %vm1119, %v868, 0.0
    %2024 = vadd.xlane.f32.xlu0 %v2023
    %v2025 = vpop.xlane.xlu0 %2024
    %v2026 = vsel %vm1119, %v869, 0.0
    %2027 = vadd.xlane.f32.xlu0 %v2026
    %v2028 = vpop.xlane.xlu0 %2027
    %v2029 = vsel %vm1119, %v870, 0.0
    %2030 = vadd.xlane.f32.xlu0 %v2029
    %v2031 = vpop.xlane.xlu0 %2030
    %v2032 = vsel %vm1119, %v871, 0.0
    %2033 = vadd.xlane.f32.xlu0 %v2032
    %v2034 = vpop.xlane.xlu0 %2033
    %v2035 = vsel %vm1119, %v872, 0.0
    %2036 = vadd.xlane.f32.xlu0 %v2035
    %v2037 = vpop.xlane.xlu0 %2036
    %v2038 = vsel %vm1119, %v873, 0.0
    %2039 = vadd.xlane.f32.xlu0 %v2038
    %v2040 = vpop.xlane.xlu0 %2039
    %v2041 = vsel %vm1119, %v874, 0.0
    %2042 = vadd.xlane.f32.xlu0 %v2041
    %v2043 = vpop.xlane.xlu0 %2042
    %v2044 = vsel %vm1119, %v875, 0.0
    %2045 = vadd.xlane.f32.xlu0 %v2044
    %v2046 = vpop.xlane.xlu0 %2045
    %v2047 = vsel %vm1119, %v876, 0.0
    %2048 = vadd.xlane.f32.xlu0 %v2047
    %v2049 = vpop.xlane.xlu0 %2048
    %v2050 = vsel %vm1119, %v877, 0.0
    %2051 = vadd.xlane.f32.xlu0 %v2050
    %v2052 = vpop.xlane.xlu0 %2051
    %v2053 = vsel %vm1119, %v878, 0.0
    %2054 = vadd.xlane.f32.xlu0 %v2053
    %v2055 = vpop.xlane.xlu0 %2054
    %v2056 = vsel %vm1119, %v879, 0.0
    %2057 = vadd.xlane.f32.xlu0 %v2056
    %v2058 = vpop.xlane.xlu0 %2057
    %v2059 = vsel %vm1119, %v880, 0.0
    %2060 = vadd.xlane.f32.xlu0 %v2059
    %v2061 = vpop.xlane.xlu0 %2060
    %v2062 = vsel %vm1119, %v881, 0.0
    %2063 = vadd.xlane.f32.xlu0 %v2062
    %v2064 = vpop.xlane.xlu0 %2063
    %v2065 = vsel %vm1119, %v882, 0.0
    %2066 = vadd.xlane.f32.xlu0 %v2065
    %v2067 = vpop.xlane.xlu0 %2066
    %v2068 = vsel %vm1119, %v883, 0.0
    %2069 = vadd.xlane.f32.xlu0 %v2068
    %v2070 = vpop.xlane.xlu0 %2069
    %v2071 = vsel %vm1119, %v884, 0.0
    %2072 = vadd.xlane.f32.xlu0 %v2071
    %v2073 = vpop.xlane.xlu0 %2072
    %v2074 = vsel %vm1119, %v885, 0.0
    %2075 = vadd.xlane.f32.xlu0 %v2074
    %v2076 = vpop.xlane.xlu0 %2075
    %v2077 = vsel %vm1119, %v886, 0.0
    %2078 = vadd.xlane.f32.xlu0 %v2077
    %v2079 = vpop.xlane.xlu0 %2078
    %v2080 = vsel %vm1119, %v887, 0.0
    %2081 = vadd.xlane.f32.xlu0 %v2080
    %v2082 = vpop.xlane.xlu0 %2081
    %v2083 = vsel %vm1119, %v888, 0.0
    %2084 = vadd.xlane.f32.xlu0 %v2083
    %v2085 = vpop.xlane.xlu0 %2084
    %v2086 = vsel %vm1119, %v889, 0.0
    %2087 = vadd.xlane.f32.xlu0 %v2086
    %v2088 = vpop.xlane.xlu0 %2087
    %v2089 = vsel %vm1119, %v890, 0.0
    %2090 = vadd.xlane.f32.xlu0 %v2089
    %v2091 = vpop.xlane.xlu0 %2090
    %v2092 = vsel %vm1119, %v891, 0.0
    %2093 = vadd.xlane.f32.xlu0 %v2092
    %v2094 = vpop.xlane.xlu0 %2093
    %v2095 = vsel %vm1119, %v892, 0.0
    %2096 = vadd.xlane.f32.xlu0 %v2095
    %v2097 = vpop.xlane.xlu0 %2096
    %v2098 = vsel %vm1119, %v893, 0.0
    %2099 = vadd.xlane.f32.xlu0 %v2098
    %v2100 = vpop.xlane.xlu0 %2099
    %v2101 = vsel %vm1119, %v894, 0.0
    %2102 = vadd.xlane.f32.xlu0 %v2101
    %v2103 = vpop.xlane.xlu0 %2102
    %v2104 = vsel %vm1119, %v895, 0.0
    %2105 = vadd.xlane.f32.xlu0 %v2104
    %v2106 = vpop.xlane.xlu0 %2105
    %v2107 = vsel %vm1119, %v896, 0.0
    %2108 = vadd.xlane.f32.xlu0 %v2107
    %v2109 = vpop.xlane.xlu0 %2108
    %v2110 = vsel %vm1119, %v897, 0.0
    %2111 = vadd.xlane.f32.xlu0 %v2110
    %v2112 = vpop.xlane.xlu0 %2111
    %v2113 = vsel %vm1119, %v898, 0.0
    %2114 = vadd.xlane.f32.xlu0 %v2113
    %v2115 = vpop.xlane.xlu0 %2114
    %v2116 = vsel %vm1119, %v899, 0.0
    %2117 = vadd.xlane.f32.xlu0 %v2116
    %v2118 = vpop.xlane.xlu0 %2117
    %v2119 = vsel %vm1119, %v900, 0.0
    %2120 = vadd.xlane.f32.xlu0 %v2119
    %v2121 = vpop.xlane.xlu0 %2120
    %v2122 = vsel %vm1119, %v901, 0.0
    %2123 = vadd.xlane.f32.xlu0 %v2122
    %v2124 = vpop.xlane.xlu0 %2123
    %v2125 = vsel %vm1119, %v902, 0.0
    %2126 = vadd.xlane.f32.xlu0 %v2125
    %v2127 = vpop.xlane.xlu0 %2126
    %v2128 = vsel %vm1119, %v903, 0.0
    %2129 = vadd.xlane.f32.xlu0 %v2128
    %v2130 = vpop.xlane.xlu0 %2129
    %v2131 = vsel %vm1119, %v904, 0.0
    %2132 = vadd.xlane.f32.xlu0 %v2131
    %v2133 = vpop.xlane.xlu0 %2132
    %v2134 = vsel %vm1119, %v905, 0.0
    %2135 = vadd.xlane.f32.xlu0 %v2134
    %v2136 = vpop.xlane.xlu0 %2135
    %v2137 = vsel %vm1119, %v906, 0.0
    %2138 = vadd.xlane.f32.xlu0 %v2137
    %v2139 = vpop.xlane.xlu0 %2138
    %v2140 = vsel %vm1119, %v907, 0.0
    %2141 = vadd.xlane.f32.xlu0 %v2140
    %v2142 = vpop.xlane.xlu0 %2141
    %v2143 = vsel %vm1119, %v908, 0.0
    %2144 = vadd.xlane.f32.xlu0 %v2143
    %v2145 = vpop.xlane.xlu0 %2144
    %v2146 = vsel %vm1119, %v909, 0.0
    %2147 = vadd.xlane.f32.xlu0 %v2146
    %v2148 = vpop.xlane.xlu0 %2147
    %v2149 = vsel %vm1119, %v910, 0.0
    %2150 = vadd.xlane.f32.xlu0 %v2149
    %v2151 = vpop.xlane.xlu0 %2150
    %v2152 = vsel %vm1119, %v911, 0.0
    %2153 = vadd.xlane.f32.xlu0 %v2152
    %v2154 = vpop.xlane.xlu0 %2153
    %v2155 = vsel %vm1119, %v912, 0.0
    %2156 = vadd.xlane.f32.xlu0 %v2155
    %v2157 = vpop.xlane.xlu0 %2156
    %v2158 = vsel %vm1119, %v913, 0.0
    %2159 = vadd.xlane.f32.xlu0 %v2158
    %v2160 = vpop.xlane.xlu0 %2159
    %v2161 = vsel %vm1119, %v914, 0.0
    %2162 = vadd.xlane.f32.xlu0 %v2161
    %v2163 = vpop.xlane.xlu0 %2162
    %v2164 = vsel %vm1119, %v915, 0.0
    %2165 = vadd.xlane.f32.xlu0 %v2164
    %v2166 = vpop.xlane.xlu0 %2165
    %v2167 = vsel %vm1119, %v916, 0.0
    %2168 = vadd.xlane.f32.xlu0 %v2167
    %v2169 = vpop.xlane.xlu0 %2168
    %v2170 = vsel %vm1119, %v917, 0.0
    %2171 = vadd.xlane.f32.xlu0 %v2170
    %v2172 = vpop.xlane.xlu0 %2171
    %v2173 = vsel %vm1119, %v918, 0.0
    %2174 = vadd.xlane.f32.xlu0 %v2173
    %v2175 = vpop.xlane.xlu0 %2174
    %v2176 = vsel %vm1119, %v919, 0.0
    %2177 = vadd.xlane.f32.xlu0 %v2176
    %v2178 = vpop.xlane.xlu0 %2177
    %v2179 = vsel %vm1119, %v920, 0.0
    %2180 = vadd.xlane.f32.xlu0 %v2179
    %v2181 = vpop.xlane.xlu0 %2180
    %v2182 = vsel %vm1119, %v921, 0.0
    %2183 = vadd.xlane.f32.xlu0 %v2182
    %v2184 = vpop.xlane.xlu0 %2183
    %v2185 = vsel %vm1119, %v922, 0.0
    %2186 = vadd.xlane.f32.xlu0 %v2185
    %v2187 = vpop.xlane.xlu0 %2186
    %v2188 = vsel %vm1119, %v923, 0.0
    %2189 = vadd.xlane.f32.xlu0 %v2188
    %v2190 = vpop.xlane.xlu0 %2189
    %v2191 = vsel %vm1119, %v924, 0.0
    %2192 = vadd.xlane.f32.xlu0 %v2191
    %v2193 = vpop.xlane.xlu0 %2192
    %v2194 = vsel %vm1119, %v925, 0.0
    %2195 = vadd.xlane.f32.xlu0 %v2194
    %v2196 = vpop.xlane.xlu0 %2195
    %v2197 = vsel %vm1119, %v926, 0.0
    %2198 = vadd.xlane.f32.xlu0 %v2197
    %v2199 = vpop.xlane.xlu0 %2198
    %v2200 = vsel %vm1119, %v927, 0.0
    %2201 = vadd.xlane.f32.xlu0 %v2200
    %v2202 = vpop.xlane.xlu0 %2201
    %v2203 = vsel %vm1119, %v928, 0.0
    %2204 = vadd.xlane.f32.xlu0 %v2203
    %v2205 = vpop.xlane.xlu0 %2204
    %v2206 = vsel %vm1119, %v929, 0.0
    %2207 = vadd.xlane.f32.xlu0 %v2206
    %v2208 = vpop.xlane.xlu0 %2207
    %v2209 = vsel %vm1119, %v930, 0.0
    %2210 = vadd.xlane.f32.xlu0 %v2209
    %v2211 = vpop.xlane.xlu0 %2210
    %v2212 = vsel %vm1119, %v931, 0.0
    %2213 = vadd.xlane.f32.xlu0 %v2212
    %v2214 = vpop.xlane.xlu0 %2213
    %v2215 = vsel %vm1119, %v932, 0.0
    %2216 = vadd.xlane.f32.xlu0 %v2215
    %v2217 = vpop.xlane.xlu0 %2216
    %v2218 = vsel %vm1119, %v933, 0.0
    %2219 = vadd.xlane.f32.xlu0 %v2218
    %v2220 = vpop.xlane.xlu0 %2219
    %v2221 = vsel %vm1119, %v934, 0.0
    %2222 = vadd.xlane.f32.xlu0 %v2221
    %v2223 = vpop.xlane.xlu0 %2222
    %v2224 = vsel %vm1119, %v935, 0.0
    %2225 = vadd.xlane.f32.xlu0 %v2224
    %v2226 = vpop.xlane.xlu0 %2225
    %v2227 = vsel %vm1119, %v936, 0.0
    %2228 = vadd.xlane.f32.xlu0 %v2227
    %v2229 = vpop.xlane.xlu0 %2228
    %v2230 = vsel %vm1119, %v937, 0.0
    %2231 = vadd.xlane.f32.xlu0 %v2230
    %v2232 = vpop.xlane.xlu0 %2231
    %v2233 = vsel %vm1119, %v938, 0.0
    %2234 = vadd.xlane.f32.xlu0 %v2233
    %v2235 = vpop.xlane.xlu0 %2234
    %v2236 = vsel %vm1119, %v939, 0.0
    %2237 = vadd.xlane.f32.xlu0 %v2236
    %v2238 = vpop.xlane.xlu0 %2237
    %v2239 = vsel %vm1119, %v940, 0.0
    %2240 = vadd.xlane.f32.xlu0 %v2239
    %v2241 = vpop.xlane.xlu0 %2240
    %v2242 = vsel %vm1119, %v941, 0.0
    %2243 = vadd.xlane.f32.xlu0 %v2242
    %v2244 = vpop.xlane.xlu0 %2243
    %v2245 = vsel %vm1119, %v942, 0.0
    %2246 = vadd.xlane.f32.xlu0 %v2245
    %v2247 = vpop.xlane.xlu0 %2246
    %v2248 = vsel %vm1119, %v943, 0.0
    %2249 = vadd.xlane.f32.xlu0 %v2248
    %v2250 = vpop.xlane.xlu0 %2249
    %v2251 = vsel %vm1119, %v944, 0.0
    %2252 = vadd.xlane.f32.xlu0 %v2251
    %v2253 = vpop.xlane.xlu0 %2252
    %v2254 = vsel %vm1119, %v945, 0.0
    %2255 = vadd.xlane.f32.xlu0 %v2254
    %v2256 = vpop.xlane.xlu0 %2255
    %v2257 = vsel %vm1119, %v946, 0.0
    %2258 = vadd.xlane.f32.xlu0 %v2257
    %v2259 = vpop.xlane.xlu0 %2258
    %v2260 = vsel %vm1119, %v947, 0.0
    %2261 = vadd.xlane.f32.xlu0 %v2260
    %v2262 = vpop.xlane.xlu0 %2261
    %v2263 = vsel %vm1119, %v948, 0.0
    %2264 = vadd.xlane.f32.xlu0 %v2263
    %v2265 = vpop.xlane.xlu0 %2264
    %v2266 = vsel %vm1119, %v949, 0.0
    %2267 = vadd.xlane.f32.xlu0 %v2266
    %v2268 = vpop.xlane.xlu0 %2267
    %v2269 = vsel %vm1119, %v950, 0.0
    %2270 = vadd.xlane.f32.xlu0 %v2269
    %v2271 = vpop.xlane.xlu0 %2270
    %v2272 = vsel %vm1119, %v951, 0.0
    %2273 = vadd.xlane.f32.xlu0 %v2272
    %v2274 = vpop.xlane.xlu0 %2273
    %v2275 = vsel %vm1119, %v952, 0.0
    %2276 = vadd.xlane.f32.xlu0 %v2275
    %v2277 = vpop.xlane.xlu0 %2276
    %v2278 = vsel %vm1119, %v953, 0.0
    %2279 = vadd.xlane.f32.xlu0 %v2278
    %v2280 = vpop.xlane.xlu0 %2279
    %v2281 = vsel %vm1119, %v954, 0.0
    %2282 = vadd.xlane.f32.xlu0 %v2281
    %v2283 = vpop.xlane.xlu0 %2282
    %v2284 = vsel %vm1119, %v955, 0.0
    %2285 = vadd.xlane.f32.xlu0 %v2284
    %v2286 = vpop.xlane.xlu0 %2285
    %v2287 = vsel %vm1119, %v956, 0.0
    %2288 = vadd.xlane.f32.xlu0 %v2287
    %v2289 = vpop.xlane.xlu0 %2288
    %v2290 = vsel %vm1119, %v957, 0.0
    %2291 = vadd.xlane.f32.xlu0 %v2290
    %v2292 = vpop.xlane.xlu0 %2291
    %v2293 = vsel %vm1119, %v958, 0.0
    %2294 = vadd.xlane.f32.xlu0 %v2293
    %v2295 = vpop.xlane.xlu0 %2294
    %v2296 = vsel %vm1119, %v959, 0.0
    %2297 = vadd.xlane.f32.xlu0 %v2296
    %v2298 = vpop.xlane.xlu0 %2297
    %v2299 = vsel %vm1119, %v960, 0.0
    %2300 = vadd.xlane.f32.xlu0 %v2299
    %v2301 = vpop.xlane.xlu0 %2300
    %v2302 = vsel %vm1119, %v961, 0.0
    %2303 = vadd.xlane.f32.xlu0 %v2302
    %v2304 = vpop.xlane.xlu0 %2303
    %v2305 = vsel %vm1119, %v962, 0.0
    %2306 = vadd.xlane.f32.xlu0 %v2305
    %v2307 = vpop.xlane.xlu0 %2306
    %v2308 = vsel %vm1119, %v963, 0.0
    %2309 = vadd.xlane.f32.xlu0 %v2308
    %v2310 = vpop.xlane.xlu0 %2309
    %v2311 = vsel %vm1119, %v964, 0.0
    %2312 = vadd.xlane.f32.xlu0 %v2311
    %v2313 = vpop.xlane.xlu0 %2312
    %v2314 = vsel %vm1119, %v965, 0.0
    %2315 = vadd.xlane.f32.xlu0 %v2314
    %v2316 = vpop.xlane.xlu0 %2315
    %v2317 = vsel %vm1119, %v966, 0.0
    %2318 = vadd.xlane.f32.xlu0 %v2317
    %v2319 = vpop.xlane.xlu0 %2318
    %v2320 = vsel %vm1119, %v967, 0.0
    %2321 = vadd.xlane.f32.xlu0 %v2320
    %v2322 = vpop.xlane.xlu0 %2321
    %v2323 = vsel %vm1119, %v968, 0.0
    %2324 = vadd.xlane.f32.xlu0 %v2323
    %v2325 = vpop.xlane.xlu0 %2324
    %v2326 = vsel %vm1119, %v969, 0.0
    %2327 = vadd.xlane.f32.xlu0 %v2326
    %v2328 = vpop.xlane.xlu0 %2327
    %v2329 = vsel %vm1119, %v970, 0.0
    %2330 = vadd.xlane.f32.xlu0 %v2329
    %v2331 = vpop.xlane.xlu0 %2330
    %v2332 = vsel %vm1119, %v971, 0.0
    %2333 = vadd.xlane.f32.xlu0 %v2332
    %v2334 = vpop.xlane.xlu0 %2333
    %v2335 = vsel %vm1119, %v972, 0.0
    %2336 = vadd.xlane.f32.xlu0 %v2335
    %v2337 = vpop.xlane.xlu0 %2336
    %v2338 = vsel %vm1119, %v973, 0.0
    %2339 = vadd.xlane.f32.xlu0 %v2338
    %v2340 = vpop.xlane.xlu0 %2339
    %v2341 = vsel %vm1119, %v974, 0.0
    %2342 = vadd.xlane.f32.xlu0 %v2341
    %v2343 = vpop.xlane.xlu0 %2342
    %v2344 = vsel %vm1119, %v975, 0.0
    %2345 = vadd.xlane.f32.xlu0 %v2344
    %v2346 = vpop.xlane.xlu0 %2345
    %v2347 = vsel %vm1119, %v976, 0.0
    %2348 = vadd.xlane.f32.xlu0 %v2347
    %v2349 = vpop.xlane.xlu0 %2348
    %v2350 = vsel %vm1119, %v977, 0.0
    %2351 = vadd.xlane.f32.xlu0 %v2350
    %v2352 = vpop.xlane.xlu0 %2351
    %v2353 = vsel %vm1119, %v978, 0.0
    %2354 = vadd.xlane.f32.xlu0 %v2353
    %v2355 = vpop.xlane.xlu0 %2354
    %v2356 = vsel %vm1119, %v979, 0.0
    %2357 = vadd.xlane.f32.xlu0 %v2356
    %v2358 = vpop.xlane.xlu0 %2357
    %v2359 = vsel %vm1119, %v980, 0.0
    %2360 = vadd.xlane.f32.xlu0 %v2359
    %v2361 = vpop.xlane.xlu0 %2360
    %v2362 = vsel %vm1119, %v981, 0.0
    %2363 = vadd.xlane.f32.xlu0 %v2362
    %v2364 = vpop.xlane.xlu0 %2363
    %v2365 = vsel %vm1119, %v982, 0.0
    %2366 = vadd.xlane.f32.xlu0 %v2365
    %v2367 = vpop.xlane.xlu0 %2366
    %v2368 = vsel %vm1119, %v983, 0.0
    %2369 = vadd.xlane.f32.xlu0 %v2368
    %v2370 = vpop.xlane.xlu0 %2369
    %v2371 = vsel %vm1119, %v984, 0.0
    %2372 = vadd.xlane.f32.xlu0 %v2371
    %v2373 = vpop.xlane.xlu0 %2372
    %v2374 = vsel %vm1119, %v985, 0.0
    %2375 = vadd.xlane.f32.xlu0 %v2374
    %v2376 = vpop.xlane.xlu0 %2375
    %v2377 = vsel %vm1119, %v986, 0.0
    %2378 = vadd.xlane.f32.xlu0 %v2377
    %v2379 = vpop.xlane.xlu0 %2378
    %v2380 = vsel %vm1119, %v987, 0.0
    %2381 = vadd.xlane.f32.xlu0 %v2380
    %v2382 = vpop.xlane.xlu0 %2381
    %v2383 = vsel %vm1119, %v988, 0.0
    %2384 = vadd.xlane.f32.xlu0 %v2383
    %v2385 = vpop.xlane.xlu0 %2384
    %v2386 = vsel %vm1119, %v989, 0.0
    %2387 = vadd.xlane.f32.xlu0 %v2386
    %v2388 = vpop.xlane.xlu0 %2387
    %v2389 = vsel %vm1119, %v990, 0.0
    %2390 = vadd.xlane.f32.xlu0 %v2389
    %v2391 = vpop.xlane.xlu0 %2390
    %v2392 = vsel %vm1119, %v991, 0.0
    %2393 = vadd.xlane.f32.xlu0 %v2392
    %v2394 = vpop.xlane.xlu0 %2393
    %v2395 = vsel %vm1119, %v992, 0.0
    %2396 = vadd.xlane.f32.xlu0 %v2395
    %v2397 = vpop.xlane.xlu0 %2396
    %v2398 = vsel %vm1119, %v993, 0.0
    %2399 = vadd.xlane.f32.xlu0 %v2398
    %v2400 = vpop.xlane.xlu0 %2399
    %v2401 = vsel %vm1119, %v994, 0.0
    %2402 = vadd.xlane.f32.xlu0 %v2401
    %v2403 = vpop.xlane.xlu0 %2402
    %v2404 = vsel %vm1119, %v995, 0.0
    %2405 = vadd.xlane.f32.xlu0 %v2404
    %v2406 = vpop.xlane.xlu0 %2405
    %v2407 = vsel %vm1119, %v996, 0.0
    %2408 = vadd.xlane.f32.xlu0 %v2407
    %v2409 = vpop.xlane.xlu0 %2408
    %v2410 = vsel %vm1119, %v997, 0.0
    %2411 = vadd.xlane.f32.xlu0 %v2410
    %v2412 = vpop.xlane.xlu0 %2411
    %v2413 = vsel %vm1119, %v998, 0.0
    %2414 = vadd.xlane.f32.xlu0 %v2413
    %v2415 = vpop.xlane.xlu0 %2414
    %v2416 = vsel %vm1119, %v999, 0.0
    %2417 = vadd.xlane.f32.xlu0 %v2416
    %v2418 = vpop.xlane.xlu0 %2417
    %v2419 = vsel %vm1119, %v1000, 0.0
    %2420 = vadd.xlane.f32.xlu0 %v2419
    %v2421 = vpop.xlane.xlu0 %2420
    %v2422 = vsel %vm1119, %v1001, 0.0
    %2423 = vadd.xlane.f32.xlu0 %v2422
    %v2424 = vpop.xlane.xlu0 %2423
    %v2425 = vsel %vm1119, %v1002, 0.0
    %2426 = vadd.xlane.f32.xlu0 %v2425
    %v2427 = vpop.xlane.xlu0 %2426
    %v2428 = vsel %vm1119, %v1003, 0.0
    %2429 = vadd.xlane.f32.xlu0 %v2428
    %v2430 = vpop.xlane.xlu0 %2429
    %v2431 = vsel %vm1119, %v1004, 0.0
    %2432 = vadd.xlane.f32.xlu0 %v2431
    %v2433 = vpop.xlane.xlu0 %2432
    %v2434 = vsel %vm1119, %v1005, 0.0
    %2435 = vadd.xlane.f32.xlu0 %v2434
    %v2436 = vpop.xlane.xlu0 %2435
    %v2437 = vsel %vm1119, %v1006, 0.0
    %2438 = vadd.xlane.f32.xlu0 %v2437
    %v2439 = vpop.xlane.xlu0 %2438
    %v2440 = vsel %vm1119, %v1007, 0.0
    %2441 = vadd.xlane.f32.xlu0 %v2440
    %v2442 = vpop.xlane.xlu0 %2441
    %v2443 = vsel %vm1119, %v1008, 0.0
    %2444 = vadd.xlane.f32.xlu0 %v2443
    %v2445 = vpop.xlane.xlu0 %2444
    %v2446 = vsel %vm1119, %v1009, 0.0
    %2447 = vadd.xlane.f32.xlu0 %v2446
    %v2448 = vpop.xlane.xlu0 %2447
    %v2449 = vsel %vm1119, %v1010, 0.0
    %2450 = vadd.xlane.f32.xlu0 %v2449
    %v2451 = vpop.xlane.xlu0 %2450
    %v2452 = vsel %vm1119, %v1011, 0.0
    %2453 = vadd.xlane.f32.xlu0 %v2452
    %v2454 = vpop.xlane.xlu0 %2453
    %v2455 = vsel %vm1119, %v1012, 0.0
    %2456 = vadd.xlane.f32.xlu0 %v2455
    %v2457 = vpop.xlane.xlu0 %2456
    %v2458 = vsel %vm1119, %v1013, 0.0
    %2459 = vadd.xlane.f32.xlu0 %v2458
    %v2460 = vpop.xlane.xlu0 %2459
    %v2461 = vsel %vm1119, %v1014, 0.0
    %2462 = vadd.xlane.f32.xlu0 %v2461
    %v2463 = vpop.xlane.xlu0 %2462
    %v2464 = vsel %vm1119, %v1015, 0.0
    %2465 = vadd.xlane.f32.xlu0 %v2464
    %v2466 = vpop.xlane.xlu0 %2465
    %v2467 = vsel %vm1119, %v1016, 0.0
    %2468 = vadd.xlane.f32.xlu0 %v2467
    %v2469 = vpop.xlane.xlu0 %2468
    %v2470 = vsel %vm1119, %v1017, 0.0
    %2471 = vadd.xlane.f32.xlu0 %v2470
    %v2472 = vpop.xlane.xlu0 %2471
    %v2473 = vsel %vm1119, %v1018, 0.0
    %2474 = vadd.xlane.f32.xlu0 %v2473
    %v2475 = vpop.xlane.xlu0 %2474
    %v2476 = vsel %vm1119, %v1019, 0.0
    %2477 = vadd.xlane.f32.xlu0 %v2476
    %v2478 = vpop.xlane.xlu0 %2477
    %v2479 = vsel %vm1119, %v1020, 0.0
    %2480 = vadd.xlane.f32.xlu0 %v2479
    %v2481 = vpop.xlane.xlu0 %2480
    %v2482 = vsel %vm1119, %v1021, 0.0
    %2483 = vadd.xlane.f32.xlu0 %v2482
    %v2484 = vpop.xlane.xlu0 %2483
    %v2485 = vsel %vm1119, %v1022, 0.0
    %2486 = vadd.xlane.f32.xlu0 %v2485
    %v2487 = vpop.xlane.xlu0 %2486
    %v2488 = vsel %vm1119, %v1023, 0.0
    %2489 = vadd.xlane.f32.xlu0 %v2488
    %v2490 = vpop.xlane.xlu0 %2489
    %v2491 = vsel %vm1119, %v1024, 0.0
    %2492 = vadd.xlane.f32.xlu0 %v2491
    %v2493 = vpop.xlane.xlu0 %2492
    %v2494 = vsel %vm1119, %v1025, 0.0
    %2495 = vadd.xlane.f32.xlu0 %v2494
    %v2496 = vpop.xlane.xlu0 %2495
    %v2497 = vsel %vm1119, %v1026, 0.0
    %2498 = vadd.xlane.f32.xlu0 %v2497
    %v2499 = vpop.xlane.xlu0 %2498
    %v2500 = vsel %vm1119, %v1027, 0.0
    %2501 = vadd.xlane.f32.xlu0 %v2500
    %v2502 = vpop.xlane.xlu0 %2501
    %v2503 = vsel %vm1119, %v1028, 0.0
    %2504 = vadd.xlane.f32.xlu0 %v2503
    %v2505 = vpop.xlane.xlu0 %2504
    %v2506 = vsel %vm1119, %v1029, 0.0
    %2507 = vadd.xlane.f32.xlu0 %v2506
    %v2508 = vpop.xlane.xlu0 %2507
    %v2509 = vsel %vm1119, %v1030, 0.0
    %2510 = vadd.xlane.f32.xlu0 %v2509
    %v2511 = vpop.xlane.xlu0 %2510
    %v2512 = vsel %vm1119, %v1031, 0.0
    %2513 = vadd.xlane.f32.xlu0 %v2512
    %v2514 = vpop.xlane.xlu0 %2513
    %v2515 = vsel %vm1119, %v1032, 0.0
    %2516 = vadd.xlane.f32.xlu0 %v2515
    %v2517 = vpop.xlane.xlu0 %2516
    %v2518 = vsel %vm1119, %v1033, 0.0
    %2519 = vadd.xlane.f32.xlu0 %v2518
    %v2520 = vpop.xlane.xlu0 %2519
    %v2521 = vsel %vm1119, %v1034, 0.0
    %2522 = vadd.xlane.f32.xlu0 %v2521
    %v2523 = vpop.xlane.xlu0 %2522
    %v2524 = vsel %vm1119, %v1035, 0.0
    %2525 = vadd.xlane.f32.xlu0 %v2524
    %v2526 = vpop.xlane.xlu0 %2525
    %v2527 = vsel %vm1119, %v1036, 0.0
    %2528 = vadd.xlane.f32.xlu0 %v2527
    %v2529 = vpop.xlane.xlu0 %2528
    %v2530 = vsel %vm1119, %v1037, 0.0
    %2531 = vadd.xlane.f32.xlu0 %v2530
    %v2532 = vpop.xlane.xlu0 %2531
    %v2533 = vsel %vm1119, %v1038, 0.0
    %2534 = vadd.xlane.f32.xlu0 %v2533
    %v2535 = vpop.xlane.xlu0 %2534
    %v2536 = vsel %vm1119, %v1039, 0.0
    %2537 = vadd.xlane.f32.xlu0 %v2536
    %v2538 = vpop.xlane.xlu0 %2537
    %v2539 = vsel %vm1119, %v1040, 0.0
    %2540 = vadd.xlane.f32.xlu0 %v2539
    %v2541 = vpop.xlane.xlu0 %2540
    %v2542 = vsel %vm1119, %v1041, 0.0
    %2543 = vadd.xlane.f32.xlu0 %v2542
    %v2544 = vpop.xlane.xlu0 %2543
    %v2545 = vsel %vm1119, %v1042, 0.0
    %2546 = vadd.xlane.f32.xlu0 %v2545
    %v2547 = vpop.xlane.xlu0 %2546
    %v2548 = vsel %vm1119, %v1043, 0.0
    %2549 = vadd.xlane.f32.xlu0 %v2548
    %v2550 = vpop.xlane.xlu0 %2549
    %v2551 = vsel %vm1119, %v1044, 0.0
    %2552 = vadd.xlane.f32.xlu0 %v2551
    %v2553 = vpop.xlane.xlu0 %2552
    %v2554 = vsel %vm1119, %v1045, 0.0
    %2555 = vadd.xlane.f32.xlu0 %v2554
    %v2556 = vpop.xlane.xlu0 %2555
    %v2557 = vsel %vm1119, %v1046, 0.0
    %2558 = vadd.xlane.f32.xlu0 %v2557
    %v2559 = vpop.xlane.xlu0 %2558
    %v2560 = vsel %vm1119, %v1047, 0.0
    %2561 = vadd.xlane.f32.xlu0 %v2560
    %v2562 = vpop.xlane.xlu0 %2561
    %v2563 = vsel %vm1119, %v1048, 0.0
    %2564 = vadd.xlane.f32.xlu0 %v2563
    %v2565 = vpop.xlane.xlu0 %2564
    %v2566 = vsel %vm1119, %v1049, 0.0
    %2567 = vadd.xlane.f32.xlu0 %v2566
    %v2568 = vpop.xlane.xlu0 %2567
    %v2569 = vsel %vm1119, %v1050, 0.0
    %2570 = vadd.xlane.f32.xlu0 %v2569
    %v2571 = vpop.xlane.xlu0 %2570
    %v2572 = vsel %vm1119, %v1051, 0.0
    %2573 = vadd.xlane.f32.xlu0 %v2572
    %v2574 = vpop.xlane.xlu0 %2573
    %v2575 = vsel %vm1119, %v1052, 0.0
    %2576 = vadd.xlane.f32.xlu0 %v2575
    %v2577 = vpop.xlane.xlu0 %2576
    %v2578 = vsel %vm1119, %v1053, 0.0
    %2579 = vadd.xlane.f32.xlu0 %v2578
    %v2580 = vpop.xlane.xlu0 %2579
    %v2581 = vsel %vm1119, %v1054, 0.0
    %2582 = vadd.xlane.f32.xlu0 %v2581
    %v2583 = vpop.xlane.xlu0 %2582
    %v2584 = vsel %vm1119, %v1055, 0.0
    %2585 = vadd.xlane.f32.xlu0 %v2584
    %v2586 = vpop.xlane.xlu0 %2585
    %v2587 = vsel %vm1119, %v1056, 0.0
    %2588 = vadd.xlane.f32.xlu0 %v2587
    %v2589 = vpop.xlane.xlu0 %2588
    %v2590 = vsel %vm1119, %v1057, 0.0
    %2591 = vadd.xlane.f32.xlu0 %v2590
    %v2592 = vpop.xlane.xlu0 %2591
    %v2593 = vsel %vm1119, %v1058, 0.0
    %2594 = vadd.xlane.f32.xlu0 %v2593
    %v2595 = vpop.xlane.xlu0 %2594
    %v2596 = vsel %vm1119, %v1059, 0.0
    %2597 = vadd.xlane.f32.xlu0 %v2596
    %v2598 = vpop.xlane.xlu0 %2597
    %v2599 = vsel %vm1119, %v1060, 0.0
    %2600 = vadd.xlane.f32.xlu0 %v2599
    %v2601 = vpop.xlane.xlu0 %2600
    %v2602 = vsel %vm1119, %v1061, 0.0
    %2603 = vadd.xlane.f32.xlu0 %v2602
    %v2604 = vpop.xlane.xlu0 %2603
    %v2605 = vsel %vm1119, %v1062, 0.0
    %2606 = vadd.xlane.f32.xlu0 %v2605
    %v2607 = vpop.xlane.xlu0 %2606
    %v2608 = vsel %vm1119, %v1063, 0.0
    %2609 = vadd.xlane.f32.xlu0 %v2608
    %v2610 = vpop.xlane.xlu0 %2609
    %v2611 = vsel %vm1119, %v1064, 0.0
    %2612 = vadd.xlane.f32.xlu0 %v2611
    %v2613 = vpop.xlane.xlu0 %2612
    %v2614 = vsel %vm1119, %v1065, 0.0
    %2615 = vadd.xlane.f32.xlu0 %v2614
    %v2616 = vpop.xlane.xlu0 %2615
    %v2617 = vsel %vm1119, %v1066, 0.0
    %2618 = vadd.xlane.f32.xlu0 %v2617
    %v2619 = vpop.xlane.xlu0 %2618
    %v2620 = vsel %vm1119, %v1067, 0.0
    %2621 = vadd.xlane.f32.xlu0 %v2620
    %v2622 = vpop.xlane.xlu0 %2621
    %v2623 = vsel %vm1119, %v1068, 0.0
    %2624 = vadd.xlane.f32.xlu0 %v2623
    %v2625 = vpop.xlane.xlu0 %2624
    %v2626 = vsel %vm1119, %v1069, 0.0
    %2627 = vadd.xlane.f32.xlu0 %v2626
    %v2628 = vpop.xlane.xlu0 %2627
    %v2629 = vsel %vm1119, %v1070, 0.0
    %2630 = vadd.xlane.f32.xlu0 %v2629
    %v2631 = vpop.xlane.xlu0 %2630
    %v2632 = vsel %vm1119, %v1071, 0.0
    %2633 = vadd.xlane.f32.xlu0 %v2632
    %v2634 = vpop.xlane.xlu0 %2633
    %v2635 = vsel %vm1119, %v1072, 0.0
    %2636 = vadd.xlane.f32.xlu0 %v2635
    %v2637 = vpop.xlane.xlu0 %2636
    %v2638 = vsel %vm1119, %v1073, 0.0
    %2639 = vadd.xlane.f32.xlu0 %v2638
    %v2640 = vpop.xlane.xlu0 %2639
    %v2641 = vsel %vm1119, %v1074, 0.0
    %2642 = vadd.xlane.f32.xlu0 %v2641
    %v2643 = vpop.xlane.xlu0 %2642
    %v2644 = vsel %vm1119, %v1075, 0.0
    %2645 = vadd.xlane.f32.xlu0 %v2644
    %v2646 = vpop.xlane.xlu0 %2645
    %v2647 = vsel %vm1119, %v1076, 0.0
    %2648 = vadd.xlane.f32.xlu0 %v2647
    %v2649 = vpop.xlane.xlu0 %2648
    %v2650 = vsel %vm1119, %v1077, 0.0
    %2651 = vadd.xlane.f32.xlu0 %v2650
    %v2652 = vpop.xlane.xlu0 %2651
    %v2653 = vsel %vm1119, %v1078, 0.0
    %2654 = vadd.xlane.f32.xlu0 %v2653
    %v2655 = vpop.xlane.xlu0 %2654
    %v2656 = vsel %vm1119, %v1079, 0.0
    %2657 = vadd.xlane.f32.xlu0 %v2656
    %v2658 = vpop.xlane.xlu0 %2657
    %v2659 = vsel %vm1119, %v1080, 0.0
    %2660 = vadd.xlane.f32.xlu0 %v2659
    %v2661 = vpop.xlane.xlu0 %2660
    %v2662 = vsel %vm1119, %v1081, 0.0
    %2663 = vadd.xlane.f32.xlu0 %v2662
    %v2664 = vpop.xlane.xlu0 %2663
    %v2665 = vsel %vm1119, %v1082, 0.0
    %2666 = vadd.xlane.f32.xlu0 %v2665
    %v2667 = vpop.xlane.xlu0 %2666
    %v2668 = vsel %vm1119, %v1083, 0.0
    %2669 = vadd.xlane.f32.xlu0 %v2668
    %v2670 = vpop.xlane.xlu0 %2669
    %v2671 = vsel %vm1119, %v1084, 0.0
    %2672 = vadd.xlane.f32.xlu0 %v2671
    %v2673 = vpop.xlane.xlu0 %2672
    %v2674 = vsel %vm1119, %v1085, 0.0
    %2675 = vadd.xlane.f32.xlu0 %v2674
    %v2676 = vpop.xlane.xlu0 %2675
    %v2677 = vsel %vm1119, %v1086, 0.0
    %2678 = vadd.xlane.f32.xlu0 %v2677
    %v2679 = vpop.xlane.xlu0 %2678
    %v2680 = vsel %vm1119, %v1087, 0.0
    %2681 = vadd.xlane.f32.xlu0 %v2680
    %v2682 = vpop.xlane.xlu0 %2681
    %v2683 = vsel %vm1119, %v1088, 0.0
    %2684 = vadd.xlane.f32.xlu0 %v2683
    %v2685 = vpop.xlane.xlu0 %2684
    %v2686 = vsel %vm1119, %v1089, 0.0
    %2687 = vadd.xlane.f32.xlu0 %v2686
    %v2688 = vpop.xlane.xlu0 %2687
    %v2689 = vsel %vm1119, %v1090, 0.0
    %2690 = vadd.xlane.f32.xlu0 %v2689
    %v2691 = vpop.xlane.xlu0 %2690
    %v2692 = vsel %vm1119, %v1091, 0.0
    %2693 = vadd.xlane.f32.xlu0 %v2692
    %v2694 = vpop.xlane.xlu0 %2693
    %v2695 = vsel %vm1119, %v1092, 0.0
    %2696 = vadd.xlane.f32.xlu0 %v2695
    %v2697 = vpop.xlane.xlu0 %2696
    %v2698 = vsel %vm1119, %v1093, 0.0
    %2699 = vadd.xlane.f32.xlu0 %v2698
    %v2700 = vpop.xlane.xlu0 %2699
    %v2701 = vsel %vm1119, %v1094, 0.0
    %2702 = vadd.xlane.f32.xlu0 %v2701
    %v2703 = vpop.xlane.xlu0 %2702
    %v2704 = vsel %vm1119, %v1095, 0.0
    %2705 = vadd.xlane.f32.xlu0 %v2704
    %v2706 = vpop.xlane.xlu0 %2705
    %v2707 = vsel %vm1119, %v1096, 0.0
    %2708 = vadd.xlane.f32.xlu0 %v2707
    %v2709 = vpop.xlane.xlu0 %2708
    %v2710 = vsel %vm1119, %v1097, 0.0
    %2711 = vadd.xlane.f32.xlu0 %v2710
    %v2712 = vpop.xlane.xlu0 %2711
    %v2713 = vsel %vm1119, %v1098, 0.0
    %2714 = vadd.xlane.f32.xlu0 %v2713
    %v2715 = vpop.xlane.xlu0 %2714
    %v2716 = vsel %vm1119, %v1099, 0.0
    %2717 = vadd.xlane.f32.xlu0 %v2716
    %v2718 = vpop.xlane.xlu0 %2717
    %v2719 = vsel %vm1119, %v1100, 0.0
    %2720 = vadd.xlane.f32.xlu0 %v2719
    %v2721 = vpop.xlane.xlu0 %2720
    %v2722 = vsel %vm1119, %v1101, 0.0
    %2723 = vadd.xlane.f32.xlu0 %v2722
    %v2724 = vpop.xlane.xlu0 %2723
    %v2725 = vsel %vm1119, %v1102, 0.0
    %2726 = vadd.xlane.f32.xlu0 %v2725
    %v2727 = vpop.xlane.xlu0 %2726
    %v2728 = vsel %vm1119, %v1103, 0.0
    %2729 = vadd.xlane.f32.xlu0 %v2728
    %v2730 = vpop.xlane.xlu0 %2729
    %v2731 = vsel %vm1119, %v1104, 0.0
    %2732 = vadd.xlane.f32.xlu0 %v2731
    %v2733 = vpop.xlane.xlu0 %2732
    %v2734 = vsel %vm1119, %v1105, 0.0
    %2735 = vadd.xlane.f32.xlu0 %v2734
    %v2736 = vpop.xlane.xlu0 %2735
    %v2737 = vsel %vm1119, %v1106, 0.0
    %2738 = vadd.xlane.f32.xlu0 %v2737
    %v2739 = vpop.xlane.xlu0 %2738
    %v2740 = vsel %vm1119, %v1107, 0.0
    %2741 = vadd.xlane.f32.xlu0 %v2740
    %v2742 = vpop.xlane.xlu0 %2741
    %v2743 = vsel %vm1119, %v1108, 0.0
    %2744 = vadd.xlane.f32.xlu0 %v2743
    %v2745 = vpop.xlane.xlu0 %2744
    %v2746 = vsel %vm1119, %v1109, 0.0
    %2747 = vadd.xlane.f32.xlu0 %v2746
    %v2748 = vpop.xlane.xlu0 %2747
    %v2749 = vsel %vm1119, %v1110, 0.0
    %2750 = vadd.xlane.f32.xlu0 %v2749
    %v2751 = vpop.xlane.xlu0 %2750
    %v2752 = vsel %vm1119, %v1111, 0.0
    %2753 = vadd.xlane.f32.xlu0 %v2752
    %v2754 = vpop.xlane.xlu0 %2753
    %v2755 = vsel %vm1119, %v1112, 0.0
    %2756 = vadd.xlane.f32.xlu0 %v2755
    %v2757 = vpop.xlane.xlu0 %2756
    %v2758 = vsel %vm1119, %v1113, 0.0
    %2759 = vadd.xlane.f32.xlu0 %v2758
    %v2760 = vpop.xlane.xlu0 %2759
    %v2761 = vsel %vm1119, %v1114, 0.0
    %2762 = vadd.xlane.f32.xlu0 %v2761
    %v2763 = vpop.xlane.xlu0 %2762
    %v2764 = vsel %vm1119, %v1115, 0.0
    %2765 = vadd.xlane.f32.xlu0 %v2764
    %v2766 = vpop.xlane.xlu0 %2765
    %v2767 = vsel %vm1119, %v1116, 0.0
    %2768 = vadd.xlane.f32.xlu0 %v2767
    %v2769 = vpop.xlane.xlu0 %2768
    %v2770 = vsel %vm1119, %v1117, 0.0
    %2771 = vadd.xlane.f32.xlu0 %v2770
    %v2772 = vpop.xlane.xlu0 %2771
    %v2773 = vsel %vm1119, %v1118, 0.0
    %2774 = vadd.xlane.f32.xlu0 %v2773
    %v2775 = vpop.xlane.xlu0 %2774
    %v2776 = vmul.f32 %v1122, 0.020408163
    %v2777 = vmul.f32 %v1125, 0.020408163
    %v2778 = vmul.f32 %v1128, 0.020408163
    %v2779 = vmul.f32 %v1131, 0.020408163
    %v2780 = vmul.f32 %v1134, 0.020408163
    %v2781 = vmul.f32 %v1137, 0.020408163
    %v2782 = vmul.f32 %v1140, 0.020408163
    %v2783 = vmul.f32 %v1143, 0.020408163
    %v2784 = vmul.f32 %v1146, 0.020408163
    %v2785 = vmul.f32 %v1149, 0.020408163
    %v2786 = vmul.f32 %v1152, 0.020408163
    %v2787 = vmul.f32 %v1155, 0.020408163
    %v2788 = vmul.f32 %v1158, 0.020408163
    %v2789 = vmul.f32 %v1161, 0.020408163
    %v2790 = vmul.f32 %v1164, 0.020408163
    %v2791 = vmul.f32 %v1167, 0.020408163
    %v2792 = vmul.f32 %v1170, 0.020408163
    %v2793 = vmul.f32 %v1173, 0.020408163
    %v2794 = vmul.f32 %v1176, 0.020408163
    %v2795 = vmul.f32 %v1179, 0.020408163
    %v2796 = vmul.f32 %v1182, 0.020408163
    %v2797 = vmul.f32 %v1185, 0.020408163
    %v2798 = vmul.f32 %v1188, 0.020408163
    %v2799 = vmul.f32 %v1191, 0.020408163
    %v2800 = vmul.f32 %v1194, 0.020408163
    %v2801 = vmul.f32 %v1197, 0.020408163
    %v2802 = vmul.f32 %v1200, 0.020408163
    %v2803 = vmul.f32 %v1203, 0.020408163
    %v2804 = vmul.f32 %v1206, 0.020408163
    %v2805 = vmul.f32 %v1209, 0.020408163
    %v2806 = vmul.f32 %v1212, 0.020408163
    %v2807 = vmul.f32 %v1215, 0.020408163
    %v2808 = vmul.f32 %v1218, 0.020408163
    %v2809 = vmul.f32 %v1221, 0.020408163
    %v2810 = vmul.f32 %v1224, 0.020408163
    %v2811 = vmul.f32 %v1227, 0.020408163
    %v2812 = vmul.f32 %v1230, 0.020408163
    %v2813 = vmul.f32 %v1233, 0.020408163
    %v2814 = vmul.f32 %v1236, 0.020408163
    %v2815 = vmul.f32 %v1239, 0.020408163
    %v2816 = vmul.f32 %v1242, 0.020408163
    %v2817 = vmul.f32 %v1245, 0.020408163
    %v2818 = vmul.f32 %v1248, 0.020408163
    %v2819 = vmul.f32 %v1251, 0.020408163
    %v2820 = vmul.f32 %v1254, 0.020408163
    %v2821 = vmul.f32 %v1257, 0.020408163
    %v2822 = vmul.f32 %v1260, 0.020408163
    %v2823 = vmul.f32 %v1263, 0.020408163
    %v2824 = vmul.f32 %v1266, 0.020408163
    %v2825 = vmul.f32 %v1269, 0.020408163
    %v2826 = vmul.f32 %v1272, 0.020408163
    %v2827 = vmul.f32 %v1275, 0.020408163
    %v2828 = vmul.f32 %v1278, 0.020408163
    %v2829 = vmul.f32 %v1281, 0.020408163
    %v2830 = vmul.f32 %v1284, 0.020408163
    %v2831 = vmul.f32 %v1287, 0.020408163
    %v2832 = vmul.f32 %v1290, 0.020408163
    %v2833 = vmul.f32 %v1293, 0.020408163
    %v2834 = vmul.f32 %v1296, 0.020408163
    %v2835 = vmul.f32 %v1299, 0.020408163
    %v2836 = vmul.f32 %v1302, 0.020408163
    %v2837 = vmul.f32 %v1305, 0.020408163
    %v2838 = vmul.f32 %v1308, 0.020408163
    %v2839 = vmul.f32 %v1311, 0.020408163
    %v2840 = vmul.f32 %v1314, 0.020408163
    %v2841 = vmul.f32 %v1317, 0.020408163
    %v2842 = vmul.f32 %v1320, 0.020408163
    %v2843 = vmul.f32 %v1323, 0.020408163
    %v2844 = vmul.f32 %v1326, 0.020408163
    %v2845 = vmul.f32 %v1329, 0.020408163
    %v2846 = vmul.f32 %v1332, 0.020408163
    %v2847 = vmul.f32 %v1335, 0.020408163
    %v2848 = vmul.f32 %v1338, 0.020408163
    %v2849 = vmul.f32 %v1341, 0.020408163
    %v2850 = vmul.f32 %v1344, 0.020408163
    %v2851 = vmul.f32 %v1347, 0.020408163
    %v2852 = vmul.f32 %v1350, 0.020408163
    %v2853 = vmul.f32 %v1353, 0.020408163
    %v2854 = vmul.f32 %v1356, 0.020408163
    %v2855 = vmul.f32 %v1359, 0.020408163
    %v2856 = vmul.f32 %v1362, 0.020408163
    %v2857 = vmul.f32 %v1365, 0.020408163
    %v2858 = vmul.f32 %v1368, 0.020408163
    %v2859 = vmul.f32 %v1371, 0.020408163
    %v2860 = vmul.f32 %v1374, 0.020408163
    %v2861 = vmul.f32 %v1377, 0.020408163
    %v2862 = vmul.f32 %v1380, 0.020408163
    %v2863 = vmul.f32 %v1383, 0.020408163
    %v2864 = vmul.f32 %v1386, 0.020408163
    %v2865 = vmul.f32 %v1389, 0.020408163
    %v2866 = vmul.f32 %v1392, 0.020408163
    %v2867 = vmul.f32 %v1395, 0.020408163
    %v2868 = vmul.f32 %v1398, 0.020408163
    %v2869 = vmul.f32 %v1401, 0.020408163
    %v2870 = vmul.f32 %v1404, 0.020408163
    %v2871 = vmul.f32 %v1407, 0.020408163
    %v2872 = vmul.f32 %v1410, 0.020408163
    %v2873 = vmul.f32 %v1413, 0.020408163
    %v2874 = vmul.f32 %v1416, 0.020408163
    %v2875 = vmul.f32 %v1419, 0.020408163
    %v2876 = vmul.f32 %v1422, 0.020408163
    %v2877 = vmul.f32 %v1425, 0.020408163
    %v2878 = vmul.f32 %v1428, 0.020408163
    %v2879 = vmul.f32 %v1431, 0.020408163
    %v2880 = vmul.f32 %v1434, 0.020408163
    %v2881 = vmul.f32 %v1437, 0.020408163
    %v2882 = vmul.f32 %v1440, 0.020408163
    %v2883 = vmul.f32 %v1443, 0.020408163
    %v2884 = vmul.f32 %v1446, 0.020408163
    %v2885 = vmul.f32 %v1449, 0.020408163
    %v2886 = vmul.f32 %v1452, 0.020408163
    %v2887 = vmul.f32 %v1455, 0.020408163
    %v2888 = vmul.f32 %v1458, 0.020408163
    %v2889 = vmul.f32 %v1461, 0.020408163
    %v2890 = vmul.f32 %v1464, 0.020408163
    %v2891 = vmul.f32 %v1467, 0.020408163
    %v2892 = vmul.f32 %v1470, 0.020408163
    %v2893 = vmul.f32 %v1473, 0.020408163
    %v2894 = vmul.f32 %v1476, 0.020408163
    %v2895 = vmul.f32 %v1479, 0.020408163
    %v2896 = vmul.f32 %v1482, 0.020408163
    %v2897 = vmul.f32 %v1485, 0.020408163
    %v2898 = vmul.f32 %v1488, 0.020408163
    %v2899 = vmul.f32 %v1491, 0.020408163
    %v2900 = vmul.f32 %v1494, 0.020408163
    %v2901 = vmul.f32 %v1497, 0.020408163
    %v2902 = vmul.f32 %v1500, 0.020408163
    %v2903 = vmul.f32 %v1503, 0.020408163
    %v2904 = vmul.f32 %v1506, 0.020408163
    %v2905 = vmul.f32 %v1509, 0.020408163
    %v2906 = vmul.f32 %v1512, 0.020408163
    %v2907 = vmul.f32 %v1515, 0.020408163
    %v2908 = vmul.f32 %v1518, 0.020408163
    %v2909 = vmul.f32 %v1521, 0.020408163
    %v2910 = vmul.f32 %v1524, 0.020408163
    %v2911 = vmul.f32 %v1527, 0.020408163
    %v2912 = vmul.f32 %v1530, 0.020408163
    %v2913 = vmul.f32 %v1533, 0.020408163
    %v2914 = vmul.f32 %v1536, 0.020408163
    %v2915 = vmul.f32 %v1539, 0.020408163
    %v2916 = vmul.f32 %v1542, 0.020408163
    %v2917 = vmul.f32 %v1545, 0.020408163
    %v2918 = vmul.f32 %v1548, 0.020408163
    %v2919 = vmul.f32 %v1551, 0.020408163
    %v2920 = vmul.f32 %v1554, 0.020408163
    %v2921 = vmul.f32 %v1557, 0.020408163
    %v2922 = vmul.f32 %v1560, 0.020408163
    %v2923 = vmul.f32 %v1563, 0.020408163
    %v2924 = vmul.f32 %v1566, 0.020408163
    %v2925 = vmul.f32 %v1569, 0.020408163
    %v2926 = vmul.f32 %v1572, 0.020408163
    %v2927 = vmul.f32 %v1575, 0.020408163
    %v2928 = vmul.f32 %v1578, 0.020408163
    %v2929 = vmul.f32 %v1581, 0.020408163
    %v2930 = vmul.f32 %v1584, 0.020408163
    %v2931 = vmul.f32 %v1587, 0.020408163
    %v2932 = vmul.f32 %v1590, 0.020408163
    %v2933 = vmul.f32 %v1593, 0.020408163
    %v2934 = vmul.f32 %v1596, 0.020408163
    %v2935 = vmul.f32 %v1599, 0.020408163
    %v2936 = vmul.f32 %v1602, 0.020408163
    %v2937 = vmul.f32 %v1605, 0.020408163
    %v2938 = vmul.f32 %v1608, 0.020408163
    %v2939 = vmul.f32 %v1611, 0.020408163
    %v2940 = vmul.f32 %v1614, 0.020408163
    %v2941 = vmul.f32 %v1617, 0.020408163
    %v2942 = vmul.f32 %v1620, 0.020408163
    %v2943 = vmul.f32 %v1623, 0.020408163
    %v2944 = vmul.f32 %v1626, 0.020408163
    %v2945 = vmul.f32 %v1629, 0.020408163
    %v2946 = vmul.f32 %v1632, 0.020408163
    %v2947 = vmul.f32 %v1635, 0.020408163
    %v2948 = vmul.f32 %v1638, 0.020408163
    %v2949 = vmul.f32 %v1641, 0.020408163
    %v2950 = vmul.f32 %v1644, 0.020408163
    %v2951 = vmul.f32 %v1647, 0.020408163
    %v2952 = vmul.f32 %v1650, 0.020408163
    %v2953 = vmul.f32 %v1653, 0.020408163
    %v2954 = vmul.f32 %v1656, 0.020408163
    %v2955 = vmul.f32 %v1659, 0.020408163
    %v2956 = vmul.f32 %v1662, 0.020408163
    %v2957 = vmul.f32 %v1665, 0.020408163
    %v2958 = vmul.f32 %v1668, 0.020408163
    %v2959 = vmul.f32 %v1671, 0.020408163
    %v2960 = vmul.f32 %v1674, 0.020408163
    %v2961 = vmul.f32 %v1677, 0.020408163
    %v2962 = vmul.f32 %v1680, 0.020408163
    %v2963 = vmul.f32 %v1683, 0.020408163
    %v2964 = vmul.f32 %v1686, 0.020408163
    %v2965 = vmul.f32 %v1689, 0.020408163
    %v2966 = vmul.f32 %v1692, 0.020408163
    %v2967 = vmul.f32 %v1695, 0.020408163
    %v2968 = vmul.f32 %v1698, 0.020408163
    %v2969 = vmul.f32 %v1701, 0.020408163
    %v2970 = vmul.f32 %v1704, 0.020408163
    %v2971 = vmul.f32 %v1707, 0.020408163
    %v2972 = vmul.f32 %v1710, 0.020408163
    %v2973 = vmul.f32 %v1713, 0.020408163
    %v2974 = vmul.f32 %v1716, 0.020408163
    %v2975 = vmul.f32 %v1719, 0.020408163
    %v2976 = vmul.f32 %v1722, 0.020408163
    %v2977 = vmul.f32 %v1725, 0.020408163
    %v2978 = vmul.f32 %v1728, 0.020408163
    %v2979 = vmul.f32 %v1731, 0.020408163
    %v2980 = vmul.f32 %v1734, 0.020408163
    %v2981 = vmul.f32 %v1737, 0.020408163
    %v2982 = vmul.f32 %v1740, 0.020408163
    %v2983 = vmul.f32 %v1743, 0.020408163
    %v2984 = vmul.f32 %v1746, 0.020408163
    %v2985 = vmul.f32 %v1749, 0.020408163
    %v2986 = vmul.f32 %v1752, 0.020408163
    %v2987 = vmul.f32 %v1755, 0.020408163
    %v2988 = vmul.f32 %v1758, 0.020408163
    %v2989 = vmul.f32 %v1761, 0.020408163
    %v2990 = vmul.f32 %v1764, 0.020408163
    %v2991 = vmul.f32 %v1767, 0.020408163
    %v2992 = vmul.f32 %v1770, 0.020408163
    %v2993 = vmul.f32 %v1773, 0.020408163
    %v2994 = vmul.f32 %v1776, 0.020408163
    %v2995 = vmul.f32 %v1779, 0.020408163
    %v2996 = vmul.f32 %v1782, 0.020408163
    %v2997 = vmul.f32 %v1785, 0.020408163
    %v2998 = vmul.f32 %v1788, 0.020408163
    %v2999 = vmul.f32 %v1791, 0.020408163
    %v3000 = vmul.f32 %v1794, 0.020408163
    %v3001 = vmul.f32 %v1797, 0.020408163
    %v3002 = vmul.f32 %v1800, 0.020408163
    %v3003 = vmul.f32 %v1803, 0.020408163
    %v3004 = vmul.f32 %v1806, 0.020408163
    %v3005 = vmul.f32 %v1809, 0.020408163
    %v3006 = vmul.f32 %v1812, 0.020408163
    %v3007 = vmul.f32 %v1815, 0.020408163
    %v3008 = vmul.f32 %v1818, 0.020408163
    %v3009 = vmul.f32 %v1821, 0.020408163
    %v3010 = vmul.f32 %v1824, 0.020408163
    %v3011 = vmul.f32 %v1827, 0.020408163
    %v3012 = vmul.f32 %v1830, 0.020408163
    %v3013 = vmul.f32 %v1833, 0.020408163
    %v3014 = vmul.f32 %v1836, 0.020408163
    %v3015 = vmul.f32 %v1839, 0.020408163
    %v3016 = vmul.f32 %v1842, 0.020408163
    %v3017 = vmul.f32 %v1845, 0.020408163
    %v3018 = vmul.f32 %v1848, 0.020408163
    %v3019 = vmul.f32 %v1851, 0.020408163
    %v3020 = vmul.f32 %v1854, 0.020408163
    %v3021 = vmul.f32 %v1857, 0.020408163
    %v3022 = vmul.f32 %v1860, 0.020408163
    %v3023 = vmul.f32 %v1863, 0.020408163
    %v3024 = vmul.f32 %v1866, 0.020408163
    %v3025 = vmul.f32 %v1869, 0.020408163
    %v3026 = vmul.f32 %v1872, 0.020408163
    %v3027 = vmul.f32 %v1875, 0.020408163
    %v3028 = vmul.f32 %v1878, 0.020408163
    %v3029 = vmul.f32 %v1881, 0.020408163
    %v3030 = vmul.f32 %v1884, 0.020408163
    %v3031 = vmul.f32 %v1887, 0.020408163
    %v3032 = vmul.f32 %v1890, 0.020408163
    %v3033 = vmul.f32 %v1893, 0.020408163
    %v3034 = vmul.f32 %v1896, 0.020408163
    %v3035 = vmul.f32 %v1899, 0.020408163
    %v3036 = vmul.f32 %v1902, 0.020408163
    %v3037 = vmul.f32 %v1905, 0.020408163
    %v3038 = vmul.f32 %v1908, 0.020408163
    %v3039 = vmul.f32 %v1911, 0.020408163
    %v3040 = vmul.f32 %v1914, 0.020408163
    %v3041 = vmul.f32 %v1917, 0.020408163
    %v3042 = vmul.f32 %v1920, 0.020408163
    %v3043 = vmul.f32 %v1923, 0.020408163
    %v3044 = vmul.f32 %v1926, 0.020408163
    %v3045 = vmul.f32 %v1929, 0.020408163
    %v3046 = vmul.f32 %v1932, 0.020408163
    %v3047 = vmul.f32 %v1935, 0.020408163
    %v3048 = vmul.f32 %v1938, 0.020408163
    %v3049 = vmul.f32 %v1941, 0.020408163
    %v3050 = vmul.f32 %v1944, 0.020408163
    %v3051 = vmul.f32 %v1947, 0.020408163
    %v3052 = vmul.f32 %v1950, 0.020408163
    %v3053 = vmul.f32 %v1953, 0.020408163
    %v3054 = vmul.f32 %v1956, 0.020408163
    %v3055 = vmul.f32 %v1959, 0.020408163
    %v3056 = vmul.f32 %v1962, 0.020408163
    %v3057 = vmul.f32 %v1965, 0.020408163
    %v3058 = vmul.f32 %v1968, 0.020408163
    %v3059 = vmul.f32 %v1971, 0.020408163
    %v3060 = vmul.f32 %v1974, 0.020408163
    %v3061 = vmul.f32 %v1977, 0.020408163
    %v3062 = vmul.f32 %v1980, 0.020408163
    %v3063 = vmul.f32 %v1983, 0.020408163
    %v3064 = vmul.f32 %v1986, 0.020408163
    %v3065 = vmul.f32 %v1989, 0.020408163
    %v3066 = vmul.f32 %v1992, 0.020408163
    %v3067 = vmul.f32 %v1995, 0.020408163
    %v3068 = vmul.f32 %v1998, 0.020408163
    %v3069 = vmul.f32 %v2001, 0.020408163
    %v3070 = vmul.f32 %v2004, 0.020408163
    %v3071 = vmul.f32 %v2007, 0.020408163
    %v3072 = vmul.f32 %v2010, 0.020408163
    %v3073 = vmul.f32 %v2013, 0.020408163
    %v3074 = vmul.f32 %v2016, 0.020408163
    %v3075 = vmul.f32 %v2019, 0.020408163
    %v3076 = vmul.f32 %v2022, 0.020408163
    %v3077 = vmul.f32 %v2025, 0.020408163
    %v3078 = vmul.f32 %v2028, 0.020408163
    %v3079 = vmul.f32 %v2031, 0.020408163
    %v3080 = vmul.f32 %v2034, 0.020408163
    %v3081 = vmul.f32 %v2037, 0.020408163
    %v3082 = vmul.f32 %v2040, 0.020408163
    %v3083 = vmul.f32 %v2043, 0.020408163
    %v3084 = vmul.f32 %v2046, 0.020408163
    %v3085 = vmul.f32 %v2049, 0.020408163
    %v3086 = vmul.f32 %v2052, 0.020408163
    %v3087 = vmul.f32 %v2055, 0.020408163
    %v3088 = vmul.f32 %v2058, 0.020408163
    %v3089 = vmul.f32 %v2061, 0.020408163
    %v3090 = vmul.f32 %v2064, 0.020408163
    %v3091 = vmul.f32 %v2067, 0.020408163
    %v3092 = vmul.f32 %v2070, 0.020408163
    %v3093 = vmul.f32 %v2073, 0.020408163
    %v3094 = vmul.f32 %v2076, 0.020408163
    %v3095 = vmul.f32 %v2079, 0.020408163
    %v3096 = vmul.f32 %v2082, 0.020408163
    %v3097 = vmul.f32 %v2085, 0.020408163
    %v3098 = vmul.f32 %v2088, 0.020408163
    %v3099 = vmul.f32 %v2091, 0.020408163
    %v3100 = vmul.f32 %v2094, 0.020408163
    %v3101 = vmul.f32 %v2097, 0.020408163
    %v3102 = vmul.f32 %v2100, 0.020408163
    %v3103 = vmul.f32 %v2103, 0.020408163
    %v3104 = vmul.f32 %v2106, 0.020408163
    %v3105 = vmul.f32 %v2109, 0.020408163
    %v3106 = vmul.f32 %v2112, 0.020408163
    %v3107 = vmul.f32 %v2115, 0.020408163
    %v3108 = vmul.f32 %v2118, 0.020408163
    %v3109 = vmul.f32 %v2121, 0.020408163
    %v3110 = vmul.f32 %v2124, 0.020408163
    %v3111 = vmul.f32 %v2127, 0.020408163
    %v3112 = vmul.f32 %v2130, 0.020408163
    %v3113 = vmul.f32 %v2133, 0.020408163
    %v3114 = vmul.f32 %v2136, 0.020408163
    %v3115 = vmul.f32 %v2139, 0.020408163
    %v3116 = vmul.f32 %v2142, 0.020408163
    %v3117 = vmul.f32 %v2145, 0.020408163
    %v3118 = vmul.f32 %v2148, 0.020408163
    %v3119 = vmul.f32 %v2151, 0.020408163
    %v3120 = vmul.f32 %v2154, 0.020408163
    %v3121 = vmul.f32 %v2157, 0.020408163
    %v3122 = vmul.f32 %v2160, 0.020408163
    %v3123 = vmul.f32 %v2163, 0.020408163
    %v3124 = vmul.f32 %v2166, 0.020408163
    %v3125 = vmul.f32 %v2169, 0.020408163
    %v3126 = vmul.f32 %v2172, 0.020408163
    %v3127 = vmul.f32 %v2175, 0.020408163
    %v3128 = vmul.f32 %v2178, 0.020408163
    %v3129 = vmul.f32 %v2181, 0.020408163
    %v3130 = vmul.f32 %v2184, 0.020408163
    %v3131 = vmul.f32 %v2187, 0.020408163
    %v3132 = vmul.f32 %v2190, 0.020408163
    %v3133 = vmul.f32 %v2193, 0.020408163
    %v3134 = vmul.f32 %v2196, 0.020408163
    %v3135 = vmul.f32 %v2199, 0.020408163
    %v3136 = vmul.f32 %v2202, 0.020408163
    %v3137 = vmul.f32 %v2205, 0.020408163
    %v3138 = vmul.f32 %v2208, 0.020408163
    %v3139 = vmul.f32 %v2211, 0.020408163
    %v3140 = vmul.f32 %v2214, 0.020408163
    %v3141 = vmul.f32 %v2217, 0.020408163
    %v3142 = vmul.f32 %v2220, 0.020408163
    %v3143 = vmul.f32 %v2223, 0.020408163
    %v3144 = vmul.f32 %v2226, 0.020408163
    %v3145 = vmul.f32 %v2229, 0.020408163
    %v3146 = vmul.f32 %v2232, 0.020408163
    %v3147 = vmul.f32 %v2235, 0.020408163
    %v3148 = vmul.f32 %v2238, 0.020408163
    %v3149 = vmul.f32 %v2241, 0.020408163
    %v3150 = vmul.f32 %v2244, 0.020408163
    %v3151 = vmul.f32 %v2247, 0.020408163
    %v3152 = vmul.f32 %v2250, 0.020408163
    %v3153 = vmul.f32 %v2253, 0.020408163
    %v3154 = vmul.f32 %v2256, 0.020408163
    %v3155 = vmul.f32 %v2259, 0.020408163
    %v3156 = vmul.f32 %v2262, 0.020408163
    %v3157 = vmul.f32 %v2265, 0.020408163
    %v3158 = vmul.f32 %v2268, 0.020408163
    %v3159 = vmul.f32 %v2271, 0.020408163
    %v3160 = vmul.f32 %v2274, 0.020408163
    %v3161 = vmul.f32 %v2277, 0.020408163
    %v3162 = vmul.f32 %v2280, 0.020408163
    %v3163 = vmul.f32 %v2283, 0.020408163
    %v3164 = vmul.f32 %v2286, 0.020408163
    %v3165 = vmul.f32 %v2289, 0.020408163
    %v3166 = vmul.f32 %v2292, 0.020408163
    %v3167 = vmul.f32 %v2295, 0.020408163
    %v3168 = vmul.f32 %v2298, 0.020408163
    %v3169 = vmul.f32 %v2301, 0.020408163
    %v3170 = vmul.f32 %v2304, 0.020408163
    %v3171 = vmul.f32 %v2307, 0.020408163
    %v3172 = vmul.f32 %v2310, 0.020408163
    %v3173 = vmul.f32 %v2313, 0.020408163
    %v3174 = vmul.f32 %v2316, 0.020408163
    %v3175 = vmul.f32 %v2319, 0.020408163
    %v3176 = vmul.f32 %v2322, 0.020408163
    %v3177 = vmul.f32 %v2325, 0.020408163
    %v3178 = vmul.f32 %v2328, 0.020408163
    %v3179 = vmul.f32 %v2331, 0.020408163
    %v3180 = vmul.f32 %v2334, 0.020408163
    %v3181 = vmul.f32 %v2337, 0.020408163
    %v3182 = vmul.f32 %v2340, 0.020408163
    %v3183 = vmul.f32 %v2343, 0.020408163
    %v3184 = vmul.f32 %v2346, 0.020408163
    %v3185 = vmul.f32 %v2349, 0.020408163
    %v3186 = vmul.f32 %v2352, 0.020408163
    %v3187 = vmul.f32 %v2355, 0.020408163
    %v3188 = vmul.f32 %v2358, 0.020408163
    %v3189 = vmul.f32 %v2361, 0.020408163
    %v3190 = vmul.f32 %v2364, 0.020408163
    %v3191 = vmul.f32 %v2367, 0.020408163
    %v3192 = vmul.f32 %v2370, 0.020408163
    %v3193 = vmul.f32 %v2373, 0.020408163
    %v3194 = vmul.f32 %v2376, 0.020408163
    %v3195 = vmul.f32 %v2379, 0.020408163
    %v3196 = vmul.f32 %v2382, 0.020408163
    %v3197 = vmul.f32 %v2385, 0.020408163
    %v3198 = vmul.f32 %v2388, 0.020408163
    %v3199 = vmul.f32 %v2391, 0.020408163
    %v3200 = vmul.f32 %v2394, 0.020408163
    %v3201 = vmul.f32 %v2397, 0.020408163
    %v3202 = vmul.f32 %v2400, 0.020408163
    %v3203 = vmul.f32 %v2403, 0.020408163
    %v3204 = vmul.f32 %v2406, 0.020408163
    %v3205 = vmul.f32 %v2409, 0.020408163
    %v3206 = vmul.f32 %v2412, 0.020408163
    %v3207 = vmul.f32 %v2415, 0.020408163
    %v3208 = vmul.f32 %v2418, 0.020408163
    %v3209 = vmul.f32 %v2421, 0.020408163
    %v3210 = vmul.f32 %v2424, 0.020408163
    %v3211 = vmul.f32 %v2427, 0.020408163
    %v3212 = vmul.f32 %v2430, 0.020408163
    %v3213 = vmul.f32 %v2433, 0.020408163
    %v3214 = vmul.f32 %v2436, 0.020408163
    %v3215 = vmul.f32 %v2439, 0.020408163
    %v3216 = vmul.f32 %v2442, 0.020408163
    %v3217 = vmul.f32 %v2445, 0.020408163
    %v3218 = vmul.f32 %v2448, 0.020408163
    %v3219 = vmul.f32 %v2451, 0.020408163
    %v3220 = vmul.f32 %v2454, 0.020408163
    %v3221 = vmul.f32 %v2457, 0.020408163
    %v3222 = vmul.f32 %v2460, 0.020408163
    %v3223 = vmul.f32 %v2463, 0.020408163
    %v3224 = vmul.f32 %v2466, 0.020408163
    %v3225 = vmul.f32 %v2469, 0.020408163
    %v3226 = vmul.f32 %v2472, 0.020408163
    %v3227 = vmul.f32 %v2475, 0.020408163
    %v3228 = vmul.f32 %v2478, 0.020408163
    %v3229 = vmul.f32 %v2481, 0.020408163
    %v3230 = vmul.f32 %v2484, 0.020408163
    %v3231 = vmul.f32 %v2487, 0.020408163
    %v3232 = vmul.f32 %v2490, 0.020408163
    %v3233 = vmul.f32 %v2493, 0.020408163
    %v3234 = vmul.f32 %v2496, 0.020408163
    %v3235 = vmul.f32 %v2499, 0.020408163
    %v3236 = vmul.f32 %v2502, 0.020408163
    %v3237 = vmul.f32 %v2505, 0.020408163
    %v3238 = vmul.f32 %v2508, 0.020408163
    %v3239 = vmul.f32 %v2511, 0.020408163
    %v3240 = vmul.f32 %v2514, 0.020408163
    %v3241 = vmul.f32 %v2517, 0.020408163
    %v3242 = vmul.f32 %v2520, 0.020408163
    %v3243 = vmul.f32 %v2523, 0.020408163
    %v3244 = vmul.f32 %v2526, 0.020408163
    %v3245 = vmul.f32 %v2529, 0.020408163
    %v3246 = vmul.f32 %v2532, 0.020408163
    %v3247 = vmul.f32 %v2535, 0.020408163
    %v3248 = vmul.f32 %v2538, 0.020408163
    %v3249 = vmul.f32 %v2541, 0.020408163
    %v3250 = vmul.f32 %v2544, 0.020408163
    %v3251 = vmul.f32 %v2547, 0.020408163
    %v3252 = vmul.f32 %v2550, 0.020408163
    %v3253 = vmul.f32 %v2553, 0.020408163
    %v3254 = vmul.f32 %v2556, 0.020408163
    %v3255 = vmul.f32 %v2559, 0.020408163
    %v3256 = vmul.f32 %v2562, 0.020408163
    %v3257 = vmul.f32 %v2565, 0.020408163
    %v3258 = vmul.f32 %v2568, 0.020408163
    %v3259 = vmul.f32 %v2571, 0.020408163
    %v3260 = vmul.f32 %v2574, 0.020408163
    %v3261 = vmul.f32 %v2577, 0.020408163
    %v3262 = vmul.f32 %v2580, 0.020408163
    %v3263 = vmul.f32 %v2583, 0.020408163
    %v3264 = vmul.f32 %v2586, 0.020408163
    %v3265 = vmul.f32 %v2589, 0.020408163
    %v3266 = vmul.f32 %v2592, 0.020408163
    %v3267 = vmul.f32 %v2595, 0.020408163
    %v3268 = vmul.f32 %v2598, 0.020408163
    %v3269 = vmul.f32 %v2601, 0.020408163
    %v3270 = vmul.f32 %v2604, 0.020408163
    %v3271 = vmul.f32 %v2607, 0.020408163
    %v3272 = vmul.f32 %v2610, 0.020408163
    %v3273 = vmul.f32 %v2613, 0.020408163
    %v3274 = vmul.f32 %v2616, 0.020408163
    %v3275 = vmul.f32 %v2619, 0.020408163
    %v3276 = vmul.f32 %v2622, 0.020408163
    %v3277 = vmul.f32 %v2625, 0.020408163
    %v3278 = vmul.f32 %v2628, 0.020408163
    %v3279 = vmul.f32 %v2631, 0.020408163
    %v3280 = vmul.f32 %v2634, 0.020408163
    %v3281 = vmul.f32 %v2637, 0.020408163
    %v3282 = vmul.f32 %v2640, 0.020408163
    %v3283 = vmul.f32 %v2643, 0.020408163
    %v3284 = vmul.f32 %v2646, 0.020408163
    %v3285 = vmul.f32 %v2649, 0.020408163
    %v3286 = vmul.f32 %v2652, 0.020408163
    %v3287 = vmul.f32 %v2655, 0.020408163
    %v3288 = vmul.f32 %v2658, 0.020408163
    %v3289 = vmul.f32 %v2661, 0.020408163
    %v3290 = vmul.f32 %v2664, 0.020408163
    %v3291 = vmul.f32 %v2667, 0.020408163
    %v3292 = vmul.f32 %v2670, 0.020408163
    %v3293 = vmul.f32 %v2673, 0.020408163
    %v3294 = vmul.f32 %v2676, 0.020408163
    %v3295 = vmul.f32 %v2679, 0.020408163
    %v3296 = vmul.f32 %v2682, 0.020408163
    %v3297 = vmul.f32 %v2685, 0.020408163
    %v3298 = vmul.f32 %v2688, 0.020408163
    %v3299 = vmul.f32 %v2691, 0.020408163
    %v3300 = vmul.f32 %v2694, 0.020408163
    %v3301 = vmul.f32 %v2697, 0.020408163
    %v3302 = vmul.f32 %v2700, 0.020408163
    %v3303 = vmul.f32 %v2703, 0.020408163
    %v3304 = vmul.f32 %v2706, 0.020408163
    %v3305 = vmul.f32 %v2709, 0.020408163
    %v3306 = vmul.f32 %v2712, 0.020408163
    %v3307 = vmul.f32 %v2715, 0.020408163
    %v3308 = vmul.f32 %v2718, 0.020408163
    %v3309 = vmul.f32 %v2721, 0.020408163
    %v3310 = vmul.f32 %v2724, 0.020408163
    %v3311 = vmul.f32 %v2727, 0.020408163
    %v3312 = vmul.f32 %v2730, 0.020408163
    %v3313 = vmul.f32 %v2733, 0.020408163
    %v3314 = vmul.f32 %v2736, 0.020408163
    %v3315 = vmul.f32 %v2739, 0.020408163
    %v3316 = vmul.f32 %v2742, 0.020408163
    %v3317 = vmul.f32 %v2745, 0.020408163
    %v3318 = vmul.f32 %v2748, 0.020408163
    %v3319 = vmul.f32 %v2751, 0.020408163
    %v3320 = vmul.f32 %v2754, 0.020408163
    %v3321 = vmul.f32 %v2757, 0.020408163
    %v3322 = vmul.f32 %v2760, 0.020408163
    %v3323 = vmul.f32 %v2763, 0.020408163
    %v3324 = vmul.f32 %v2766, 0.020408163
    %v3325 = vmul.f32 %v2769, 0.020408163
    %v3326 = vmul.f32 %v2772, 0.020408163
    %v3327 = vmul.f32 %v2775, 0.020408163
    %v3328 = vld [vmem:[%s1] sm:$0xff]
    %v3329 = vld [vmem:[%s1 + $0x8] sm:$0xff]
    %v3330 = vld [vmem:[%s1 + $0x10] sm:$0xff]
    %v3331 = vld [vmem:[%s1 + $0x18] sm:$0xff]
    %v3332 = vld [vmem:[%s1 + $0x20] sm:$0xff]
    %v3333 = vld [vmem:[%s1 + $0x28] sm:$0xff]
    %v3334 = vld [vmem:[%s1 + $0x30] sm:$0xff]
    %v3335 = vld [vmem:[%s1 + $0x38] sm:$0xff]
    %v3336 = vld [vmem:[%s1 + $0x40] sm:$0xff]
    %v3337 = vld [vmem:[%s1 + $0x48] sm:$0xff]
    %v3338 = vld [vmem:[%s1 + $0x50] sm:$0xff]
    %v3339 = vld [vmem:[%s1 + $0x58] sm:$0xff]
    %v3340 = vld [vmem:[%s1 + $0x60] sm:$0xff]
    %v3341 = vld [vmem:[%s1 + $0x68] sm:$0xff]
    %v3342 = vld [vmem:[%s1 + $0x70] sm:$0xff]
    %v3343 = vld [vmem:[%s1 + $0x78] sm:$0xff]
    %v3344 = vld [vmem:[%s1 + $0x80] sm:$0xff]
    %v3345 = vld [vmem:[%s1 + $0x88] sm:$0xff]
    %v3346 = vld [vmem:[%s1 + $0x90] sm:$0xff]
    %v3347 = vld [vmem:[%s1 + $0x98] sm:$0xff]
    %v3348 = vld [vmem:[%s1 + $0xa0] sm:$0xff]
    %v3349 = vld [vmem:[%s1 + $0xa8] sm:$0xff]
    %v3350 = vld [vmem:[%s1 + $0xb0] sm:$0xff]
    %v3351 = vld [vmem:[%s1 + $0xb8] sm:$0xff]
    %v3352 = vld [vmem:[%s1 + $0xc0] sm:$0xff]
    %v3353 = vld [vmem:[%s1 + $0xc8] sm:$0xff]
    %v3354 = vld [vmem:[%s1 + $0xd0] sm:$0xff]
    %v3355 = vld [vmem:[%s1 + $0xd8] sm:$0xff]
    %v3356 = vld [vmem:[%s1 + $0xe0] sm:$0xff]
    %v3357 = vld [vmem:[%s1 + $0xe8] sm:$0xff]
    %v3358 = vld [vmem:[%s1 + $0xf0] sm:$0xff]
    %v3359 = vld [vmem:[%s1 + $0xf8] sm:$0xff]
    %v3360 = vld [vmem:[%s1 + $0x100] sm:$0xff]
    %v3361 = vld [vmem:[%s1 + $0x108] sm:$0xff]
    %v3362 = vld [vmem:[%s1 + $0x110] sm:$0xff]
    %v3363 = vld [vmem:[%s1 + $0x118] sm:$0xff]
    %v3364 = vld [vmem:[%s1 + $0x120] sm:$0xff]
    %v3365 = vld [vmem:[%s1 + $0x128] sm:$0xff]
    %v3366 = vld [vmem:[%s1 + $0x130] sm:$0xff]
    %v3367 = vld [vmem:[%s1 + $0x138] sm:$0xff]
    %v3368 = vld [vmem:[%s1 + $0x140] sm:$0xff]
    %v3369 = vld [vmem:[%s1 + $0x148] sm:$0xff]
    %v3370 = vld [vmem:[%s1 + $0x150] sm:$0xff]
    %v3371 = vld [vmem:[%s1 + $0x158] sm:$0xff]
    %v3372 = vld [vmem:[%s1 + $0x160] sm:$0xff]
    %v3373 = vld [vmem:[%s1 + $0x168] sm:$0xff]
    %v3374 = vld [vmem:[%s1 + $0x170] sm:$0xff]
    %v3375 = vld [vmem:[%s1 + $0x178] sm:$0xff]
    %v3376 = vld [vmem:[%s1 + $0x180] sm:$0xff]
    %v3377 = vld [vmem:[%s1 + $0x188] sm:$0xff]
    %v3378 = vld [vmem:[%s1 + $0x190] sm:$0xff]
    %v3379 = vld [vmem:[%s1 + $0x198] sm:$0xff]
    %v3380 = vld [vmem:[%s1 + $0x1a0] sm:$0xff]
    %v3381 = vld [vmem:[%s1 + $0x1a8] sm:$0xff]
    %v3382 = vld [vmem:[%s1 + $0x1b0] sm:$0xff]
    %v3383 = vld [vmem:[%s1 + $0x1b8] sm:$0xff]
    %v3384 = vld [vmem:[%s1 + $0x1c0] sm:$0xff]
    %v3385 = vld [vmem:[%s1 + $0x1c8] sm:$0xff]
    %v3386 = vld [vmem:[%s1 + $0x1d0] sm:$0xff]
    %v3387 = vld [vmem:[%s1 + $0x1d8] sm:$0xff]
    %v3388 = vld [vmem:[%s1 + $0x1e0] sm:$0xff]
    %v3389 = vld [vmem:[%s1 + $0x1e8] sm:$0xff]
    %v3390 = vld [vmem:[%s1 + $0x1f0] sm:$0xff]
    %v3391 = vld [vmem:[%s1 + $0x1f8] sm:$0xff]
    %v3392 = vld [vmem:[%s1 + $0x200] sm:$0xff]
    %v3393 = vld [vmem:[%s1 + $0x208] sm:$0xff]
    %v3394 = vld [vmem:[%s1 + $0x210] sm:$0xff]
    %v3395 = vld [vmem:[%s1 + $0x218] sm:$0xff]
    %v3396 = vld [vmem:[%s1 + $0x220] sm:$0xff]
    %v3397 = vld [vmem:[%s1 + $0x228] sm:$0xff]
    %v3398 = vld [vmem:[%s1 + $0x230] sm:$0xff]
    %v3399 = vld [vmem:[%s1 + $0x238] sm:$0xff]
    %v3400 = vld [vmem:[%s1 + $0x240] sm:$0xff]
    %v3401 = vld [vmem:[%s1 + $0x248] sm:$0xff]
    %v3402 = vld [vmem:[%s1 + $0x250] sm:$0xff]
    %v3403 = vld [vmem:[%s1 + $0x258] sm:$0xff]
    %v3404 = vld [vmem:[%s1 + $0x260] sm:$0xff]
    %v3405 = vld [vmem:[%s1 + $0x268] sm:$0xff]
    %v3406 = vld [vmem:[%s1 + $0x270] sm:$0xff]
    %v3407 = vld [vmem:[%s1 + $0x278] sm:$0xff]
    %v3408 = vld [vmem:[%s1 + $0x280] sm:$0xff]
    %v3409 = vld [vmem:[%s1 + $0x288] sm:$0xff]
    %v3410 = vld [vmem:[%s1 + $0x290] sm:$0xff]
    %v3411 = vld [vmem:[%s1 + $0x298] sm:$0xff]
    %v3412 = vld [vmem:[%s1 + $0x2a0] sm:$0xff]
    %v3413 = vld [vmem:[%s1 + $0x2a8] sm:$0xff]
    %v3414 = vld [vmem:[%s1 + $0x2b0] sm:$0xff]
    %v3415 = vld [vmem:[%s1 + $0x2b8] sm:$0xff]
    %v3416 = vld [vmem:[%s1 + $0x2c0] sm:$0xff]
    %v3417 = vld [vmem:[%s1 + $0x2c8] sm:$0xff]
    %v3418 = vld [vmem:[%s1 + $0x2d0] sm:$0xff]
    %v3419 = vld [vmem:[%s1 + $0x2d8] sm:$0xff]
    %v3420 = vld [vmem:[%s1 + $0x2e0] sm:$0xff]
    %v3421 = vld [vmem:[%s1 + $0x2e8] sm:$0xff]
    %v3422 = vld [vmem:[%s1 + $0x2f0] sm:$0xff]
    %v3423 = vld [vmem:[%s1 + $0x2f8] sm:$0xff]
    %v3424 = vld [vmem:[%s1 + $0x300] sm:$0xff]
    %v3425 = vld [vmem:[%s1 + $0x308] sm:$0xff]
    %v3426 = vld [vmem:[%s1 + $0x310] sm:$0xff]
    %v3427 = vld [vmem:[%s1 + $0x318] sm:$0xff]
    %v3428 = vld [vmem:[%s1 + $0x320] sm:$0xff]
    %v3429 = vld [vmem:[%s1 + $0x328] sm:$0xff]
    %v3430 = vld [vmem:[%s1 + $0x330] sm:$0xff]
    %v3431 = vld [vmem:[%s1 + $0x338] sm:$0xff]
    %v3432 = vld [vmem:[%s1 + $0x340] sm:$0xff]
    %v3433 = vld [vmem:[%s1 + $0x348] sm:$0xff]
    %v3434 = vld [vmem:[%s1 + $0x350] sm:$0xff]
    %v3435 = vld [vmem:[%s1 + $0x358] sm:$0xff]
    %v3436 = vld [vmem:[%s1 + $0x360] sm:$0xff]
    %v3437 = vld [vmem:[%s1 + $0x368] sm:$0xff]
    %v3438 = vld [vmem:[%s1 + $0x370] sm:$0xff]
    %v3439 = vld [vmem:[%s1 + $0x378] sm:$0xff]
    %v3440 = vld [vmem:[%s1 + $0x380] sm:$0xff]
    %v3441 = vld [vmem:[%s1 + $0x388] sm:$0xff]
    %v3442 = vld [vmem:[%s1 + $0x390] sm:$0xff]
    %v3443 = vld [vmem:[%s1 + $0x398] sm:$0xff]
    %v3444 = vld [vmem:[%s1 + $0x3a0] sm:$0xff]
    %v3445 = vld [vmem:[%s1 + $0x3a8] sm:$0xff]
    %v3446 = vld [vmem:[%s1 + $0x3b0] sm:$0xff]
    %v3447 = vld [vmem:[%s1 + $0x3b8] sm:$0xff]
    %v3448 = vld [vmem:[%s1 + $0x3c0] sm:$0xff]
    %v3449 = vld [vmem:[%s1 + $0x3c8] sm:$0xff]
    %v3450 = vld [vmem:[%s1 + $0x3d0] sm:$0xff]
    %v3451 = vld [vmem:[%s1 + $0x3d8] sm:$0xff]
    %v3452 = vld [vmem:[%s1 + $0x3e0] sm:$0xff]
    %v3453 = vld [vmem:[%s1 + $0x3e8] sm:$0xff]
    %v3454 = vld [vmem:[%s1 + $0x3f0] sm:$0xff]
    %v3455 = vld [vmem:[%s1 + $0x3f8] sm:$0xff]
    %v3456 = vld [vmem:[%s1 + $0x400] sm:$0xff]
    %v3457 = vld [vmem:[%s1 + $0x408] sm:$0xff]
    %v3458 = vld [vmem:[%s1 + $0x410] sm:$0xff]
    %v3459 = vld [vmem:[%s1 + $0x418] sm:$0xff]
    %v3460 = vld [vmem:[%s1 + $0x420] sm:$0xff]
    %v3461 = vld [vmem:[%s1 + $0x428] sm:$0xff]
    %v3462 = vld [vmem:[%s1 + $0x430] sm:$0xff]
    %v3463 = vld [vmem:[%s1 + $0x438] sm:$0xff]
    %v3464 = vld [vmem:[%s1 + $0x440] sm:$0xff]
    %v3465 = vld [vmem:[%s1 + $0x448] sm:$0xff]
    %v3466 = vld [vmem:[%s1 + $0x450] sm:$0xff]
    %v3467 = vld [vmem:[%s1 + $0x458] sm:$0xff]
    %v3468 = vld [vmem:[%s1 + $0x460] sm:$0xff]
    %v3469 = vld [vmem:[%s1 + $0x468] sm:$0xff]
    %v3470 = vld [vmem:[%s1 + $0x470] sm:$0xff]
    %v3471 = vld [vmem:[%s1 + $0x478] sm:$0xff]
    %v3472 = vld [vmem:[%s1 + $0x480] sm:$0xff]
    %v3473 = vld [vmem:[%s1 + $0x488] sm:$0xff]
    %v3474 = vld [vmem:[%s1 + $0x490] sm:$0xff]
    %v3475 = vld [vmem:[%s1 + $0x498] sm:$0xff]
    %v3476 = vld [vmem:[%s1 + $0x4a0] sm:$0xff]
    %v3477 = vld [vmem:[%s1 + $0x4a8] sm:$0xff]
    %v3478 = vld [vmem:[%s1 + $0x4b0] sm:$0xff]
    %v3479 = vld [vmem:[%s1 + $0x4b8] sm:$0xff]
    %v3480 = vld [vmem:[%s1 + $0x4c0] sm:$0xff]
    %v3481 = vld [vmem:[%s1 + $0x4c8] sm:$0xff]
    %v3482 = vld [vmem:[%s1 + $0x4d0] sm:$0xff]
    %v3483 = vld [vmem:[%s1 + $0x4d8] sm:$0xff]
    %v3484 = vld [vmem:[%s1 + $0x4e0] sm:$0xff]
    %v3485 = vld [vmem:[%s1 + $0x4e8] sm:$0xff]
    %v3486 = vld [vmem:[%s1 + $0x4f0] sm:$0xff]
    %v3487 = vld [vmem:[%s1 + $0x4f8] sm:$0xff]
    %v3488 = vld [vmem:[%s1 + $0x500] sm:$0xff]
    %v3489 = vld [vmem:[%s1 + $0x508] sm:$0xff]
    %v3490 = vld [vmem:[%s1 + $0x510] sm:$0xff]
    %v3491 = vld [vmem:[%s1 + $0x518] sm:$0xff]
    %v3492 = vld [vmem:[%s1 + $0x520] sm:$0xff]
    %v3493 = vld [vmem:[%s1 + $0x528] sm:$0xff]
    %v3494 = vld [vmem:[%s1 + $0x530] sm:$0xff]
    %v3495 = vld [vmem:[%s1 + $0x538] sm:$0xff]
    %v3496 = vld [vmem:[%s1 + $0x540] sm:$0xff]
    %v3497 = vld [vmem:[%s1 + $0x548] sm:$0xff]
    %v3498 = vld [vmem:[%s1 + $0x550] sm:$0xff]
    %v3499 = vld [vmem:[%s1 + $0x558] sm:$0xff]
    %v3500 = vld [vmem:[%s1 + $0x560] sm:$0xff]
    %v3501 = vld [vmem:[%s1 + $0x568] sm:$0xff]
    %v3502 = vld [vmem:[%s1 + $0x570] sm:$0xff]
    %v3503 = vld [vmem:[%s1 + $0x578] sm:$0xff]
    %v3504 = vld [vmem:[%s1 + $0x580] sm:$0xff]
    %v3505 = vld [vmem:[%s1 + $0x588] sm:$0xff]
    %v3506 = vld [vmem:[%s1 + $0x590] sm:$0xff]
    %v3507 = vld [vmem:[%s1 + $0x598] sm:$0xff]
    %v3508 = vld [vmem:[%s1 + $0x5a0] sm:$0xff]
    %v3509 = vld [vmem:[%s1 + $0x5a8] sm:$0xff]
    %v3510 = vld [vmem:[%s1 + $0x5b0] sm:$0xff]
    %v3511 = vld [vmem:[%s1 + $0x5b8] sm:$0xff]
    %v3512 = vld [vmem:[%s1 + $0x5c0] sm:$0xff]
    %v3513 = vld [vmem:[%s1 + $0x5c8] sm:$0xff]
    %v3514 = vld [vmem:[%s1 + $0x5d0] sm:$0xff]
    %v3515 = vld [vmem:[%s1 + $0x5d8] sm:$0xff]
    %v3516 = vld [vmem:[%s1 + $0x5e0] sm:$0xff]
    %v3517 = vld [vmem:[%s1 + $0x5e8] sm:$0xff]
    %v3518 = vld [vmem:[%s1 + $0x5f0] sm:$0xff]
    %v3519 = vld [vmem:[%s1 + $0x5f8] sm:$0xff]
    %v3520 = vld [vmem:[%s1 + $0x600] sm:$0xff]
    %v3521 = vld [vmem:[%s1 + $0x608] sm:$0xff]
    %v3522 = vld [vmem:[%s1 + $0x610] sm:$0xff]
    %v3523 = vld [vmem:[%s1 + $0x618] sm:$0xff]
    %v3524 = vld [vmem:[%s1 + $0x620] sm:$0xff]
    %v3525 = vld [vmem:[%s1 + $0x628] sm:$0xff]
    %v3526 = vld [vmem:[%s1 + $0x630] sm:$0xff]
    %v3527 = vld [vmem:[%s1 + $0x638] sm:$0xff]
    %v3528 = vld [vmem:[%s1 + $0x640] sm:$0xff]
    %v3529 = vld [vmem:[%s1 + $0x648] sm:$0xff]
    %v3530 = vld [vmem:[%s1 + $0x650] sm:$0xff]
    %v3531 = vld [vmem:[%s1 + $0x658] sm:$0xff]
    %v3532 = vld [vmem:[%s1 + $0x660] sm:$0xff]
    %v3533 = vld [vmem:[%s1 + $0x668] sm:$0xff]
    %v3534 = vld [vmem:[%s1 + $0x670] sm:$0xff]
    %v3535 = vld [vmem:[%s1 + $0x678] sm:$0xff]
    %v3536 = vld [vmem:[%s1 + $0x680] sm:$0xff]
    %v3537 = vld [vmem:[%s1 + $0x688] sm:$0xff]
    %v3538 = vld [vmem:[%s1 + $0x690] sm:$0xff]
    %v3539 = vld [vmem:[%s1 + $0x698] sm:$0xff]
    %v3540 = vld [vmem:[%s1 + $0x6a0] sm:$0xff]
    %v3541 = vld [vmem:[%s1 + $0x6a8] sm:$0xff]
    %v3542 = vld [vmem:[%s1 + $0x6b0] sm:$0xff]
    %v3543 = vld [vmem:[%s1 + $0x6b8] sm:$0xff]
    %v3544 = vld [vmem:[%s1 + $0x6c0] sm:$0xff]
    %v3545 = vld [vmem:[%s1 + $0x6c8] sm:$0xff]
    %v3546 = vld [vmem:[%s1 + $0x6d0] sm:$0xff]
    %v3547 = vld [vmem:[%s1 + $0x6d8] sm:$0xff]
    %v3548 = vld [vmem:[%s1 + $0x6e0] sm:$0xff]
    %v3549 = vld [vmem:[%s1 + $0x6e8] sm:$0xff]
    %v3550 = vld [vmem:[%s1 + $0x6f0] sm:$0xff]
    %v3551 = vld [vmem:[%s1 + $0x6f8] sm:$0xff]
    %v3552 = vld [vmem:[%s1 + $0x700] sm:$0xff]
    %v3553 = vld [vmem:[%s1 + $0x708] sm:$0xff]
    %v3554 = vld [vmem:[%s1 + $0x710] sm:$0xff]
    %v3555 = vld [vmem:[%s1 + $0x718] sm:$0xff]
    %v3556 = vld [vmem:[%s1 + $0x720] sm:$0xff]
    %v3557 = vld [vmem:[%s1 + $0x728] sm:$0xff]
    %v3558 = vld [vmem:[%s1 + $0x730] sm:$0xff]
    %v3559 = vld [vmem:[%s1 + $0x738] sm:$0xff]
    %v3560 = vld [vmem:[%s1 + $0x740] sm:$0xff]
    %v3561 = vld [vmem:[%s1 + $0x748] sm:$0xff]
    %v3562 = vld [vmem:[%s1 + $0x750] sm:$0xff]
    %v3563 = vld [vmem:[%s1 + $0x758] sm:$0xff]
    %v3564 = vld [vmem:[%s1 + $0x760] sm:$0xff]
    %v3565 = vld [vmem:[%s1 + $0x768] sm:$0xff]
    %v3566 = vld [vmem:[%s1 + $0x770] sm:$0xff]
    %v3567 = vld [vmem:[%s1 + $0x778] sm:$0xff]
    %v3568 = vld [vmem:[%s1 + $0x780] sm:$0xff]
    %v3569 = vld [vmem:[%s1 + $0x788] sm:$0xff]
    %v3570 = vld [vmem:[%s1 + $0x790] sm:$0xff]
    %v3571 = vld [vmem:[%s1 + $0x798] sm:$0xff]
    %v3572 = vld [vmem:[%s1 + $0x7a0] sm:$0xff]
    %v3573 = vld [vmem:[%s1 + $0x7a8] sm:$0xff]
    %v3574 = vld [vmem:[%s1 + $0x7b0] sm:$0xff]
    %v3575 = vld [vmem:[%s1 + $0x7b8] sm:$0xff]
    %v3576 = vld [vmem:[%s1 + $0x7c0] sm:$0xff]
    %v3577 = vld [vmem:[%s1 + $0x7c8] sm:$0xff]
    %v3578 = vld [vmem:[%s1 + $0x7d0] sm:$0xff]
    %v3579 = vld [vmem:[%s1 + $0x7d8] sm:$0xff]
    %v3580 = vld [vmem:[%s1 + $0x7e0] sm:$0xff]
    %v3581 = vld [vmem:[%s1 + $0x7e8] sm:$0xff]
    %v3582 = vld [vmem:[%s1 + $0x7f0] sm:$0xff]
    %v3583 = vld [vmem:[%s1 + $0x7f8] sm:$0xff]
    %v3584 = vld [vmem:[%s1 + $0x800] sm:$0xff]
    %v3585 = vld [vmem:[%s1 + $0x808] sm:$0xff]
    %v3586 = vld [vmem:[%s1 + $0x810] sm:$0xff]
    %v3587 = vld [vmem:[%s1 + $0x818] sm:$0xff]
    %v3588 = vld [vmem:[%s1 + $0x820] sm:$0xff]
    %v3589 = vld [vmem:[%s1 + $0x828] sm:$0xff]
    %v3590 = vld [vmem:[%s1 + $0x830] sm:$0xff]
    %v3591 = vld [vmem:[%s1 + $0x838] sm:$0xff]
    %v3592 = vld [vmem:[%s1 + $0x840] sm:$0xff]
    %v3593 = vld [vmem:[%s1 + $0x848] sm:$0xff]
    %v3594 = vld [vmem:[%s1 + $0x850] sm:$0xff]
    %v3595 = vld [vmem:[%s1 + $0x858] sm:$0xff]
    %v3596 = vld [vmem:[%s1 + $0x860] sm:$0xff]
    %v3597 = vld [vmem:[%s1 + $0x868] sm:$0xff]
    %v3598 = vld [vmem:[%s1 + $0x870] sm:$0xff]
    %v3599 = vld [vmem:[%s1 + $0x878] sm:$0xff]
    %v3600 = vld [vmem:[%s1 + $0x880] sm:$0xff]
    %v3601 = vld [vmem:[%s1 + $0x888] sm:$0xff]
    %v3602 = vld [vmem:[%s1 + $0x890] sm:$0xff]
    %v3603 = vld [vmem:[%s1 + $0x898] sm:$0xff]
    %v3604 = vld [vmem:[%s2] sm:$0x1]
    %v3606 = vperm.slane %v3604, 0
    %v4160 = vlaneseq
    %v4161 = vand.u32 %v4160, 127
    %v4162 = vperm.slane %v2776, %v4161
    %v4163 = vadd.s32 %v4161, 4294967288
    %v4164 = vperm.slane %v2777, %v4163
    %vm4165 = vcmask 130112
    %v4166 = vsel %vm4165, %v4164, %v4162
    %v4167 = vadd.s32 %v4161, 4294967280
    %v4168 = vperm.slane %v2778, %v4167
    %vm4169 = vcmask 195712
    %v4170 = vsel %vm4169, %v4168, %v4166
    %v4171 = vadd.s32 %v4161, 4294967272
    %v4172 = vperm.slane %v2779, %v4171
    %vm4173 = vcmask 261312
    %v4174 = vsel %vm4173, %v4172, %v4170
    %v4175 = vadd.s32 %v4161, 4294967264
    %v4176 = vperm.slane %v2780, %v4175
    %vm4177 = vcmask 326912
    %v4178 = vsel %vm4177, %v4176, %v4174
    %v4179 = vadd.s32 %v4161, 4294967256
    %v4180 = vperm.slane %v2781, %v4179
    %vm4181 = vcmask 392512
    %v4182 = vsel %vm4181, %v4180, %v4178
    %v4183 = vadd.s32 %v4161, 4294967248
    %v4184 = vperm.slane %v2782, %v4183
    %vm4185 = vcmask 458112
    %v4186 = vsel %vm4185, %v4184, %v4182
    %v4187 = vadd.s32 %v4161, 4294967240
    %v4188 = vperm.slane %v2783, %v4187
    %vm4189 = vcmask 523712
    %v4190 = vsel %vm4189, %v4188, %v4186
    %v4191 = vadd.s32 %v4161, 4294967232
    %v4192 = vperm.slane %v2784, %v4191
    %vm4193 = vcmask 589312
    %v4194 = vsel %vm4193, %v4192, %v4190
    %v4195 = vadd.s32 %v4161, 4294967224
    %v4196 = vperm.slane %v2785, %v4195
    %vm4197 = vcmask 654912
    %v4198 = vsel %vm4197, %v4196, %v4194
    %v4199 = vadd.s32 %v4161, 4294967216
    %v4200 = vperm.slane %v2786, %v4199
    %vm4201 = vcmask 720512
    %v4202 = vsel %vm4201, %v4200, %v4198
    %v4203 = vadd.s32 %v4161, 4294967208
    %v4204 = vperm.slane %v2787, %v4203
    %vm4205 = vcmask 786112
    %v4206 = vsel %vm4205, %v4204, %v4202
    %v4207 = vadd.s32 %v4161, 4294967200
    %v4208 = vperm.slane %v2788, %v4207
    %vm4209 = vcmask 851712
    %v4210 = vsel %vm4209, %v4208, %v4206
    %v4211 = vadd.s32 %v4161, 4294967192
    %v4212 = vperm.slane %v2789, %v4211
    %vm4213 = vcmask 917312
    %v4214 = vsel %vm4213, %v4212, %v4210
    %v4215 = vadd.s32 %v4161, 4294967184
    %v4216 = vperm.slane %v2790, %v4215
    %vm4217 = vcmask 982912
    %v4218 = vsel %vm4217, %v4216, %v4214
    %v4219 = vadd.s32 %v4161, 4294967176
    %v4220 = vperm.slane %v2791, %v4219
    %vm4221 = vcmask 1048512
    %v4222 = vsel %vm4221, %v4220, %v4218
    %v4223 = vperm.slane %v2792, %v4161
    %v4224 = vperm.slane %v2793, %v4163
    %v4225 = vsel %vm4165, %v4224, %v4223
    %v4226 = vperm.slane %v2794, %v4167
    %v4227 = vsel %vm4169, %v4226, %v4225
    %v4228 = vperm.slane %v2795, %v4171
    %v4229 = vsel %vm4173, %v4228, %v4227
    %v4230 = vperm.slane %v2796, %v4175
    %v4231 = vsel %vm4177, %v4230, %v4229
    %v4232 = vperm.slane %v2797, %v4179
    %v4233 = vsel %vm4181, %v4232, %v4231
    %v4234 = vperm.slane %v2798, %v4183
    %v4235 = vsel %vm4185, %v4234, %v4233
    %v4236 = vperm.slane %v2799, %v4187
    %v4237 = vsel %vm4189, %v4236, %v4235
    %v4238 = vperm.slane %v2800, %v4191
    %v4239 = vsel %vm4193, %v4238, %v4237
    %v4240 = vperm.slane %v2801, %v4195
    %v4241 = vsel %vm4197, %v4240, %v4239
    %v4242 = vperm.slane %v2802, %v4199
    %v4243 = vsel %vm4201, %v4242, %v4241
    %v4244 = vperm.slane %v2803, %v4203
    %v4245 = vsel %vm4205, %v4244, %v4243
    %v4246 = vperm.slane %v2804, %v4207
    %v4247 = vsel %vm4209, %v4246, %v4245
    %v4248 = vperm.slane %v2805, %v4211
    %v4249 = vsel %vm4213, %v4248, %v4247
    %v4250 = vperm.slane %v2806, %v4215
    %v4251 = vsel %vm4217, %v4250, %v4249
    %v4252 = vperm.slane %v2807, %v4219
    %v4253 = vsel %vm4221, %v4252, %v4251
    %v4254 = vperm.slane %v2808, %v4161
    %v4255 = vperm.slane %v2809, %v4163
    %v4256 = vsel %vm4165, %v4255, %v4254
    %v4257 = vperm.slane %v2810, %v4167
    %v4258 = vsel %vm4169, %v4257, %v4256
    %v4259 = vperm.slane %v2811, %v4171
    %v4260 = vsel %vm4173, %v4259, %v4258
    %v4261 = vperm.slane %v2812, %v4175
    %v4262 = vsel %vm4177, %v4261, %v4260
    %v4263 = vperm.slane %v2813, %v4179
    %v4264 = vsel %vm4181, %v4263, %v4262
    %v4265 = vperm.slane %v2814, %v4183
    %v4266 = vsel %vm4185, %v4265, %v4264
    %v4267 = vperm.slane %v2815, %v4187
    %v4268 = vsel %vm4189, %v4267, %v4266
    %v4269 = vperm.slane %v2816, %v4191
    %v4270 = vsel %vm4193, %v4269, %v4268
    %v4271 = vperm.slane %v2817, %v4195
    %v4272 = vsel %vm4197, %v4271, %v4270
    %v4273 = vperm.slane %v2818, %v4199
    %v4274 = vsel %vm4201, %v4273, %v4272
    %v4275 = vperm.slane %v2819, %v4203
    %v4276 = vsel %vm4205, %v4275, %v4274
    %v4277 = vperm.slane %v2820, %v4207
    %v4278 = vsel %vm4209, %v4277, %v4276
    %v4279 = vperm.slane %v2821, %v4211
    %v4280 = vsel %vm4213, %v4279, %v4278
    %v4281 = vperm.slane %v2822, %v4215
    %v4282 = vsel %vm4217, %v4281, %v4280
    %v4283 = vperm.slane %v2823, %v4219
    %v4284 = vsel %vm4221, %v4283, %v4282
    %v4285 = vperm.slane %v2824, %v4161
    %v4286 = vperm.slane %v2825, %v4163
    %v4287 = vsel %vm4165, %v4286, %v4285
    %v4288 = vperm.slane %v2826, %v4167
    %v4289 = vsel %vm4169, %v4288, %v4287
    %v4290 = vperm.slane %v2827, %v4171
    %v4291 = vsel %vm4173, %v4290, %v4289
    %v4292 = vperm.slane %v2828, %v4175
    %v4293 = vsel %vm4177, %v4292, %v4291
    %v4294 = vperm.slane %v2829, %v4179
    %v4295 = vsel %vm4181, %v4294, %v4293
    %v4296 = vperm.slane %v2830, %v4183
    %v4297 = vsel %vm4185, %v4296, %v4295
    %v4298 = vperm.slane %v2831, %v4187
    %v4299 = vsel %vm4189, %v4298, %v4297
    %v4300 = vperm.slane %v2832, %v4191
    %v4301 = vsel %vm4193, %v4300, %v4299
    %v4302 = vperm.slane %v2833, %v4195
    %v4303 = vsel %vm4197, %v4302, %v4301
    %v4304 = vperm.slane %v2834, %v4199
    %v4305 = vsel %vm4201, %v4304, %v4303
    %v4306 = vperm.slane %v2835, %v4203
    %v4307 = vsel %vm4205, %v4306, %v4305
    %v4308 = vperm.slane %v2836, %v4207
    %v4309 = vsel %vm4209, %v4308, %v4307
    %v4310 = vperm.slane %v2837, %v4211
    %v4311 = vsel %vm4213, %v4310, %v4309
    %v4312 = vperm.slane %v2838, %v4215
    %v4313 = vsel %vm4217, %v4312, %v4311
    %v4314 = vperm.slane %v2839, %v4219
    %v4315 = vsel %vm4221, %v4314, %v4313
    %v4316 = vperm.slane %v2840, %v4161
    %v4317 = vperm.slane %v2841, %v4163
    %v4318 = vsel %vm4165, %v4317, %v4316
    %v4319 = vperm.slane %v2842, %v4167
    %v4320 = vsel %vm4169, %v4319, %v4318
    %v4321 = vperm.slane %v2843, %v4171
    %v4322 = vsel %vm4173, %v4321, %v4320
    %v4323 = vperm.slane %v2844, %v4175
    %v4324 = vsel %vm4177, %v4323, %v4322
    %v4325 = vperm.slane %v2845, %v4179
    %v4326 = vsel %vm4181, %v4325, %v4324
    %v4327 = vperm.slane %v2846, %v4183
    %v4328 = vsel %vm4185, %v4327, %v4326
    %v4329 = vperm.slane %v2847, %v4187
    %v4330 = vsel %vm4189, %v4329, %v4328
    %v4331 = vperm.slane %v2848, %v4191
    %v4332 = vsel %vm4193, %v4331, %v4330
    %v4333 = vperm.slane %v2849, %v4195
    %v4334 = vsel %vm4197, %v4333, %v4332
    %v4335 = vperm.slane %v2850, %v4199
    %v4336 = vsel %vm4201, %v4335, %v4334
    %v4337 = vperm.slane %v2851, %v4203
    %v4338 = vsel %vm4205, %v4337, %v4336
    %v4339 = vperm.slane %v2852, %v4207
    %v4340 = vsel %vm4209, %v4339, %v4338
    %v4341 = vperm.slane %v2853, %v4211
    %v4342 = vsel %vm4213, %v4341, %v4340
    %v4343 = vperm.slane %v2854, %v4215
    %v4344 = vsel %vm4217, %v4343, %v4342
    %v4345 = vperm.slane %v2855, %v4219
    %v4346 = vsel %vm4221, %v4345, %v4344
    %v4347 = vperm.slane %v2856, %v4161
    %v4348 = vperm.slane %v2857, %v4163
    %v4349 = vsel %vm4165, %v4348, %v4347
    %v4350 = vperm.slane %v2858, %v4167
    %v4351 = vsel %vm4169, %v4350, %v4349
    %v4352 = vperm.slane %v2859, %v4171
    %v4353 = vsel %vm4173, %v4352, %v4351
    %v4354 = vperm.slane %v2860, %v4175
    %v4355 = vsel %vm4177, %v4354, %v4353
    %v4356 = vperm.slane %v2861, %v4179
    %v4357 = vsel %vm4181, %v4356, %v4355
    %v4358 = vperm.slane %v2862, %v4183
    %v4359 = vsel %vm4185, %v4358, %v4357
    %v4360 = vperm.slane %v2863, %v4187
    %v4361 = vsel %vm4189, %v4360, %v4359
    %v4362 = vperm.slane %v2864, %v4191
    %v4363 = vsel %vm4193, %v4362, %v4361
    %v4364 = vperm.slane %v2865, %v4195
    %v4365 = vsel %vm4197, %v4364, %v4363
    %v4366 = vperm.slane %v2866, %v4199
    %v4367 = vsel %vm4201, %v4366, %v4365
    %v4368 = vperm.slane %v2867, %v4203
    %v4369 = vsel %vm4205, %v4368, %v4367
    %v4370 = vperm.slane %v2868, %v4207
    %v4371 = vsel %vm4209, %v4370, %v4369
    %v4372 = vperm.slane %v2869, %v4211
    %v4373 = vsel %vm4213, %v4372, %v4371
    %v4374 = vperm.slane %v2870, %v4215
    %v4375 = vsel %vm4217, %v4374, %v4373
    %v4376 = vperm.slane %v2871, %v4219
    %v4377 = vsel %vm4221, %v4376, %v4375
    %v4378 = vperm.slane %v2872, %v4161
    %v4379 = vperm.slane %v2873, %v4163
    %v4380 = vsel %vm4165, %v4379, %v4378
    %v4381 = vperm.slane %v2874, %v4167
    %v4382 = vsel %vm4169, %v4381, %v4380
    %v4383 = vperm.slane %v2875, %v4171
    %v4384 = vsel %vm4173, %v4383, %v4382
    %v4385 = vperm.slane %v2876, %v4175
    %v4386 = vsel %vm4177, %v4385, %v4384
    %v4387 = vperm.slane %v2877, %v4179
    %v4388 = vsel %vm4181, %v4387, %v4386
    %v4389 = vperm.slane %v2878, %v4183
    %v4390 = vsel %vm4185, %v4389, %v4388
    %v4391 = vperm.slane %v2879, %v4187
    %v4392 = vsel %vm4189, %v4391, %v4390
    %v4393 = vperm.slane %v2880, %v4191
    %v4394 = vsel %vm4193, %v4393, %v4392
    %v4395 = vperm.slane %v2881, %v4195
    %v4396 = vsel %vm4197, %v4395, %v4394
    %v4397 = vperm.slane %v2882, %v4199
    %v4398 = vsel %vm4201, %v4397, %v4396
    %v4399 = vperm.slane %v2883, %v4203
    %v4400 = vsel %vm4205, %v4399, %v4398
    %v4401 = vperm.slane %v2884, %v4207
    %v4402 = vsel %vm4209, %v4401, %v4400
    %v4403 = vperm.slane %v2885, %v4211
    %v4404 = vsel %vm4213, %v4403, %v4402
    %v4405 = vperm.slane %v2886, %v4215
    %v4406 = vsel %vm4217, %v4405, %v4404
    %v4407 = vperm.slane %v2887, %v4219
    %v4408 = vsel %vm4221, %v4407, %v4406
    %v4409 = vperm.slane %v2888, %v4161
    %v4410 = vperm.slane %v2889, %v4163
    %v4411 = vsel %vm4165, %v4410, %v4409
    %v4412 = vperm.slane %v2890, %v4167
    %v4413 = vsel %vm4169, %v4412, %v4411
    %v4414 = vperm.slane %v2891, %v4171
    %v4415 = vsel %vm4173, %v4414, %v4413
    %v4416 = vperm.slane %v2892, %v4175
    %v4417 = vsel %vm4177, %v4416, %v4415
    %v4418 = vperm.slane %v2893, %v4179
    %v4419 = vsel %vm4181, %v4418, %v4417
    %v4420 = vperm.slane %v2894, %v4183
    %v4421 = vsel %vm4185, %v4420, %v4419
    %v4422 = vperm.slane %v2895, %v4187
    %v4423 = vsel %vm4189, %v4422, %v4421
    %v4424 = vperm.slane %v2896, %v4191
    %v4425 = vsel %vm4193, %v4424, %v4423
    %v4426 = vperm.slane %v2897, %v4195
    %v4427 = vsel %vm4197, %v4426, %v4425
    %v4428 = vperm.slane %v2898, %v4199
    %v4429 = vsel %vm4201, %v4428, %v4427
    %v4430 = vperm.slane %v2899, %v4203
    %v4431 = vsel %vm4205, %v4430, %v4429
    %v4432 = vperm.slane %v2900, %v4207
    %v4433 = vsel %vm4209, %v4432, %v4431
    %v4434 = vperm.slane %v2901, %v4211
    %v4435 = vsel %vm4213, %v4434, %v4433
    %v4436 = vperm.slane %v2902, %v4215
    %v4437 = vsel %vm4217, %v4436, %v4435
    %v4438 = vperm.slane %v2903, %v4219
    %v4439 = vsel %vm4221, %v4438, %v4437
    %v4440 = vperm.slane %v2904, %v4161
    %v4441 = vperm.slane %v2905, %v4163
    %v4442 = vsel %vm4165, %v4441, %v4440
    %v4443 = vperm.slane %v2906, %v4167
    %v4444 = vsel %vm4169, %v4443, %v4442
    %v4445 = vperm.slane %v2907, %v4171
    %v4446 = vsel %vm4173, %v4445, %v4444
    %v4447 = vperm.slane %v2908, %v4175
    %v4448 = vsel %vm4177, %v4447, %v4446
    %v4449 = vperm.slane %v2909, %v4179
    %v4450 = vsel %vm4181, %v4449, %v4448
    %v4451 = vperm.slane %v2910, %v4183
    %v4452 = vsel %vm4185, %v4451, %v4450
    %v4453 = vperm.slane %v2911, %v4187
    %v4454 = vsel %vm4189, %v4453, %v4452
    %v4455 = vperm.slane %v2912, %v4191
    %v4456 = vsel %vm4193, %v4455, %v4454
    %v4457 = vperm.slane %v2913, %v4195
    %v4458 = vsel %vm4197, %v4457, %v4456
    %v4459 = vperm.slane %v2914, %v4199
    %v4460 = vsel %vm4201, %v4459, %v4458
    %v4461 = vperm.slane %v2915, %v4203
    %v4462 = vsel %vm4205, %v4461, %v4460
    %v4463 = vperm.slane %v2916, %v4207
    %v4464 = vsel %vm4209, %v4463, %v4462
    %v4465 = vperm.slane %v2917, %v4211
    %v4466 = vsel %vm4213, %v4465, %v4464
    %v4467 = vperm.slane %v2918, %v4215
    %v4468 = vsel %vm4217, %v4467, %v4466
    %v4469 = vperm.slane %v2919, %v4219
    %v4470 = vsel %vm4221, %v4469, %v4468
    %v4471 = vperm.slane %v2920, %v4161
    %v4472 = vperm.slane %v2921, %v4163
    %v4473 = vsel %vm4165, %v4472, %v4471
    %v4474 = vperm.slane %v2922, %v4167
    %v4475 = vsel %vm4169, %v4474, %v4473
    %v4476 = vperm.slane %v2923, %v4171
    %v4477 = vsel %vm4173, %v4476, %v4475
    %v4478 = vperm.slane %v2924, %v4175
    %v4479 = vsel %vm4177, %v4478, %v4477
    %v4480 = vperm.slane %v2925, %v4179
    %v4481 = vsel %vm4181, %v4480, %v4479
    %v4482 = vperm.slane %v2926, %v4183
    %v4483 = vsel %vm4185, %v4482, %v4481
    %v4484 = vperm.slane %v2927, %v4187
    %v4485 = vsel %vm4189, %v4484, %v4483
    %v4486 = vperm.slane %v2928, %v4191
    %v4487 = vsel %vm4193, %v4486, %v4485
    %v4488 = vperm.slane %v2929, %v4195
    %v4489 = vsel %vm4197, %v4488, %v4487
    %v4490 = vperm.slane %v2930, %v4199
    %v4491 = vsel %vm4201, %v4490, %v4489
    %v4492 = vperm.slane %v2931, %v4203
    %v4493 = vsel %vm4205, %v4492, %v4491
    %v4494 = vperm.slane %v2932, %v4207
    %v4495 = vsel %vm4209, %v4494, %v4493
    %v4496 = vperm.slane %v2933, %v4211
    %v4497 = vsel %vm4213, %v4496, %v4495
    %v4498 = vperm.slane %v2934, %v4215
    %v4499 = vsel %vm4217, %v4498, %v4497
    %v4500 = vperm.slane %v2935, %v4219
    %v4501 = vsel %vm4221, %v4500, %v4499
    %v4502 = vperm.slane %v2936, %v4161
    %v4503 = vperm.slane %v2937, %v4163
    %v4504 = vsel %vm4165, %v4503, %v4502
    %v4505 = vperm.slane %v2938, %v4167
    %v4506 = vsel %vm4169, %v4505, %v4504
    %v4507 = vperm.slane %v2939, %v4171
    %v4508 = vsel %vm4173, %v4507, %v4506
    %v4509 = vperm.slane %v2940, %v4175
    %v4510 = vsel %vm4177, %v4509, %v4508
    %v4511 = vperm.slane %v2941, %v4179
    %v4512 = vsel %vm4181, %v4511, %v4510
    %v4513 = vperm.slane %v2942, %v4183
    %v4514 = vsel %vm4185, %v4513, %v4512
    %v4515 = vperm.slane %v2943, %v4187
    %v4516 = vsel %vm4189, %v4515, %v4514
    %v4517 = vperm.slane %v2944, %v4191
    %v4518 = vsel %vm4193, %v4517, %v4516
    %v4519 = vperm.slane %v2945, %v4195
    %v4520 = vsel %vm4197, %v4519, %v4518
    %v4521 = vperm.slane %v2946, %v4199
    %v4522 = vsel %vm4201, %v4521, %v4520
    %v4523 = vperm.slane %v2947, %v4203
    %v4524 = vsel %vm4205, %v4523, %v4522
    %v4525 = vperm.slane %v2948, %v4207
    %v4526 = vsel %vm4209, %v4525, %v4524
    %v4527 = vperm.slane %v2949, %v4211
    %v4528 = vsel %vm4213, %v4527, %v4526
    %v4529 = vperm.slane %v2950, %v4215
    %v4530 = vsel %vm4217, %v4529, %v4528
    %v4531 = vperm.slane %v2951, %v4219
    %v4532 = vsel %vm4221, %v4531, %v4530
    %v4533 = vperm.slane %v2952, %v4161
    %v4534 = vperm.slane %v2953, %v4163
    %v4535 = vsel %vm4165, %v4534, %v4533
    %v4536 = vperm.slane %v2954, %v4167
    %v4537 = vsel %vm4169, %v4536, %v4535
    %v4538 = vperm.slane %v2955, %v4171
    %v4539 = vsel %vm4173, %v4538, %v4537
    %v4540 = vperm.slane %v2956, %v4175
    %v4541 = vsel %vm4177, %v4540, %v4539
    %v4542 = vperm.slane %v2957, %v4179
    %v4543 = vsel %vm4181, %v4542, %v4541
    %v4544 = vperm.slane %v2958, %v4183
    %v4545 = vsel %vm4185, %v4544, %v4543
    %v4546 = vperm.slane %v2959, %v4187
    %v4547 = vsel %vm4189, %v4546, %v4545
    %v4548 = vperm.slane %v2960, %v4191
    %v4549 = vsel %vm4193, %v4548, %v4547
    %v4550 = vperm.slane %v2961, %v4195
    %v4551 = vsel %vm4197, %v4550, %v4549
    %v4552 = vperm.slane %v2962, %v4199
    %v4553 = vsel %vm4201, %v4552, %v4551
    %v4554 = vperm.slane %v2963, %v4203
    %v4555 = vsel %vm4205, %v4554, %v4553
    %v4556 = vperm.slane %v2964, %v4207
    %v4557 = vsel %vm4209, %v4556, %v4555
    %v4558 = vperm.slane %v2965, %v4211
    %v4559 = vsel %vm4213, %v4558, %v4557
    %v4560 = vperm.slane %v2966, %v4215
    %v4561 = vsel %vm4217, %v4560, %v4559
    %v4562 = vperm.slane %v2967, %v4219
    %v4563 = vsel %vm4221, %v4562, %v4561
    %v4564 = vperm.slane %v2968, %v4161
    %v4565 = vperm.slane %v2969, %v4163
    %v4566 = vsel %vm4165, %v4565, %v4564
    %v4567 = vperm.slane %v2970, %v4167
    %v4568 = vsel %vm4169, %v4567, %v4566
    %v4569 = vperm.slane %v2971, %v4171
    %v4570 = vsel %vm4173, %v4569, %v4568
    %v4571 = vperm.slane %v2972, %v4175
    %v4572 = vsel %vm4177, %v4571, %v4570
    %v4573 = vperm.slane %v2973, %v4179
    %v4574 = vsel %vm4181, %v4573, %v4572
    %v4575 = vperm.slane %v2974, %v4183
    %v4576 = vsel %vm4185, %v4575, %v4574
    %v4577 = vperm.slane %v2975, %v4187
    %v4578 = vsel %vm4189, %v4577, %v4576
    %v4579 = vperm.slane %v2976, %v4191
    %v4580 = vsel %vm4193, %v4579, %v4578
    %v4581 = vperm.slane %v2977, %v4195
    %v4582 = vsel %vm4197, %v4581, %v4580
    %v4583 = vperm.slane %v2978, %v4199
    %v4584 = vsel %vm4201, %v4583, %v4582
    %v4585 = vperm.slane %v2979, %v4203
    %v4586 = vsel %vm4205, %v4585, %v4584
    %v4587 = vperm.slane %v2980, %v4207
    %v4588 = vsel %vm4209, %v4587, %v4586
    %v4589 = vperm.slane %v2981, %v4211
    %v4590 = vsel %vm4213, %v4589, %v4588
    %v4591 = vperm.slane %v2982, %v4215
    %v4592 = vsel %vm4217, %v4591, %v4590
    %v4593 = vperm.slane %v2983, %v4219
    %v4594 = vsel %vm4221, %v4593, %v4592
    %v4595 = vperm.slane %v2984, %v4161
    %v4596 = vperm.slane %v2985, %v4163
    %v4597 = vsel %vm4165, %v4596, %v4595
    %v4598 = vperm.slane %v2986, %v4167
    %v4599 = vsel %vm4169, %v4598, %v4597
    %v4600 = vperm.slane %v2987, %v4171
    %v4601 = vsel %vm4173, %v4600, %v4599
    %v4602 = vperm.slane %v2988, %v4175
    %v4603 = vsel %vm4177, %v4602, %v4601
    %v4604 = vperm.slane %v2989, %v4179
    %v4605 = vsel %vm4181, %v4604, %v4603
    %v4606 = vperm.slane %v2990, %v4183
    %v4607 = vsel %vm4185, %v4606, %v4605
    %v4608 = vperm.slane %v2991, %v4187
    %v4609 = vsel %vm4189, %v4608, %v4607
    %v4610 = vperm.slane %v2992, %v4191
    %v4611 = vsel %vm4193, %v4610, %v4609
    %v4612 = vperm.slane %v2993, %v4195
    %v4613 = vsel %vm4197, %v4612, %v4611
    %v4614 = vperm.slane %v2994, %v4199
    %v4615 = vsel %vm4201, %v4614, %v4613
    %v4616 = vperm.slane %v2995, %v4203
    %v4617 = vsel %vm4205, %v4616, %v4615
    %v4618 = vperm.slane %v2996, %v4207
    %v4619 = vsel %vm4209, %v4618, %v4617
    %v4620 = vperm.slane %v2997, %v4211
    %v4621 = vsel %vm4213, %v4620, %v4619
    %v4622 = vperm.slane %v2998, %v4215
    %v4623 = vsel %vm4217, %v4622, %v4621
    %v4624 = vperm.slane %v2999, %v4219
    %v4625 = vsel %vm4221, %v4624, %v4623
    %v4626 = vperm.slane %v3000, %v4161
    %v4627 = vperm.slane %v3001, %v4163
    %v4628 = vsel %vm4165, %v4627, %v4626
    %v4629 = vperm.slane %v3002, %v4167
    %v4630 = vsel %vm4169, %v4629, %v4628
    %v4631 = vperm.slane %v3003, %v4171
    %v4632 = vsel %vm4173, %v4631, %v4630
    %v4633 = vperm.slane %v3004, %v4175
    %v4634 = vsel %vm4177, %v4633, %v4632
    %v4635 = vperm.slane %v3005, %v4179
    %v4636 = vsel %vm4181, %v4635, %v4634
    %v4637 = vperm.slane %v3006, %v4183
    %v4638 = vsel %vm4185, %v4637, %v4636
    %v4639 = vperm.slane %v3007, %v4187
    %v4640 = vsel %vm4189, %v4639, %v4638
    %v4641 = vperm.slane %v3008, %v4191
    %v4642 = vsel %vm4193, %v4641, %v4640
    %v4643 = vperm.slane %v3009, %v4195
    %v4644 = vsel %vm4197, %v4643, %v4642
    %v4645 = vperm.slane %v3010, %v4199
    %v4646 = vsel %vm4201, %v4645, %v4644
    %v4647 = vperm.slane %v3011, %v4203
    %v4648 = vsel %vm4205, %v4647, %v4646
    %v4649 = vperm.slane %v3012, %v4207
    %v4650 = vsel %vm4209, %v4649, %v4648
    %v4651 = vperm.slane %v3013, %v4211
    %v4652 = vsel %vm4213, %v4651, %v4650
    %v4653 = vperm.slane %v3014, %v4215
    %v4654 = vsel %vm4217, %v4653, %v4652
    %v4655 = vperm.slane %v3015, %v4219
    %v4656 = vsel %vm4221, %v4655, %v4654
    %v4657 = vperm.slane %v3016, %v4161
    %v4658 = vperm.slane %v3017, %v4163
    %v4659 = vsel %vm4165, %v4658, %v4657
    %v4660 = vperm.slane %v3018, %v4167
    %v4661 = vsel %vm4169, %v4660, %v4659
    %v4662 = vperm.slane %v3019, %v4171
    %v4663 = vsel %vm4173, %v4662, %v4661
    %v4664 = vperm.slane %v3020, %v4175
    %v4665 = vsel %vm4177, %v4664, %v4663
    %v4666 = vperm.slane %v3021, %v4179
    %v4667 = vsel %vm4181, %v4666, %v4665
    %v4668 = vperm.slane %v3022, %v4183
    %v4669 = vsel %vm4185, %v4668, %v4667
    %v4670 = vperm.slane %v3023, %v4187
    %v4671 = vsel %vm4189, %v4670, %v4669
    %v4672 = vperm.slane %v3024, %v4191
    %v4673 = vsel %vm4193, %v4672, %v4671
    %v4674 = vperm.slane %v3025, %v4195
    %v4675 = vsel %vm4197, %v4674, %v4673
    %v4676 = vperm.slane %v3026, %v4199
    %v4677 = vsel %vm4201, %v4676, %v4675
    %v4678 = vperm.slane %v3027, %v4203
    %v4679 = vsel %vm4205, %v4678, %v4677
    %v4680 = vperm.slane %v3028, %v4207
    %v4681 = vsel %vm4209, %v4680, %v4679
    %v4682 = vperm.slane %v3029, %v4211
    %v4683 = vsel %vm4213, %v4682, %v4681
    %v4684 = vperm.slane %v3030, %v4215
    %v4685 = vsel %vm4217, %v4684, %v4683
    %v4686 = vperm.slane %v3031, %v4219
    %v4687 = vsel %vm4221, %v4686, %v4685
    %v4688 = vperm.slane %v3032, %v4161
    %v4689 = vperm.slane %v3033, %v4163
    %v4690 = vsel %vm4165, %v4689, %v4688
    %v4691 = vperm.slane %v3034, %v4167
    %v4692 = vsel %vm4169, %v4691, %v4690
    %v4693 = vperm.slane %v3035, %v4171
    %v4694 = vsel %vm4173, %v4693, %v4692
    %v4695 = vperm.slane %v3036, %v4175
    %v4696 = vsel %vm4177, %v4695, %v4694
    %v4697 = vperm.slane %v3037, %v4179
    %v4698 = vsel %vm4181, %v4697, %v4696
    %v4699 = vperm.slane %v3038, %v4183
    %v4700 = vsel %vm4185, %v4699, %v4698
    %v4701 = vperm.slane %v3039, %v4187
    %v4702 = vsel %vm4189, %v4701, %v4700
    %v4703 = vperm.slane %v3040, %v4191
    %v4704 = vsel %vm4193, %v4703, %v4702
    %v4705 = vperm.slane %v3041, %v4195
    %v4706 = vsel %vm4197, %v4705, %v4704
    %v4707 = vperm.slane %v3042, %v4199
    %v4708 = vsel %vm4201, %v4707, %v4706
    %v4709 = vperm.slane %v3043, %v4203
    %v4710 = vsel %vm4205, %v4709, %v4708
    %v4711 = vperm.slane %v3044, %v4207
    %v4712 = vsel %vm4209, %v4711, %v4710
    %v4713 = vperm.slane %v3045, %v4211
    %v4714 = vsel %vm4213, %v4713, %v4712
    %v4715 = vperm.slane %v3046, %v4215
    %v4716 = vsel %vm4217, %v4715, %v4714
    %v4717 = vperm.slane %v3047, %v4219
    %v4718 = vsel %vm4221, %v4717, %v4716
    %v4719 = vperm.slane %v3048, %v4161
    %v4720 = vperm.slane %v3049, %v4163
    %v4721 = vsel %vm4165, %v4720, %v4719
    %v4722 = vperm.slane %v3050, %v4167
    %v4723 = vsel %vm4169, %v4722, %v4721
    %v4724 = vperm.slane %v3051, %v4171
    %v4725 = vsel %vm4173, %v4724, %v4723
    %v4726 = vperm.slane %v3052, %v4161
    %v4727 = vperm.slane %v3053, %v4163
    %v4728 = vsel %vm4165, %v4727, %v4726
    %v4729 = vperm.slane %v3054, %v4167
    %v4730 = vsel %vm4169, %v4729, %v4728
    %v4731 = vperm.slane %v3055, %v4171
    %v4732 = vsel %vm4173, %v4731, %v4730
    %v4733 = vperm.slane %v3056, %v4175
    %v4734 = vsel %vm4177, %v4733, %v4732
    %v4735 = vperm.slane %v3057, %v4179
    %v4736 = vsel %vm4181, %v4735, %v4734
    %v4737 = vperm.slane %v3058, %v4183
    %v4738 = vsel %vm4185, %v4737, %v4736
    %v4739 = vperm.slane %v3059, %v4187
    %v4740 = vsel %vm4189, %v4739, %v4738
    %v4741 = vperm.slane %v3060, %v4191
    %v4742 = vsel %vm4193, %v4741, %v4740
    %v4743 = vperm.slane %v3061, %v4195
    %v4744 = vsel %vm4197, %v4743, %v4742
    %v4745 = vperm.slane %v3062, %v4199
    %v4746 = vsel %vm4201, %v4745, %v4744
    %v4747 = vperm.slane %v3063, %v4203
    %v4748 = vsel %vm4205, %v4747, %v4746
    %v4749 = vperm.slane %v3064, %v4207
    %v4750 = vsel %vm4209, %v4749, %v4748
    %v4751 = vperm.slane %v3065, %v4211
    %v4752 = vsel %vm4213, %v4751, %v4750
    %v4753 = vperm.slane %v3066, %v4215
    %v4754 = vsel %vm4217, %v4753, %v4752
    %v4755 = vperm.slane %v3067, %v4219
    %v4756 = vsel %vm4221, %v4755, %v4754
    %v4757 = vperm.slane %v3068, %v4161
    %v4758 = vperm.slane %v3069, %v4163
    %v4759 = vsel %vm4165, %v4758, %v4757
    %v4760 = vperm.slane %v3070, %v4167
    %v4761 = vsel %vm4169, %v4760, %v4759
    %v4762 = vperm.slane %v3071, %v4171
    %v4763 = vsel %vm4173, %v4762, %v4761
    %v4764 = vperm.slane %v3072, %v4175
    %v4765 = vsel %vm4177, %v4764, %v4763
    %v4766 = vperm.slane %v3073, %v4179
    %v4767 = vsel %vm4181, %v4766, %v4765
    %v4768 = vperm.slane %v3074, %v4183
    %v4769 = vsel %vm4185, %v4768, %v4767
    %v4770 = vperm.slane %v3075, %v4187
    %v4771 = vsel %vm4189, %v4770, %v4769
    %v4772 = vperm.slane %v3076, %v4191
    %v4773 = vsel %vm4193, %v4772, %v4771
    %v4774 = vperm.slane %v3077, %v4195
    %v4775 = vsel %vm4197, %v4774, %v4773
    %v4776 = vperm.slane %v3078, %v4199
    %v4777 = vsel %vm4201, %v4776, %v4775
    %v4778 = vperm.slane %v3079, %v4203
    %v4779 = vsel %vm4205, %v4778, %v4777
    %v4780 = vperm.slane %v3080, %v4207
    %v4781 = vsel %vm4209, %v4780, %v4779
    %v4782 = vperm.slane %v3081, %v4211
    %v4783 = vsel %vm4213, %v4782, %v4781
    %v4784 = vperm.slane %v3082, %v4215
    %v4785 = vsel %vm4217, %v4784, %v4783
    %v4786 = vperm.slane %v3083, %v4219
    %v4787 = vsel %vm4221, %v4786, %v4785
    %v4788 = vperm.slane %v3084, %v4161
    %v4789 = vperm.slane %v3085, %v4163
    %v4790 = vsel %vm4165, %v4789, %v4788
    %v4791 = vperm.slane %v3086, %v4167
    %v4792 = vsel %vm4169, %v4791, %v4790
    %v4793 = vperm.slane %v3087, %v4171
    %v4794 = vsel %vm4173, %v4793, %v4792
    %v4795 = vperm.slane %v3088, %v4175
    %v4796 = vsel %vm4177, %v4795, %v4794
    %v4797 = vperm.slane %v3089, %v4179
    %v4798 = vsel %vm4181, %v4797, %v4796
    %v4799 = vperm.slane %v3090, %v4183
    %v4800 = vsel %vm4185, %v4799, %v4798
    %v4801 = vperm.slane %v3091, %v4187
    %v4802 = vsel %vm4189, %v4801, %v4800
    %v4803 = vperm.slane %v3092, %v4191
    %v4804 = vsel %vm4193, %v4803, %v4802
    %v4805 = vperm.slane %v3093, %v4195
    %v4806 = vsel %vm4197, %v4805, %v4804
    %v4807 = vperm.slane %v3094, %v4199
    %v4808 = vsel %vm4201, %v4807, %v4806
    %v4809 = vperm.slane %v3095, %v4203
    %v4810 = vsel %vm4205, %v4809, %v4808
    %v4811 = vperm.slane %v3096, %v4207
    %v4812 = vsel %vm4209, %v4811, %v4810
    %v4813 = vperm.slane %v3097, %v4211
    %v4814 = vsel %vm4213, %v4813, %v4812
    %v4815 = vperm.slane %v3098, %v4215
    %v4816 = vsel %vm4217, %v4815, %v4814
    %v4817 = vperm.slane %v3099, %v4219
    %v4818 = vsel %vm4221, %v4817, %v4816
    %v4819 = vperm.slane %v3100, %v4161
    %v4820 = vperm.slane %v3101, %v4163
    %v4821 = vsel %vm4165, %v4820, %v4819
    %v4822 = vperm.slane %v3102, %v4167
    %v4823 = vsel %vm4169, %v4822, %v4821
    %v4824 = vperm.slane %v3103, %v4171
    %v4825 = vsel %vm4173, %v4824, %v4823
    %v4826 = vperm.slane %v3104, %v4175
    %v4827 = vsel %vm4177, %v4826, %v4825
    %v4828 = vperm.slane %v3105, %v4179
    %v4829 = vsel %vm4181, %v4828, %v4827
    %v4830 = vperm.slane %v3106, %v4183
    %v4831 = vsel %vm4185, %v4830, %v4829
    %v4832 = vperm.slane %v3107, %v4187
    %v4833 = vsel %vm4189, %v4832, %v4831
    %v4834 = vperm.slane %v3108, %v4191
    %v4835 = vsel %vm4193, %v4834, %v4833
    %v4836 = vperm.slane %v3109, %v4195
    %v4837 = vsel %vm4197, %v4836, %v4835
    %v4838 = vperm.slane %v3110, %v4199
    %v4839 = vsel %vm4201, %v4838, %v4837
    %v4840 = vperm.slane %v3111, %v4203
    %v4841 = vsel %vm4205, %v4840, %v4839
    %v4842 = vperm.slane %v3112, %v4207
    %v4843 = vsel %vm4209, %v4842, %v4841
    %v4844 = vperm.slane %v3113, %v4211
    %v4845 = vsel %vm4213, %v4844, %v4843
    %v4846 = vperm.slane %v3114, %v4215
    %v4847 = vsel %vm4217, %v4846, %v4845
    %v4848 = vperm.slane %v3115, %v4219
    %v4849 = vsel %vm4221, %v4848, %v4847
    %v4850 = vperm.slane %v3116, %v4161
    %v4851 = vperm.slane %v3117, %v4163
    %v4852 = vsel %vm4165, %v4851, %v4850
    %v4853 = vperm.slane %v3118, %v4167
    %v4854 = vsel %vm4169, %v4853, %v4852
    %v4855 = vperm.slane %v3119, %v4171
    %v4856 = vsel %vm4173, %v4855, %v4854
    %v4857 = vperm.slane %v3120, %v4175
    %v4858 = vsel %vm4177, %v4857, %v4856
    %v4859 = vperm.slane %v3121, %v4179
    %v4860 = vsel %vm4181, %v4859, %v4858
    %v4861 = vperm.slane %v3122, %v4183
    %v4862 = vsel %vm4185, %v4861, %v4860
    %v4863 = vperm.slane %v3123, %v4187
    %v4864 = vsel %vm4189, %v4863, %v4862
    %v4865 = vperm.slane %v3124, %v4191
    %v4866 = vsel %vm4193, %v4865, %v4864
    %v4867 = vperm.slane %v3125, %v4195
    %v4868 = vsel %vm4197, %v4867, %v4866
    %v4869 = vperm.slane %v3126, %v4199
    %v4870 = vsel %vm4201, %v4869, %v4868
    %v4871 = vperm.slane %v3127, %v4203
    %v4872 = vsel %vm4205, %v4871, %v4870
    %v4873 = vperm.slane %v3128, %v4207
    %v4874 = vsel %vm4209, %v4873, %v4872
    %v4875 = vperm.slane %v3129, %v4211
    %v4876 = vsel %vm4213, %v4875, %v4874
    %v4877 = vperm.slane %v3130, %v4215
    %v4878 = vsel %vm4217, %v4877, %v4876
    %v4879 = vperm.slane %v3131, %v4219
    %v4880 = vsel %vm4221, %v4879, %v4878
    %v4881 = vperm.slane %v3132, %v4161
    %v4882 = vperm.slane %v3133, %v4163
    %v4883 = vsel %vm4165, %v4882, %v4881
    %v4884 = vperm.slane %v3134, %v4167
    %v4885 = vsel %vm4169, %v4884, %v4883
    %v4886 = vperm.slane %v3135, %v4171
    %v4887 = vsel %vm4173, %v4886, %v4885
    %v4888 = vperm.slane %v3136, %v4175
    %v4889 = vsel %vm4177, %v4888, %v4887
    %v4890 = vperm.slane %v3137, %v4179
    %v4891 = vsel %vm4181, %v4890, %v4889
    %v4892 = vperm.slane %v3138, %v4183
    %v4893 = vsel %vm4185, %v4892, %v4891
    %v4894 = vperm.slane %v3139, %v4187
    %v4895 = vsel %vm4189, %v4894, %v4893
    %v4896 = vperm.slane %v3140, %v4191
    %v4897 = vsel %vm4193, %v4896, %v4895
    %v4898 = vperm.slane %v3141, %v4195
    %v4899 = vsel %vm4197, %v4898, %v4897
    %v4900 = vperm.slane %v3142, %v4199
    %v4901 = vsel %vm4201, %v4900, %v4899
    %v4902 = vperm.slane %v3143, %v4203
    %v4903 = vsel %vm4205, %v4902, %v4901
    %v4904 = vperm.slane %v3144, %v4207
    %v4905 = vsel %vm4209, %v4904, %v4903
    %v4906 = vperm.slane %v3145, %v4211
    %v4907 = vsel %vm4213, %v4906, %v4905
    %v4908 = vperm.slane %v3146, %v4215
    %v4909 = vsel %vm4217, %v4908, %v4907
    %v4910 = vperm.slane %v3147, %v4219
    %v4911 = vsel %vm4221, %v4910, %v4909
    %v4912 = vperm.slane %v3148, %v4161
    %v4913 = vperm.slane %v3149, %v4163
    %v4914 = vsel %vm4165, %v4913, %v4912
    %v4915 = vperm.slane %v3150, %v4167
    %v4916 = vsel %vm4169, %v4915, %v4914
    %v4917 = vperm.slane %v3151, %v4171
    %v4918 = vsel %vm4173, %v4917, %v4916
    %v4919 = vperm.slane %v3152, %v4175
    %v4920 = vsel %vm4177, %v4919, %v4918
    %v4921 = vperm.slane %v3153, %v4179
    %v4922 = vsel %vm4181, %v4921, %v4920
    %v4923 = vperm.slane %v3154, %v4183
    %v4924 = vsel %vm4185, %v4923, %v4922
    %v4925 = vperm.slane %v3155, %v4187
    %v4926 = vsel %vm4189, %v4925, %v4924
    %v4927 = vperm.slane %v3156, %v4191
    %v4928 = vsel %vm4193, %v4927, %v4926
    %v4929 = vperm.slane %v3157, %v4195
    %v4930 = vsel %vm4197, %v4929, %v4928
    %v4931 = vperm.slane %v3158, %v4199
    %v4932 = vsel %vm4201, %v4931, %v4930
    %v4933 = vperm.slane %v3159, %v4203
    %v4934 = vsel %vm4205, %v4933, %v4932
    %v4935 = vperm.slane %v3160, %v4207
    %v4936 = vsel %vm4209, %v4935, %v4934
    %v4937 = vperm.slane %v3161, %v4211
    %v4938 = vsel %vm4213, %v4937, %v4936
    %v4939 = vperm.slane %v3162, %v4215
    %v4940 = vsel %vm4217, %v4939, %v4938
    %v4941 = vperm.slane %v3163, %v4219
    %v4942 = vsel %vm4221, %v4941, %v4940
    %v4943 = vperm.slane %v3164, %v4161
    %v4944 = vperm.slane %v3165, %v4163
    %v4945 = vsel %vm4165, %v4944, %v4943
    %v4946 = vperm.slane %v3166, %v4167
    %v4947 = vsel %vm4169, %v4946, %v4945
    %v4948 = vperm.slane %v3167, %v4171
    %v4949 = vsel %vm4173, %v4948, %v4947
    %v4950 = vperm.slane %v3168, %v4175
    %v4951 = vsel %vm4177, %v4950, %v4949
    %v4952 = vperm.slane %v3169, %v4179
    %v4953 = vsel %vm4181, %v4952, %v4951
    %v4954 = vperm.slane %v3170, %v4183
    %v4955 = vsel %vm4185, %v4954, %v4953
    %v4956 = vperm.slane %v3171, %v4187
    %v4957 = vsel %vm4189, %v4956, %v4955
    %v4958 = vperm.slane %v3172, %v4191
    %v4959 = vsel %vm4193, %v4958, %v4957
    %v4960 = vperm.slane %v3173, %v4195
    %v4961 = vsel %vm4197, %v4960, %v4959
    %v4962 = vperm.slane %v3174, %v4199
    %v4963 = vsel %vm4201, %v4962, %v4961
    %v4964 = vperm.slane %v3175, %v4203
    %v4965 = vsel %vm4205, %v4964, %v4963
    %v4966 = vperm.slane %v3176, %v4207
    %v4967 = vsel %vm4209, %v4966, %v4965
    %v4968 = vperm.slane %v3177, %v4211
    %v4969 = vsel %vm4213, %v4968, %v4967
    %v4970 = vperm.slane %v3178, %v4215
    %v4971 = vsel %vm4217, %v4970, %v4969
    %v4972 = vperm.slane %v3179, %v4219
    %v4973 = vsel %vm4221, %v4972, %v4971
    %v4974 = vperm.slane %v3180, %v4161
    %v4975 = vperm.slane %v3181, %v4163
    %v4976 = vsel %vm4165, %v4975, %v4974
    %v4977 = vperm.slane %v3182, %v4167
    %v4978 = vsel %vm4169, %v4977, %v4976
    %v4979 = vperm.slane %v3183, %v4171
    %v4980 = vsel %vm4173, %v4979, %v4978
    %v4981 = vperm.slane %v3184, %v4175
    %v4982 = vsel %vm4177, %v4981, %v4980
    %v4983 = vperm.slane %v3185, %v4179
    %v4984 = vsel %vm4181, %v4983, %v4982
    %v4985 = vperm.slane %v3186, %v4183
    %v4986 = vsel %vm4185, %v4985, %v4984
    %v4987 = vperm.slane %v3187, %v4187
    %v4988 = vsel %vm4189, %v4987, %v4986
    %v4989 = vperm.slane %v3188, %v4191
    %v4990 = vsel %vm4193, %v4989, %v4988
    %v4991 = vperm.slane %v3189, %v4195
    %v4992 = vsel %vm4197, %v4991, %v4990
    %v4993 = vperm.slane %v3190, %v4199
    %v4994 = vsel %vm4201, %v4993, %v4992
    %v4995 = vperm.slane %v3191, %v4203
    %v4996 = vsel %vm4205, %v4995, %v4994
    %v4997 = vperm.slane %v3192, %v4207
    %v4998 = vsel %vm4209, %v4997, %v4996
    %v4999 = vperm.slane %v3193, %v4211
    %v5000 = vsel %vm4213, %v4999, %v4998
    %v5001 = vperm.slane %v3194, %v4215
    %v5002 = vsel %vm4217, %v5001, %v5000
    %v5003 = vperm.slane %v3195, %v4219
    %v5004 = vsel %vm4221, %v5003, %v5002
    %v5005 = vperm.slane %v3196, %v4161
    %v5006 = vperm.slane %v3197, %v4163
    %v5007 = vsel %vm4165, %v5006, %v5005
    %v5008 = vperm.slane %v3198, %v4167
    %v5009 = vsel %vm4169, %v5008, %v5007
    %v5010 = vperm.slane %v3199, %v4171
    %v5011 = vsel %vm4173, %v5010, %v5009
    %v5012 = vperm.slane %v3200, %v4175
    %v5013 = vsel %vm4177, %v5012, %v5011
    %v5014 = vperm.slane %v3201, %v4179
    %v5015 = vsel %vm4181, %v5014, %v5013
    %v5016 = vperm.slane %v3202, %v4183
    %v5017 = vsel %vm4185, %v5016, %v5015
    %v5018 = vperm.slane %v3203, %v4187
    %v5019 = vsel %vm4189, %v5018, %v5017
    %v5020 = vperm.slane %v3204, %v4191
    %v5021 = vsel %vm4193, %v5020, %v5019
    %v5022 = vperm.slane %v3205, %v4195
    %v5023 = vsel %vm4197, %v5022, %v5021
    %v5024 = vperm.slane %v3206, %v4199
    %v5025 = vsel %vm4201, %v5024, %v5023
    %v5026 = vperm.slane %v3207, %v4203
    %v5027 = vsel %vm4205, %v5026, %v5025
    %v5028 = vperm.slane %v3208, %v4207
    %v5029 = vsel %vm4209, %v5028, %v5027
    %v5030 = vperm.slane %v3209, %v4211
    %v5031 = vsel %vm4213, %v5030, %v5029
    %v5032 = vperm.slane %v3210, %v4215
    %v5033 = vsel %vm4217, %v5032, %v5031
    %v5034 = vperm.slane %v3211, %v4219
    %v5035 = vsel %vm4221, %v5034, %v5033
    %v5036 = vperm.slane %v3212, %v4161
    %v5037 = vperm.slane %v3213, %v4163
    %v5038 = vsel %vm4165, %v5037, %v5036
    %v5039 = vperm.slane %v3214, %v4167
    %v5040 = vsel %vm4169, %v5039, %v5038
    %v5041 = vperm.slane %v3215, %v4171
    %v5042 = vsel %vm4173, %v5041, %v5040
    %v5043 = vperm.slane %v3216, %v4175
    %v5044 = vsel %vm4177, %v5043, %v5042
    %v5045 = vperm.slane %v3217, %v4179
    %v5046 = vsel %vm4181, %v5045, %v5044
    %v5047 = vperm.slane %v3218, %v4183
    %v5048 = vsel %vm4185, %v5047, %v5046
    %v5049 = vperm.slane %v3219, %v4187
    %v5050 = vsel %vm4189, %v5049, %v5048
    %v5051 = vperm.slane %v3220, %v4191
    %v5052 = vsel %vm4193, %v5051, %v5050
    %v5053 = vperm.slane %v3221, %v4195
    %v5054 = vsel %vm4197, %v5053, %v5052
    %v5055 = vperm.slane %v3222, %v4199
    %v5056 = vsel %vm4201, %v5055, %v5054
    %v5057 = vperm.slane %v3223, %v4203
    %v5058 = vsel %vm4205, %v5057, %v5056
    %v5059 = vperm.slane %v3224, %v4207
    %v5060 = vsel %vm4209, %v5059, %v5058
    %v5061 = vperm.slane %v3225, %v4211
    %v5062 = vsel %vm4213, %v5061, %v5060
    %v5063 = vperm.slane %v3226, %v4215
    %v5064 = vsel %vm4217, %v5063, %v5062
    %v5065 = vperm.slane %v3227, %v4219
    %v5066 = vsel %vm4221, %v5065, %v5064
    %v5067 = vperm.slane %v3228, %v4161
    %v5068 = vperm.slane %v3229, %v4163
    %v5069 = vsel %vm4165, %v5068, %v5067
    %v5070 = vperm.slane %v3230, %v4167
    %v5071 = vsel %vm4169, %v5070, %v5069
    %v5072 = vperm.slane %v3231, %v4171
    %v5073 = vsel %vm4173, %v5072, %v5071
    %v5074 = vperm.slane %v3232, %v4175
    %v5075 = vsel %vm4177, %v5074, %v5073
    %v5076 = vperm.slane %v3233, %v4179
    %v5077 = vsel %vm4181, %v5076, %v5075
    %v5078 = vperm.slane %v3234, %v4183
    %v5079 = vsel %vm4185, %v5078, %v5077
    %v5080 = vperm.slane %v3235, %v4187
    %v5081 = vsel %vm4189, %v5080, %v5079
    %v5082 = vperm.slane %v3236, %v4191
    %v5083 = vsel %vm4193, %v5082, %v5081
    %v5084 = vperm.slane %v3237, %v4195
    %v5085 = vsel %vm4197, %v5084, %v5083
    %v5086 = vperm.slane %v3238, %v4199
    %v5087 = vsel %vm4201, %v5086, %v5085
    %v5088 = vperm.slane %v3239, %v4203
    %v5089 = vsel %vm4205, %v5088, %v5087
    %v5090 = vperm.slane %v3240, %v4207
    %v5091 = vsel %vm4209, %v5090, %v5089
    %v5092 = vperm.slane %v3241, %v4211
    %v5093 = vsel %vm4213, %v5092, %v5091
    %v5094 = vperm.slane %v3242, %v4215
    %v5095 = vsel %vm4217, %v5094, %v5093
    %v5096 = vperm.slane %v3243, %v4219
    %v5097 = vsel %vm4221, %v5096, %v5095
    %v5098 = vperm.slane %v3244, %v4161
    %v5099 = vperm.slane %v3245, %v4163
    %v5100 = vsel %vm4165, %v5099, %v5098
    %v5101 = vperm.slane %v3246, %v4167
    %v5102 = vsel %vm4169, %v5101, %v5100
    %v5103 = vperm.slane %v3247, %v4171
    %v5104 = vsel %vm4173, %v5103, %v5102
    %v5105 = vperm.slane %v3248, %v4175
    %v5106 = vsel %vm4177, %v5105, %v5104
    %v5107 = vperm.slane %v3249, %v4179
    %v5108 = vsel %vm4181, %v5107, %v5106
    %v5109 = vperm.slane %v3250, %v4183
    %v5110 = vsel %vm4185, %v5109, %v5108
    %v5111 = vperm.slane %v3251, %v4187
    %v5112 = vsel %vm4189, %v5111, %v5110
    %v5113 = vperm.slane %v3252, %v4191
    %v5114 = vsel %vm4193, %v5113, %v5112
    %v5115 = vperm.slane %v3253, %v4195
    %v5116 = vsel %vm4197, %v5115, %v5114
    %v5117 = vperm.slane %v3254, %v4199
    %v5118 = vsel %vm4201, %v5117, %v5116
    %v5119 = vperm.slane %v3255, %v4203
    %v5120 = vsel %vm4205, %v5119, %v5118
    %v5121 = vperm.slane %v3256, %v4207
    %v5122 = vsel %vm4209, %v5121, %v5120
    %v5123 = vperm.slane %v3257, %v4211
    %v5124 = vsel %vm4213, %v5123, %v5122
    %v5125 = vperm.slane %v3258, %v4215
    %v5126 = vsel %vm4217, %v5125, %v5124
    %v5127 = vperm.slane %v3259, %v4219
    %v5128 = vsel %vm4221, %v5127, %v5126
    %v5129 = vperm.slane %v3260, %v4161
    %v5130 = vperm.slane %v3261, %v4163
    %v5131 = vsel %vm4165, %v5130, %v5129
    %v5132 = vperm.slane %v3262, %v4167
    %v5133 = vsel %vm4169, %v5132, %v5131
    %v5134 = vperm.slane %v3263, %v4171
    %v5135 = vsel %vm4173, %v5134, %v5133
    %v5136 = vperm.slane %v3264, %v4175
    %v5137 = vsel %vm4177, %v5136, %v5135
    %v5138 = vperm.slane %v3265, %v4179
    %v5139 = vsel %vm4181, %v5138, %v5137
    %v5140 = vperm.slane %v3266, %v4183
    %v5141 = vsel %vm4185, %v5140, %v5139
    %v5142 = vperm.slane %v3267, %v4187
    %v5143 = vsel %vm4189, %v5142, %v5141
    %v5144 = vperm.slane %v3268, %v4191
    %v5145 = vsel %vm4193, %v5144, %v5143
    %v5146 = vperm.slane %v3269, %v4195
    %v5147 = vsel %vm4197, %v5146, %v5145
    %v5148 = vperm.slane %v3270, %v4199
    %v5149 = vsel %vm4201, %v5148, %v5147
    %v5150 = vperm.slane %v3271, %v4203
    %v5151 = vsel %vm4205, %v5150, %v5149
    %v5152 = vperm.slane %v3272, %v4207
    %v5153 = vsel %vm4209, %v5152, %v5151
    %v5154 = vperm.slane %v3273, %v4211
    %v5155 = vsel %vm4213, %v5154, %v5153
    %v5156 = vperm.slane %v3274, %v4215
    %v5157 = vsel %vm4217, %v5156, %v5155
    %v5158 = vperm.slane %v3275, %v4219
    %v5159 = vsel %vm4221, %v5158, %v5157
    %v5160 = vperm.slane %v3276, %v4161
    %v5161 = vperm.slane %v3277, %v4163
    %v5162 = vsel %vm4165, %v5161, %v5160
    %v5163 = vperm.slane %v3278, %v4167
    %v5164 = vsel %vm4169, %v5163, %v5162
    %v5165 = vperm.slane %v3279, %v4171
    %v5166 = vsel %vm4173, %v5165, %v5164
    %v5167 = vperm.slane %v3280, %v4175
    %v5168 = vsel %vm4177, %v5167, %v5166
    %v5169 = vperm.slane %v3281, %v4179
    %v5170 = vsel %vm4181, %v5169, %v5168
    %v5171 = vperm.slane %v3282, %v4183
    %v5172 = vsel %vm4185, %v5171, %v5170
    %v5173 = vperm.slane %v3283, %v4187
    %v5174 = vsel %vm4189, %v5173, %v5172
    %v5175 = vperm.slane %v3284, %v4191
    %v5176 = vsel %vm4193, %v5175, %v5174
    %v5177 = vperm.slane %v3285, %v4195
    %v5178 = vsel %vm4197, %v5177, %v5176
    %v5179 = vperm.slane %v3286, %v4199
    %v5180 = vsel %vm4201, %v5179, %v5178
    %v5181 = vperm.slane %v3287, %v4203
    %v5182 = vsel %vm4205, %v5181, %v5180
    %v5183 = vperm.slane %v3288, %v4207
    %v5184 = vsel %vm4209, %v5183, %v5182
    %v5185 = vperm.slane %v3289, %v4211
    %v5186 = vsel %vm4213, %v5185, %v5184
    %v5187 = vperm.slane %v3290, %v4215
    %v5188 = vsel %vm4217, %v5187, %v5186
    %v5189 = vperm.slane %v3291, %v4219
    %v5190 = vsel %vm4221, %v5189, %v5188
    %v5191 = vperm.slane %v3292, %v4161
    %v5192 = vperm.slane %v3293, %v4163
    %v5193 = vsel %vm4165, %v5192, %v5191
    %v5194 = vperm.slane %v3294, %v4167
    %v5195 = vsel %vm4169, %v5194, %v5193
    %v5196 = vperm.slane %v3295, %v4171
    %v5197 = vsel %vm4173, %v5196, %v5195
    %v5198 = vperm.slane %v3296, %v4175
    %v5199 = vsel %vm4177, %v5198, %v5197
    %v5200 = vperm.slane %v3297, %v4179
    %v5201 = vsel %vm4181, %v5200, %v5199
    %v5202 = vperm.slane %v3298, %v4183
    %v5203 = vsel %vm4185, %v5202, %v5201
    %v5204 = vperm.slane %v3299, %v4187
    %v5205 = vsel %vm4189, %v5204, %v5203
    %v5206 = vperm.slane %v3300, %v4191
    %v5207 = vsel %vm4193, %v5206, %v5205
    %v5208 = vperm.slane %v3301, %v4195
    %v5209 = vsel %vm4197, %v5208, %v5207
    %v5210 = vperm.slane %v3302, %v4199
    %v5211 = vsel %vm4201, %v5210, %v5209
    %v5212 = vperm.slane %v3303, %v4203
    %v5213 = vsel %vm4205, %v5212, %v5211
    %v5214 = vperm.slane %v3304, %v4207
    %v5215 = vsel %vm4209, %v5214, %v5213
    %v5216 = vperm.slane %v3305, %v4211
    %v5217 = vsel %vm4213, %v5216, %v5215
    %v5218 = vperm.slane %v3306, %v4215
    %v5219 = vsel %vm4217, %v5218, %v5217
    %v5220 = vperm.slane %v3307, %v4219
    %v5221 = vsel %vm4221, %v5220, %v5219
    %v5222 = vperm.slane %v3308, %v4161
    %v5223 = vperm.slane %v3309, %v4163
    %v5224 = vsel %vm4165, %v5223, %v5222
    %v5225 = vperm.slane %v3310, %v4167
    %v5226 = vsel %vm4169, %v5225, %v5224
    %v5227 = vperm.slane %v3311, %v4171
    %v5228 = vsel %vm4173, %v5227, %v5226
    %v5229 = vperm.slane %v3312, %v4175
    %v5230 = vsel %vm4177, %v5229, %v5228
    %v5231 = vperm.slane %v3313, %v4179
    %v5232 = vsel %vm4181, %v5231, %v5230
    %v5233 = vperm.slane %v3314, %v4183
    %v5234 = vsel %vm4185, %v5233, %v5232
    %v5235 = vperm.slane %v3315, %v4187
    %v5236 = vsel %vm4189, %v5235, %v5234
    %v5237 = vperm.slane %v3316, %v4191
    %v5238 = vsel %vm4193, %v5237, %v5236
    %v5239 = vperm.slane %v3317, %v4195
    %v5240 = vsel %vm4197, %v5239, %v5238
    %v5241 = vperm.slane %v3318, %v4199
    %v5242 = vsel %vm4201, %v5241, %v5240
    %v5243 = vperm.slane %v3319, %v4203
    %v5244 = vsel %vm4205, %v5243, %v5242
    %v5245 = vperm.slane %v3320, %v4207
    %v5246 = vsel %vm4209, %v5245, %v5244
    %v5247 = vperm.slane %v3321, %v4211
    %v5248 = vsel %vm4213, %v5247, %v5246
    %v5249 = vperm.slane %v3322, %v4215
    %v5250 = vsel %vm4217, %v5249, %v5248
    %v5251 = vperm.slane %v3323, %v4219
    %v5252 = vsel %vm4221, %v5251, %v5250
    %v5253 = vperm.slane %v3324, %v4161
    %v5254 = vperm.slane %v3325, %v4163
    %v5255 = vsel %vm4165, %v5254, %v5253
    %v5256 = vperm.slane %v3326, %v4167
    %v5257 = vsel %vm4169, %v5256, %v5255
    %v5258 = vperm.slane %v3327, %v4171
    %v5259 = vsel %vm4173, %v5258, %v5257
    %vm5260 = vcmask 1041409
    %v5261 = vsel %vm5260, %v4756, %v4222
    %v5262 = vsel %vm5260, %v4787, %v4253
    %v5263 = vsel %vm5260, %v4818, %v4284
    %v5264 = vsel %vm5260, %v4849, %v4315
    %v5265 = vsel %vm5260, %v4880, %v4346
    %v5266 = vsel %vm5260, %v4911, %v4377
    %v5267 = vsel %vm5260, %v4942, %v4408
    %v5268 = vsel %vm5260, %v4973, %v4439
    %v5269 = vsel %vm5260, %v5004, %v4470
    %v5270 = vsel %vm5260, %v5035, %v4501
    %v5271 = vsel %vm5260, %v5066, %v4532
    %v5272 = vsel %vm5260, %v5097, %v4563
    %v5273 = vsel %vm5260, %v5128, %v4594
    %v5274 = vsel %vm5260, %v5159, %v4625
    %v5275 = vsel %vm5260, %v5190, %v4656
    %v5276 = vsel %vm5260, %v5221, %v4687
    %v5277 = vsel %vm5260, %v5252, %v4718
    %v5278 = vsel %vm5260, %v5259, %v4725
    %vm5296 = vcmask 261120
    %v5297 = vsel %vm5296, %v5278, 0
    %5299 = vmatpush.msra.mxu0 %v3343
    %5300 = vmatpush.msra.mxu0 %v3342
    %5301 = vmatpush.msra.mxu0 %v3341
    %5302 = vmatpush.msra.mxu0 %v3340
    %5303 = vmatpush.msra.mxu0 %v3339
    %5304 = vmatpush.msra.mxu0 %v3338
    %5305 = vmatpush.msra.mxu0 %v3337
    %5306 = vmatpush.msra.mxu0 %v3336
    %5307 = vmatpush.msra.mxu0 %v3335
    %5308 = vmatpush.msra.mxu0 %v3334
    %5309 = vmatpush.msra.mxu0 %v3333
    %5310 = vmatpush.msra.mxu0 %v3332
    %5311 = vmatpush.msra.mxu0 %v3331
    %5312 = vmatpush.msra.mxu0 %v3330
    %5313 = vmatpush.msra.mxu0 %v3329
    %5314 = vmatpush.msra.mxu0 %v3328
    %5315 = vmatmul.f32.gmra.mxu0 %v5261
    %v5316 = vpop.f32.mrf.mxu0
    %v5317 = vadd.f32 %v3606, %v5316
    %5318 = vdwg.mxu0
    %5319 = vmatpush.msra.mxu0 %v3359
    %5320 = vmatpush.msra.mxu0 %v3358
    %5321 = vmatpush.msra.mxu0 %v3357
    %5322 = vmatpush.msra.mxu0 %v3356
    %5323 = vmatpush.msra.mxu0 %v3355
    %5324 = vmatpush.msra.mxu0 %v3354
    %5325 = vmatpush.msra.mxu0 %v3353
    %5326 = vmatpush.msra.mxu0 %v3352
    %5327 = vmatpush.msra.mxu0 %v3351
    %5328 = vmatpush.msra.mxu0 %v3350
    %5329 = vmatpush.msra.mxu0 %v3349
    %5330 = vmatpush.msra.mxu0 %v3348
    %5331 = vmatpush.msra.mxu0 %v3347
    %5332 = vmatpush.msra.mxu0 %v3346
    %5333 = vmatpush.msra.mxu0 %v3345
    %5334 = vmatpush.msra.mxu0 %v3344
    %5335 = vmatmul.f32.gmra.mxu0 %v5262
    %v5336 = vpop.f32.mrf.mxu0
    %v5337 = vadd.f32 %v5317, %v5336
    %5338 = vdwg.mxu0
    %5339 = vmatpush.msra.mxu0 %v3375
    %5340 = vmatpush.msra.mxu0 %v3374
    %5341 = vmatpush.msra.mxu0 %v3373
    %5342 = vmatpush.msra.mxu0 %v3372
    %5343 = vmatpush.msra.mxu0 %v3371
    %5344 = vmatpush.msra.mxu0 %v3370
    %5345 = vmatpush.msra.mxu0 %v3369
    %5346 = vmatpush.msra.mxu0 %v3368
    %5347 = vmatpush.msra.mxu0 %v3367
    %5348 = vmatpush.msra.mxu0 %v3366
    %5349 = vmatpush.msra.mxu0 %v3365
    %5350 = vmatpush.msra.mxu0 %v3364
    %5351 = vmatpush.msra.mxu0 %v3363
    %5352 = vmatpush.msra.mxu0 %v3362
    %5353 = vmatpush.msra.mxu0 %v3361
    %5354 = vmatpush.msra.mxu0 %v3360
    %5355 = vmatmul.f32.gmra.mxu0 %v5263
    %v5356 = vpop.f32.mrf.mxu0
    %v5357 = vadd.f32 %v5337, %v5356
    %5358 = vdwg.mxu0
    %5359 = vmatpush.msra.mxu0 %v3391
    %5360 = vmatpush.msra.mxu0 %v3390
    %5361 = vmatpush.msra.mxu0 %v3389
    %5362 = vmatpush.msra.mxu0 %v3388
    %5363 = vmatpush.msra.mxu0 %v3387
    %5364 = vmatpush.msra.mxu0 %v3386
    %5365 = vmatpush.msra.mxu0 %v3385
    %5366 = vmatpush.msra.mxu0 %v3384
    %5367 = vmatpush.msra.mxu0 %v3383
    %5368 = vmatpush.msra.mxu0 %v3382
    %5369 = vmatpush.msra.mxu0 %v3381
    %5370 = vmatpush.msra.mxu0 %v3380
    %5371 = vmatpush.msra.mxu0 %v3379
    %5372 = vmatpush.msra.mxu0 %v3378
    %5373 = vmatpush.msra.mxu0 %v3377
    %5374 = vmatpush.msra.mxu0 %v3376
    %5375 = vmatmul.f32.gmra.mxu0 %v5264
    %v5376 = vpop.f32.mrf.mxu0
    %v5377 = vadd.f32 %v5357, %v5376
    %5378 = vdwg.mxu0
    %5379 = vmatpush.msra.mxu0 %v3407
    %5380 = vmatpush.msra.mxu0 %v3406
    %5381 = vmatpush.msra.mxu0 %v3405
    %5382 = vmatpush.msra.mxu0 %v3404
    %5383 = vmatpush.msra.mxu0 %v3403
    %5384 = vmatpush.msra.mxu0 %v3402
    %5385 = vmatpush.msra.mxu0 %v3401
    %5386 = vmatpush.msra.mxu0 %v3400
    %5387 = vmatpush.msra.mxu0 %v3399
    %5388 = vmatpush.msra.mxu0 %v3398
    %5389 = vmatpush.msra.mxu0 %v3397
    %5390 = vmatpush.msra.mxu0 %v3396
    %5391 = vmatpush.msra.mxu0 %v3395
    %5392 = vmatpush.msra.mxu0 %v3394
    %5393 = vmatpush.msra.mxu0 %v3393
    %5394 = vmatpush.msra.mxu0 %v3392
    %5395 = vmatmul.f32.gmra.mxu0 %v5265
    %v5396 = vpop.f32.mrf.mxu0
    %v5397 = vadd.f32 %v5377, %v5396
    %5398 = vdwg.mxu0
    %5399 = vmatpush.msra.mxu0 %v3423
    %5400 = vmatpush.msra.mxu0 %v3422
    %5401 = vmatpush.msra.mxu0 %v3421
    %5402 = vmatpush.msra.mxu0 %v3420
    %5403 = vmatpush.msra.mxu0 %v3419
    %5404 = vmatpush.msra.mxu0 %v3418
    %5405 = vmatpush.msra.mxu0 %v3417
    %5406 = vmatpush.msra.mxu0 %v3416
    %5407 = vmatpush.msra.mxu0 %v3415
    %5408 = vmatpush.msra.mxu0 %v3414
    %5409 = vmatpush.msra.mxu0 %v3413
    %5410 = vmatpush.msra.mxu0 %v3412
    %5411 = vmatpush.msra.mxu0 %v3411
    %5412 = vmatpush.msra.mxu0 %v3410
    %5413 = vmatpush.msra.mxu0 %v3409
    %5414 = vmatpush.msra.mxu0 %v3408
    %5415 = vmatmul.f32.gmra.mxu0 %v5266
    %v5416 = vpop.f32.mrf.mxu0
    %v5417 = vadd.f32 %v5397, %v5416
    %5418 = vdwg.mxu0
    %5419 = vmatpush.msra.mxu0 %v3439
    %5420 = vmatpush.msra.mxu0 %v3438
    %5421 = vmatpush.msra.mxu0 %v3437
    %5422 = vmatpush.msra.mxu0 %v3436
    %5423 = vmatpush.msra.mxu0 %v3435
    %5424 = vmatpush.msra.mxu0 %v3434
    %5425 = vmatpush.msra.mxu0 %v3433
    %5426 = vmatpush.msra.mxu0 %v3432
    %5427 = vmatpush.msra.mxu0 %v3431
    %5428 = vmatpush.msra.mxu0 %v3430
    %5429 = vmatpush.msra.mxu0 %v3429
    %5430 = vmatpush.msra.mxu0 %v3428
    %5431 = vmatpush.msra.mxu0 %v3427
    %5432 = vmatpush.msra.mxu0 %v3426
    %5433 = vmatpush.msra.mxu0 %v3425
    %5434 = vmatpush.msra.mxu0 %v3424
    %5435 = vmatmul.f32.gmra.mxu0 %v5267
    %v5436 = vpop.f32.mrf.mxu0
    %v5437 = vadd.f32 %v5417, %v5436
    %5438 = vdwg.mxu0
    %5439 = vmatpush.msra.mxu0 %v3455
    %5440 = vmatpush.msra.mxu0 %v3454
    %5441 = vmatpush.msra.mxu0 %v3453
    %5442 = vmatpush.msra.mxu0 %v3452
    %5443 = vmatpush.msra.mxu0 %v3451
    %5444 = vmatpush.msra.mxu0 %v3450
    %5445 = vmatpush.msra.mxu0 %v3449
    %5446 = vmatpush.msra.mxu0 %v3448
    %5447 = vmatpush.msra.mxu0 %v3447
    %5448 = vmatpush.msra.mxu0 %v3446
    %5449 = vmatpush.msra.mxu0 %v3445
    %5450 = vmatpush.msra.mxu0 %v3444
    %5451 = vmatpush.msra.mxu0 %v3443
    %5452 = vmatpush.msra.mxu0 %v3442
    %5453 = vmatpush.msra.mxu0 %v3441
    %5454 = vmatpush.msra.mxu0 %v3440
    %5455 = vmatmul.f32.gmra.mxu0 %v5268
    %v5456 = vpop.f32.mrf.mxu0
    %v5457 = vadd.f32 %v5437, %v5456
    %5458 = vdwg.mxu0
    %5459 = vmatpush.msra.mxu0 %v3471
    %5460 = vmatpush.msra.mxu0 %v3470
    %5461 = vmatpush.msra.mxu0 %v3469
    %5462 = vmatpush.msra.mxu0 %v3468
    %5463 = vmatpush.msra.mxu0 %v3467
    %5464 = vmatpush.msra.mxu0 %v3466
    %5465 = vmatpush.msra.mxu0 %v3465
    %5466 = vmatpush.msra.mxu0 %v3464
    %5467 = vmatpush.msra.mxu0 %v3463
    %5468 = vmatpush.msra.mxu0 %v3462
    %5469 = vmatpush.msra.mxu0 %v3461
    %5470 = vmatpush.msra.mxu0 %v3460
    %5471 = vmatpush.msra.mxu0 %v3459
    %5472 = vmatpush.msra.mxu0 %v3458
    %5473 = vmatpush.msra.mxu0 %v3457
    %5474 = vmatpush.msra.mxu0 %v3456
    %5475 = vmatmul.f32.gmra.mxu0 %v5269
    %v5476 = vpop.f32.mrf.mxu0
    %v5477 = vadd.f32 %v5457, %v5476
    %5478 = vdwg.mxu0
    %5479 = vmatpush.msra.mxu0 %v3487
    %5480 = vmatpush.msra.mxu0 %v3486
    %5481 = vmatpush.msra.mxu0 %v3485
    %5482 = vmatpush.msra.mxu0 %v3484
    %5483 = vmatpush.msra.mxu0 %v3483
    %5484 = vmatpush.msra.mxu0 %v3482
    %5485 = vmatpush.msra.mxu0 %v3481
    %5486 = vmatpush.msra.mxu0 %v3480
    %5487 = vmatpush.msra.mxu0 %v3479
    %5488 = vmatpush.msra.mxu0 %v3478
    %5489 = vmatpush.msra.mxu0 %v3477
    %5490 = vmatpush.msra.mxu0 %v3476
    %5491 = vmatpush.msra.mxu0 %v3475
    %5492 = vmatpush.msra.mxu0 %v3474
    %5493 = vmatpush.msra.mxu0 %v3473
    %5494 = vmatpush.msra.mxu0 %v3472
    %5495 = vmatmul.f32.gmra.mxu0 %v5270
    %v5496 = vpop.f32.mrf.mxu0
    %v5497 = vadd.f32 %v5477, %v5496
    %5498 = vdwg.mxu0
    %5499 = vmatpush.msra.mxu0 %v3503
    %5500 = vmatpush.msra.mxu0 %v3502
    %5501 = vmatpush.msra.mxu0 %v3501
    %5502 = vmatpush.msra.mxu0 %v3500
    %5503 = vmatpush.msra.mxu0 %v3499
    %5504 = vmatpush.msra.mxu0 %v3498
    %5505 = vmatpush.msra.mxu0 %v3497
    %5506 = vmatpush.msra.mxu0 %v3496
    %5507 = vmatpush.msra.mxu0 %v3495
    %5508 = vmatpush.msra.mxu0 %v3494
    %5509 = vmatpush.msra.mxu0 %v3493
    %5510 = vmatpush.msra.mxu0 %v3492
    %5511 = vmatpush.msra.mxu0 %v3491
    %5512 = vmatpush.msra.mxu0 %v3490
    %5513 = vmatpush.msra.mxu0 %v3489
    %5514 = vmatpush.msra.mxu0 %v3488
    %5515 = vmatmul.f32.gmra.mxu0 %v5271
    %v5516 = vpop.f32.mrf.mxu0
    %v5517 = vadd.f32 %v5497, %v5516
    %5518 = vdwg.mxu0
    %5519 = vmatpush.msra.mxu0 %v3519
    %5520 = vmatpush.msra.mxu0 %v3518
    %5521 = vmatpush.msra.mxu0 %v3517
    %5522 = vmatpush.msra.mxu0 %v3516
    %5523 = vmatpush.msra.mxu0 %v3515
    %5524 = vmatpush.msra.mxu0 %v3514
    %5525 = vmatpush.msra.mxu0 %v3513
    %5526 = vmatpush.msra.mxu0 %v3512
    %5527 = vmatpush.msra.mxu0 %v3511
    %5528 = vmatpush.msra.mxu0 %v3510
    %5529 = vmatpush.msra.mxu0 %v3509
    %5530 = vmatpush.msra.mxu0 %v3508
    %5531 = vmatpush.msra.mxu0 %v3507
    %5532 = vmatpush.msra.mxu0 %v3506
    %5533 = vmatpush.msra.mxu0 %v3505
    %5534 = vmatpush.msra.mxu0 %v3504
    %5535 = vmatmul.f32.gmra.mxu0 %v5272
    %v5536 = vpop.f32.mrf.mxu0
    %v5537 = vadd.f32 %v5517, %v5536
    %5538 = vdwg.mxu0
    %5539 = vmatpush.msra.mxu0 %v3535
    %5540 = vmatpush.msra.mxu0 %v3534
    %5541 = vmatpush.msra.mxu0 %v3533
    %5542 = vmatpush.msra.mxu0 %v3532
    %5543 = vmatpush.msra.mxu0 %v3531
    %5544 = vmatpush.msra.mxu0 %v3530
    %5545 = vmatpush.msra.mxu0 %v3529
    %5546 = vmatpush.msra.mxu0 %v3528
    %5547 = vmatpush.msra.mxu0 %v3527
    %5548 = vmatpush.msra.mxu0 %v3526
    %5549 = vmatpush.msra.mxu0 %v3525
    %5550 = vmatpush.msra.mxu0 %v3524
    %5551 = vmatpush.msra.mxu0 %v3523
    %5552 = vmatpush.msra.mxu0 %v3522
    %5553 = vmatpush.msra.mxu0 %v3521
    %5554 = vmatpush.msra.mxu0 %v3520
    %5555 = vmatmul.f32.gmra.mxu0 %v5273
    %v5556 = vpop.f32.mrf.mxu0
    %v5557 = vadd.f32 %v5537, %v5556
    %5558 = vdwg.mxu0
    %5559 = vmatpush.msra.mxu0 %v3551
    %5560 = vmatpush.msra.mxu0 %v3550
    %5561 = vmatpush.msra.mxu0 %v3549
    %5562 = vmatpush.msra.mxu0 %v3548
    %5563 = vmatpush.msra.mxu0 %v3547
    %5564 = vmatpush.msra.mxu0 %v3546
    %5565 = vmatpush.msra.mxu0 %v3545
    %5566 = vmatpush.msra.mxu0 %v3544
    %5567 = vmatpush.msra.mxu0 %v3543
    %5568 = vmatpush.msra.mxu0 %v3542
    %5569 = vmatpush.msra.mxu0 %v3541
    %5570 = vmatpush.msra.mxu0 %v3540
    %5571 = vmatpush.msra.mxu0 %v3539
    %5572 = vmatpush.msra.mxu0 %v3538
    %5573 = vmatpush.msra.mxu0 %v3537
    %5574 = vmatpush.msra.mxu0 %v3536
    %5575 = vmatmul.f32.gmra.mxu0 %v5274
    %v5576 = vpop.f32.mrf.mxu0
    %v5577 = vadd.f32 %v5557, %v5576
    %5578 = vdwg.mxu0
    %5579 = vmatpush.msra.mxu0 %v3567
    %5580 = vmatpush.msra.mxu0 %v3566
    %5581 = vmatpush.msra.mxu0 %v3565
    %5582 = vmatpush.msra.mxu0 %v3564
    %5583 = vmatpush.msra.mxu0 %v3563
    %5584 = vmatpush.msra.mxu0 %v3562
    %5585 = vmatpush.msra.mxu0 %v3561
    %5586 = vmatpush.msra.mxu0 %v3560
    %5587 = vmatpush.msra.mxu0 %v3559
    %5588 = vmatpush.msra.mxu0 %v3558
    %5589 = vmatpush.msra.mxu0 %v3557
    %5590 = vmatpush.msra.mxu0 %v3556
    %5591 = vmatpush.msra.mxu0 %v3555
    %5592 = vmatpush.msra.mxu0 %v3554
    %5593 = vmatpush.msra.mxu0 %v3553
    %5594 = vmatpush.msra.mxu0 %v3552
    %5595 = vmatmul.f32.gmra.mxu0 %v5275
    %v5596 = vpop.f32.mrf.mxu0
    %v5597 = vadd.f32 %v5577, %v5596
    %5598 = vdwg.mxu0
    %5599 = vmatpush.msra.mxu0 %v3583
    %5600 = vmatpush.msra.mxu0 %v3582
    %5601 = vmatpush.msra.mxu0 %v3581
    %5602 = vmatpush.msra.mxu0 %v3580
    %5603 = vmatpush.msra.mxu0 %v3579
    %5604 = vmatpush.msra.mxu0 %v3578
    %5605 = vmatpush.msra.mxu0 %v3577
    %5606 = vmatpush.msra.mxu0 %v3576
    %5607 = vmatpush.msra.mxu0 %v3575
    %5608 = vmatpush.msra.mxu0 %v3574
    %5609 = vmatpush.msra.mxu0 %v3573
    %5610 = vmatpush.msra.mxu0 %v3572
    %5611 = vmatpush.msra.mxu0 %v3571
    %5612 = vmatpush.msra.mxu0 %v3570
    %5613 = vmatpush.msra.mxu0 %v3569
    %5614 = vmatpush.msra.mxu0 %v3568
    %5615 = vmatmul.f32.gmra.mxu0 %v5276
    %v5616 = vpop.f32.mrf.mxu0
    %v5617 = vadd.f32 %v5597, %v5616
    %5618 = vdwg.mxu0
    %5619 = vmatpush.msra.mxu0 %v3599
    %5620 = vmatpush.msra.mxu0 %v3598
    %5621 = vmatpush.msra.mxu0 %v3597
    %5622 = vmatpush.msra.mxu0 %v3596
    %5623 = vmatpush.msra.mxu0 %v3595
    %5624 = vmatpush.msra.mxu0 %v3594
    %5625 = vmatpush.msra.mxu0 %v3593
    %5626 = vmatpush.msra.mxu0 %v3592
    %5627 = vmatpush.msra.mxu0 %v3591
    %5628 = vmatpush.msra.mxu0 %v3590
    %5629 = vmatpush.msra.mxu0 %v3589
    %5630 = vmatpush.msra.mxu0 %v3588
    %5631 = vmatpush.msra.mxu0 %v3587
    %5632 = vmatpush.msra.mxu0 %v3586
    %5633 = vmatpush.msra.mxu0 %v3585
    %5634 = vmatpush.msra.mxu0 %v3584
    %5635 = vmatmul.f32.gmra.mxu0 %v5277
    %v5636 = vpop.f32.mrf.mxu0
    %v5637 = vadd.f32 %v5617, %v5636
    %5638 = vdwg.mxu0
    %5639 = vmatpush.msra.mxu0 0.0
    %5640 = vmatpush.msra.mxu0 0.0
    %5641 = vmatpush.msra.mxu0 0.0
    %5642 = vmatpush.msra.mxu0 0.0
    %5643 = vmatpush.msra.mxu0 0.0
    %5644 = vmatpush.msra.mxu0 0.0
    %5645 = vmatpush.msra.mxu0 0.0
    %5646 = vmatpush.msra.mxu0 0.0
    %5647 = vmatpush.msra.mxu0 0.0
    %5648 = vmatpush.msra.mxu0 0.0
    %5649 = vmatpush.msra.mxu0 0.0
    %5650 = vmatpush.msra.mxu0 0.0
    %5651 = vmatpush.msra.mxu0 %v3603
    %5652 = vmatpush.msra.mxu0 %v3602
    %5653 = vmatpush.msra.mxu0 %v3601
    %5654 = vmatpush.msra.mxu0 %v3600
    %5655 = vmatmul.f32.gmra.mxu0 %v5297
    %v5656 = vpop.f32.mrf.mxu0
    %v5657 = vadd.f32 %v5637, %v5656
    %5658 = vdwg.mxu0
    %vm5659 = vcmp.ge.s32.totalorder %v4161, 9
    %vm5660 = vcmp.lt.s32.totalorder %v4161, 11
    %vm5661 = vmand %vm5659, %vm5660
    %v5662 = vxor.u32 %v5657, 2147483648
    %v5663 = vmul.f32 %v5662, 1.442695
    %v5664 = vpow.pop %v5663
    %v5665 = vadd.f32 %v5664, 1.0
    %v5666 = vrcp.pop %v5665
    %v5667 = vmul.f32 %v5665, %v5666
    %v5668 = vsub.f32 1.0, %v5667
    %v5669 = vmul.f32 %v5666, %v5668
    %v5670 = vadd.f32 %v5666, %v5669
    %vm5671 = vweird.f32 %v5665
    %vm5672 = vweird.f32 %v5666
    %vm5673 = vmor %vm5671, %vm5672
    %v5674 = vsel %vm5673, %v5666, %v5670
    %v5675 = vand.u32 2147483647, %v5665
    %vm5676 = vcmp.eq.f32.partialorder %v5675, 8.507059e+37
    %v5677 = vand.u32 %v5665, 2147483648
    %v5678 = vor.u32 1.1754944e-38, %v5677
    %v5679 = vsel %vm5676, %v5678, %v5674
    %v5680 = vmul.f32 1.0, %v5679
    %v5681 = vsel %vm5661, %v5680, %v5657
    %vm5682 = vcmask 140288
    %5683 = vst.msk [vmem:[#allocation2] sm:$0x3] %vm5682, %v5681
    // Predicated region
    $region14: #{tpu_custom_call.1} parent=1 // pred_check
      _
    $region15: #{tpu_custom_call.1} parent=1 // pred_check_branch
      %5685 = sbr.rel (0) target = $region17
    $region16: #{tpu_custom_call.1} parent=1 // pred_region
      %5687 = vsyncadd [#allocation3], 0
      %s5689 = sshll.u32 [#allocation2], 4
      %s5690 = int_to_ptr.vmem [resolvable:$true] %s5689
      %s5691 = sshll.u32 %s3, 4
      %s5692 = int_to_ptr.hbm [resolvable:$true] %s5691
      %5694 = dma.vmem_to_hbm [thread:$0]  %s5690, 32, %s5692, [#allocation3]
    $region17: #{tpu_custom_call.1} parent=1 // pred_fallthru
      _
    // Predicated region
    $region18: #{tpu_custom_call.1} parent=1 // pred_check
      _
    $region19: #{tpu_custom_call.1} parent=1 // pred_check_branch
      %5696 = sbr.rel (0) target = $region21
    $region20: #{tpu_custom_call.1} parent=1 // pred_region
      %5698 = dma.done [#allocation3], 32
    $region21: #{tpu_custom_call.1} parent=1 // pred_fallthru
      _
    %5699 = vsyncpa [#allocation3], 1

</llo_original>
